<compile_context>
chip_gen: v5e
topology: v5e:2x2
jax: 0.10.0
libtpu: 0.0.40
codegen_flags: <defaults>
</compile_context>

<pallas_src>
import functools

import jax
import jax.numpy as jnp
from jax.experimental import pallas as pl
from jax.experimental.pallas import tpu as pltpu


# ----------------------------- Pallas kernel --------------------------------


def _model_kernel(*refs, T, B, H, num_layers, unroll):
    """Fused bidirectional multi-layer LSTM + linear classifier (runs once).

    refs = [x (T*B, E) bf16, mask (T*B, 1) f32,
            (w_ih (Din, 8H) bf16, w_rec (2H, 8H) bf16, bias (1, 8H) f32) * num_layers,
            w_lin_t (2H, L) f32, b_lin (1, L) f32,
            logits_out (B, L) f32,
            xg (T*B, 8H) f32, seq (T*B, 2H) bf16]            # VMEM scratch
    """
    x_ref, mask_ref = refs[0], refs[1]
    nlw = 3 * num_layers
    layer_w = refs[2:2 + nlw]
    wlin_ref, blin_ref = refs[2 + nlw], refs[3 + nlw]
    logits_ref = refs[4 + nlw]
    xg_scr, seq_scr = refs[5 + nlw], refs[6 + nlw]

    H2, H3, H4, H8 = 2 * H, 3 * H, 4 * H, 8 * H

    h_f = h_b = None
    for l in range(num_layers):
        w_ih_ref, w_rec_ref, b_ref = layer_w[3 * l:3 * l + 3]
        last = l == num_layers - 1

        # (1) Fused fwd+bwd input projection for ALL timesteps: one bf16 MXU
        #     matmul, hoisted off the sequential recurrence.  The (T*B, Din)
        #     operand dies immediately after the dot (no live range across the
        #     time loop).
        x_all = x_ref[...] if l == 0 else seq_scr[...]          # bf16
        xg_scr[...] = (jnp.dot(x_all, w_ih_ref[...],
                               preferred_element_type=jnp.float32) + b_ref[...])

        w_rec = w_rec_ref[...]                                  # (2H, 8H) bf16, hoisted

        # (2) Interleaved fwd/bwd recurrence; the two independent chains share
        #     one block-diagonal recurrent matmul per step.
        def step(s, carry):
            h_f, c_f, h_b, c_b = carry                          # each (B, H) f32
            row_f = pl.multiple_of(s * B, B)                    # fwd time t = s
            row_b = pl.multiple_of((T - 1 - s) * B, B)          # bwd time t = T-1-s

            h_cat = jnp.concatenate([h_f, h_b], axis=-1).astype(jnp.bfloat16)
            rec = jnp.dot(h_cat, w_rec,
                          preferred_element_type=jnp.float32)   # (B, 8H)

            # gate columns: [i,f,o,g]_fwd | [i,f,o,g]_bwd  (4H-lane aligned halves)
            g_f = xg_scr[pl.ds(row_f, B), 0:H4] + rec[:, 0:H4]
            g_b = xg_scr[pl.ds(row_b, B), H4:H8] + rec[:, H4:H8]

            def cell(g, c):
                sig = jax.nn.sigmoid(g[:, 0:H3])                # one wide EUP op
                i_g, f_g, o_g = sig[:, 0:H], sig[:, H:H2], sig[:, H2:H3]
                g_g = jnp.tanh(g[:, H3:H4])
                c_n = f_g * c + i_g * g_g
                return o_g * jnp.tanh(c_n), c_n

            hf_n, cf_n = cell(g_f, c_f)
            hb_n, cb_n = cell(g_b, c_b)

            # Packed-sequence emulation: hold state where t >= length (selects,
            # not arithmetic blends).
            m_f = mask_ref[pl.ds(row_f, B), :] != 0.0           # (B, 1) bool
            m_b = mask_ref[pl.ds(row_b, B), :] != 0.0
            hf_u = jnp.where(m_f, hf_n, h_f)
            cf_u = jnp.where(m_f, cf_n, c_f)
            hb_u = jnp.where(m_b, hb_n, h_b)
            cb_u = jnp.where(m_b, cb_n, c_b)

            if not last:                                        # feed next layer
                # TODO(synk): two (B,H) partial stores per step (fwd/bwd hit
                # different time rows), so they cannot be widened to one store.
                seq_scr[pl.ds(row_f, B), 0:H] = hf_u.astype(jnp.bfloat16)
                seq_scr[pl.ds(row_b, B), H:H2] = hb_u.astype(jnp.bfloat16)
            return hf_u, cf_u, hb_u, cb_u

        zero = jnp.zeros((B, H), jnp.float32)
        h_f, c_f, h_b, c_b = jax.lax.fori_loop(
            0, T, step, (zero, zero, zero, zero), unroll=unroll)
        # TODO(synk): nn.LSTM inter-layer dropout is train-time only; identity here.

    # Linear classifier fused as an epilogue (f32).
    h_cat = jnp.concatenate([h_f, h_b], axis=-1)                # (B, 2H)
    logits_ref[...] = (jnp.dot(h_cat, wlin_ref[...],
                               preferred_element_type=jnp.float32) + blin_ref[...])


# ------------------------------- wrappers -----------------------------------


def _reorder_ifog(w):
    """Permute PyTorch gate blocks [i, f, g, o] (axis 0) -> [i, f, o, g]."""
    h = w.shape[0] // 4
    return jnp.concatenate([w[:2 * h], w[3 * h:], w[2 * h:3 * h]], axis=0)


def init_params(key, vocab_size, embedding_dim, hidden_size, num_layers, num_labels):
    """PyTorch-layout parameters (gate order [i, f, g, o])."""
    k_emb, key = jax.random.split(key)
    emb = jax.random.normal(k_emb, (vocab_size, embedding_dim), jnp.float32)
    emb = emb.at[0].set(0.0)                          # padding_idx=0

    bound = float(1.0 / (hidden_size ** 0.5))
    layers = []
    for l in range(num_layers):
        d_in = embedding_dim if l == 0 else 2 * hidden_size
        layer = {}
        for name in ("fwd", "bwd"):
            key, k1, k2, k3, k4 = jax.random.split(key, 5)
            layer[name] = dict(
                w_ih=jax.random.uniform(k1, (4 * hidden_size, d_in), jnp.float32, -bound, bound),
                w_hh=jax.random.uniform(k2, (4 * hidden_size, hidden_size), jnp.float32, -bound, bound),
                b_ih=jax.random.uniform(k3, (4 * hidden_size,), jnp.float32, -bound, bound),
                b_hh=jax.random.uniform(k4, (4 * hidden_size,), jnp.float32, -bound, bound),
            )
        layers.append(layer)

    key, kw, kb = jax.random.split(key, 3)
    in_f = 2 * hidden_size
    lb = float(1.0 / (in_f ** 0.5))
    linear = dict(w=jax.random.uniform(kw, (num_labels, in_f), jnp.float32, -lb, lb),
                  b=jax.random.uniform(kb, (num_labels,), jnp.float32, -lb, lb))
    return dict(embedding=emb, lstm=layers, linear=linear)


def prepare_params(params):
    """Convert PyTorch-layout params to kernel layout.

    Per layer: gate blocks permuted to [i, f, o, g]; fwd/bwd input weights fused
    into one (Din, 8H) bf16 matrix; fwd/bwd recurrent weights fused into one
    block-diagonal (2H, 8H) bf16 matrix; b_ih + b_hh folded per direction and
    concatenated into one (1, 8H) f32 bias row.
    """
    lstm = []
    for lp in params["lstm"]:
        pf, pb = lp["fwd"], lp["bwd"]
        h = pf["w_hh"].shape[1]
        w_ih = jnp.concatenate([_reorder_ifog(pf["w_ih"]).T,
                                _reorder_ifog(pb["w_ih"]).T], axis=1)
        w_rec = jnp.zeros((2 * h, 8 * h), jnp.float32)
        w_rec = w_rec.at[:h, :4 * h].set(_reorder_ifog(pf["w_hh"]).T)
        w_rec = w_rec.at[h:, 4 * h:].set(_reorder_ifog(pb["w_hh"]).T)
        bias = jnp.concatenate([_reorder_ifog(pf["b_ih"] + pf["b_hh"]),
                                _reorder_ifog(pb["b_ih"] + pb["b_hh"])])
        lstm.append(dict(w_ih=w_ih.astype(jnp.bfloat16),
                         w_rec=w_rec.astype(jnp.bfloat16),
                         bias=bias.reshape(1, -1).astype(jnp.float32)))
    return dict(embedding=params["embedding"], lstm=lstm,
                linear=dict(w_t=params["linear"]["w"].T,
                            b=params["linear"]["b"].reshape(1, -1)))


def lstm_model_forward(params, inputs, lengths):
    """inputs: (B, T) int32 token ids; lengths: (B,) int32. Returns logits (B, L)."""
    B, T = inputs.shape
    emb = params["embedding"]
    E = emb.shape[1]
    H = params["lstm"][0]["w_rec"].shape[0] // 2
    num_layers = len(params["lstm"])
    L = params["linear"]["w_t"].shape[1]
    Bp = ((B + 7) // 8) * 8                           # pad batch to sublane multiple

    x = emb[inputs]                                   # (B, T, E) gather (XLA glue)
    # TODO(synk): nn.Dropout is train-time only; identity here (inference semantics).
    x_tbd = jnp.transpose(x, (1, 0, 2))
    x_pad = jnp.zeros((T, Bp, E), jnp.float32).at[:, :B, :].set(x_tbd)
    x_flat = x_pad.reshape(T * Bp, E).astype(jnp.bfloat16)   # time-major, flat, MXU dtype

    len_pad = jnp.zeros((Bp,), jnp.int32).at[:B].set(lengths.astype(jnp.int32))
    mask = (jnp.arange(T, dtype=jnp.int32)[:, None] < len_pad[None, :]).astype(jnp.float32)
    mask_flat = mask.reshape(T * Bp, 1)               # (T*Bp, 1) validity at time t

    operands = [x_flat, mask_flat]
    for layer in params["lstm"]:
        operands += [layer["w_ih"], layer["w_rec"], layer["bias"]]
    operands += [params["linear"]["w_t"], params["linear"]["b"]]

    # Run-once kernel: whole arrays live single-buffered in VMEM (no grid, so no
    # pointless 2x pipeline buffers).
    vmem = pl.BlockSpec(memory_space=pltpu.MemorySpace.VMEM)

    kernel = functools.partial(_model_kernel, T=T, B=Bp, H=H,
                               num_layers=num_layers, unroll=min(8, T))

    logits_pad = pl.pallas_call(
        kernel,
        out_shape=jax.ShapeDtypeStruct((Bp, L), jnp.float32),
        in_specs=[vmem] * len(operands),
        out_specs=vmem,
        scratch_shapes=[pltpu.VMEM((T * Bp, 8 * H), jnp.float32),    # fused gate precompute
                        pltpu.VMEM((T * Bp, 2 * H), jnp.bfloat16)],  # layer output [fwd|bwd]
        compiler_params=pltpu.CompilerParams(vmem_limit_bytes=32 * 1024 * 1024),
    )(*operands)
    # TODO(synk): CrossEntropyLoss branch (labels is not None) omitted; logits only.
    # TODO(synk): v7x dual-TensorCore split of the two directions not implemented.
    return logits_pad[:B]


# --------------------------- pure-JAX reference ------------------------------


def reference_forward(params, inputs, lengths):
    x = params["embedding"][inputs].astype(jnp.float32)              # (B, T, E)
    B, T, _ = x.shape
    H = params["lstm"][0]["fwd"]["w_hh"].shape[1]
    lengths = lengths.astype(jnp.int32)
    t_idx = jnp.arange(T, dtype=jnp.int32)

    def run(x_btd, p, reverse):
        w_ih, w_hh = p["w_ih"], p["w_hh"]
        b = p["b_ih"] + p["b_hh"]

        def step(carry, t):
            h, c = carry
            xt = x_btd[:, t, :]
            g = xt @ w_ih.T + h @ w_hh.T + b
            i = jax.nn.sigmoid(g[:, :H])
            f = jax.nn.sigmoid(g[:, H:2 * H])
            gg = jnp.tanh(g[:, 2 * H:3 * H])
            o = jax.nn.sigmoid(g[:, 3 * H:])
            c_new = f * c + i * gg
            h_new = o * jnp.tanh(c_new)
            m = (t < lengths)[:, None].astype(jnp.float32)
            h = m * h_new + (1.0 - m) * h
            c = m * c_new + (1.0 - m) * c
            return (h, c), h

        ts = t_idx[::-1] if reverse else t_idx
        (h, _), hs = jax.lax.scan(step, (jnp.zeros((B, H)), jnp.zeros((B, H))), ts)
        hs = hs[::-1] if reverse else hs
        return jnp.transpose(hs, (1, 0, 2)), h

    layer_in = x
    hf = hb = None
    for lp in params["lstm"]:
        of, hf = run(layer_in, lp["fwd"], False)
        ob, hb = run(layer_in, lp["bwd"], True)
        layer_in = jnp.concatenate([of, ob], axis=-1)
    hcat = jnp.concatenate([hf, hb], axis=-1)
    return hcat @ params["linear"]["w"].T + params["linear"]["b"]


# --------------------------------- main --------------------------------------

if __name__ == "__main__":
    VOCAB, EMB, HID, LAYERS, LABELS = 32, 16, 32, 2, 4
    B, T = 4, 8

    key = jax.random.PRNGKey(0)
    k_p, k_tok = jax.random.split(key)
    params = init_params(k_p, VOCAB, EMB, HID, LAYERS, LABELS)
    kparams = prepare_params(params)

    lengths = jnp.array([8, 5, 3, 6], dtype=jnp.int32)
    tokens = jax.random.randint(k_tok, (B, T), 1, VOCAB, dtype=jnp.int32)
    pad_mask = jnp.arange(T)[None, :] < lengths[:, None]
    tokens = jnp.where(pad_mask, tokens, 0)           # 0 = padding_idx

    logits = jax.jit(lstm_model_forward)(kparams, tokens, lengths)
    jax.block_until_ready(logits)
    assert logits.shape == (B, LABELS) and logits.dtype == jnp.float32

    ref = reference_forward(params, tokens, lengths)
    if not bool(jnp.allclose(logits, ref, atol=5e-2, rtol=5e-2)):
        raise SystemExit("mismatch vs pure-JAX reference: "
                         f"{float(jnp.max(jnp.abs(logits - ref)))}")
    print("KERNEL_OK")
</pallas_src>

<mosaic_0001>
module attributes {stable_mosaic.version = 11 : i64} {
  func.func @_model_kernel(%arg0: memref<64x16xbf16, #tpu.memory_space<vmem>>, %arg1: memref<64x1xf32, #tpu.memory_space<vmem>>, %arg2: memref<16x256xbf16, #tpu.memory_space<vmem>>, %arg3: memref<64x256xbf16, #tpu.memory_space<vmem>>, %arg4: memref<1x256xf32, #tpu.memory_space<vmem>>, %arg5: memref<64x256xbf16, #tpu.memory_space<vmem>>, %arg6: memref<64x256xbf16, #tpu.memory_space<vmem>>, %arg7: memref<1x256xf32, #tpu.memory_space<vmem>>, %arg8: memref<64x4xf32, #tpu.memory_space<vmem>>, %arg9: memref<1x4xf32, #tpu.memory_space<vmem>>, %arg10: memref<8x4xf32, #tpu.memory_space<vmem>>, %arg11: memref<64x256xf32, #tpu.memory_space<vmem>>, %arg12: memref<64x64xbf16, #tpu.memory_space<vmem>>) attributes {dimension_semantics = [], scalar_prefetch = 0 : i64, scratch_operands = 2 : i64, tpu.core_type = #tpu.core_type<tc>} {
    %c0 = arith.constant 0 : index
    %c0_0 = arith.constant 0 : index
    %0 = vector.load %arg0[%c0, %c0_0] : memref<64x16xbf16, #tpu.memory_space<vmem>>, vector<64x16xbf16>
    %c0_1 = arith.constant 0 : index
    %c0_2 = arith.constant 0 : index
    %1 = vector.load %arg2[%c0_1, %c0_2] : memref<16x256xbf16, #tpu.memory_space<vmem>>, vector<16x256xbf16>
    %cst = arith.constant dense<0.000000e+00> : vector<64x256xf32>
    %2 = tpu.matmul %0, %1, %cst {dimension_numbers = #tpu.dot_dimension_numbers<[1], [0], [0], [1], [0, 0, 1, 1], [], []>} : vector<64x16xbf16>, vector<16x256xbf16>, vector<64x256xf32> -> vector<64x256xf32>
    %c0_3 = arith.constant 0 : index
    %c0_4 = arith.constant 0 : index
    %3 = vector.load %arg4[%c0_3, %c0_4] : memref<1x256xf32, #tpu.memory_space<vmem>>, vector<1x256xf32>
    %4 = vector.broadcast %3 : vector<1x256xf32> to vector<64x256xf32>
    %5 = arith.addf %2, %4 : vector<64x256xf32>
    %c0_5 = arith.constant 0 : index
    %c0_6 = arith.constant 0 : index
    %6 = vector.load %arg11[%c0_5, %c0_6] : memref<64x256xf32, #tpu.memory_space<vmem>>, vector<64x256xf32>
    tpu.vector_store %arg11[%c0_5, %c0_6], %5 {strides = array<i32>} : memref<64x256xf32, #tpu.memory_space<vmem>>, vector<64x256xf32>,
    %c0_7 = arith.constant 0 : index
    %c0_8 = arith.constant 0 : index
    %7 = vector.load %arg3[%c0_7, %c0_8] : memref<64x256xbf16, #tpu.memory_space<vmem>>, vector<64x256xbf16>
    %cst_9 = arith.constant 0.000000e+00 : f32
    %8 = vector.broadcast %cst_9 : f32 to vector<8x32xf32>
    %c0_i32 = arith.constant 0 : i32
    %c8_i32 = arith.constant 8 : i32
    %9 = arith.muli %c0_i32, %c8_i32 : i32
    %10 = tpu.assume_multiple %9, 8 : i32
    %c7_i32 = arith.constant 7 : i32
    %11 = arith.subi %c7_i32, %c0_i32 : i32
    %c8_i32_10 = arith.constant 8 : i32
    %12 = arith.muli %11, %c8_i32_10 : i32
    %13 = tpu.assume_multiple %12, 8 : i32
    %14 = tpu.concatenate %8, %8 in 1 : vector<8x32xf32>, vector<8x32xf32> -> vector<8x64xf32>
    %15 = arith.truncf %14 : vector<8x64xf32> to vector<8x64xbf16>
    %cst_11 = arith.constant dense<0.000000e+00> : vector<8x256xf32>
    %16 = tpu.matmul %15, %7, %cst_11 {dimension_numbers = #tpu.dot_dimension_numbers<[1], [0], [0], [1], [0, 0, 1, 1], [], []>} : vector<8x64xbf16>, vector<64x256xbf16>, vector<8x256xf32> -> vector<8x256xf32>
    %17 = arith.index_cast %10 : i32 to index
    %c0_12 = arith.constant 0 : index
    %18 = vector.load %arg11[%17, %c0_12] : memref<64x256xf32, #tpu.memory_space<vmem>>, vector<8x128xf32>
    %19 = vector.extract_strided_slice %16 {offsets = [0, 0], sizes = [8, 128], strides = [1, 1]} : vector<8x256xf32> to vector<8x128xf32>
    %20 = arith.addf %18, %19 : vector<8x128xf32>
    %21 = arith.index_cast %13 : i32 to index
    %c128 = arith.constant 128 : index
    %22 = vector.load %arg11[%21, %c128] : memref<64x256xf32, #tpu.memory_space<vmem>>, vector<8x128xf32>
    %23 = vector.extract_strided_slice %16 {offsets = [0, 128], sizes = [8, 128], strides = [1, 1]} : vector<8x256xf32> to vector<8x128xf32>
    %24 = arith.addf %22, %23 : vector<8x128xf32>
    %25 = vector.extract_strided_slice %20 {offsets = [0, 0], sizes = [8, 96], strides = [1, 1]} : vector<8x128xf32> to vector<8x96xf32>
    %26 = arith.negf %25 : vector<8x96xf32>
    %27 = math.exp %26 : vector<8x96xf32>
    %cst_13 = arith.constant 1.000000e+00 : f32
    %28 = vector.broadcast %cst_13 : f32 to vector<8x96xf32>
    %29 = arith.addf %28, %27 : vector<8x96xf32>
    %30 = arith.divf %28, %29 : vector<8x96xf32>
    %31 = vector.extract_strided_slice %30 {offsets = [0, 0], sizes = [8, 32], strides = [1, 1]} : vector<8x96xf32> to vector<8x32xf32>
    %32 = vector.extract_strided_slice %30 {offsets = [0, 32], sizes = [8, 32], strides = [1, 1]} : vector<8x96xf32> to vector<8x32xf32>
    %33 = vector.extract_strided_slice %30 {offsets = [0, 64], sizes = [8, 32], strides = [1, 1]} : vector<8x96xf32> to vector<8x32xf32>
    %34 = vector.extract_strided_slice %20 {offsets = [0, 96], sizes = [8, 32], strides = [1, 1]} : vector<8x128xf32> to vector<8x32xf32>
    %35 = math.tanh %34 : vector<8x32xf32>
    %36 = arith.mulf %32, %8 : vector<8x32xf32>
    %37 = arith.mulf %31, %35 : vector<8x32xf32>
    %38 = arith.addf %36, %37 : vector<8x32xf32>
    %39 = math.tanh %38 : vector<8x32xf32>
    %40 = arith.mulf %33, %39 : vector<8x32xf32>
    %41 = vector.extract_strided_slice %24 {offsets = [0, 0], sizes = [8, 96], strides = [1, 1]} : vector<8x128xf32> to vector<8x96xf32>
    %42 = arith.negf %41 : vector<8x96xf32>
    %43 = math.exp %42 : vector<8x96xf32>
    %cst_14 = arith.constant 1.000000e+00 : f32
    %44 = vector.broadcast %cst_14 : f32 to vector<8x96xf32>
    %45 = arith.addf %44, %43 : vector<8x96xf32>
    %46 = arith.divf %44, %45 : vector<8x96xf32>
    %47 = vector.extract_strided_slice %46 {offsets = [0, 0], sizes = [8, 32], strides = [1, 1]} : vector<8x96xf32> to vector<8x32xf32>
    %48 = vector.extract_strided_slice %46 {offsets = [0, 32], sizes = [8, 32], strides = [1, 1]} : vector<8x96xf32> to vector<8x32xf32>
    %49 = vector.extract_strided_slice %46 {offsets = [0, 64], sizes = [8, 32], strides = [1, 1]} : vector<8x96xf32> to vector<8x32xf32>
    %50 = vector.extract_strided_slice %24 {offsets = [0, 96], sizes = [8, 32], strides = [1, 1]} : vector<8x128xf32> to vector<8x32xf32>
    %51 = math.tanh %50 : vector<8x32xf32>
    %52 = arith.mulf %48, %8 : vector<8x32xf32>
    %53 = arith.mulf %47, %51 : vector<8x32xf32>
    %54 = arith.addf %52, %53 : vector<8x32xf32>
    %55 = math.tanh %54 : vector<8x32xf32>
    %56 = arith.mulf %49, %55 : vector<8x32xf32>
    %57 = arith.index_cast %10 : i32 to index
    %c0_15 = arith.constant 0 : index
    %58 = vector.load %arg1[%57, %c0_15] : memref<64x1xf32, #tpu.memory_space<vmem>>, vector<8x1xf32>
    %cst_16 = arith.constant 0.000000e+00 : f32
    %59 = vector.broadcast %cst_16 : f32 to vector<8x1xf32>
    %60 = arith.cmpf one, %58, %59 : vector<8x1xf32>
    %61 = arith.index_cast %13 : i32 to index
    %c0_17 = arith.constant 0 : index
    %62 = vector.load %arg1[%61, %c0_17] : memref<64x1xf32, #tpu.memory_space<vmem>>, vector<8x1xf32>
    %cst_18 = arith.constant 0.000000e+00 : f32
    %63 = vector.broadcast %cst_18 : f32 to vector<8x1xf32>
    %64 = arith.cmpf one, %62, %63 : vector<8x1xf32>
    %65 = vector.shape_cast %60 : vector<8x1xi1> to vector<8x1xi1>
    %66 = vector.broadcast %65 : vector<8x1xi1> to vector<8x32xi1>
    %67 = arith.select %66, %40, %8 : vector<8x32xi1>, vector<8x32xf32>
    %68 = vector.shape_cast %60 : vector<8x1xi1> to vector<8x1xi1>
    %69 = vector.broadcast %68 : vector<8x1xi1> to vector<8x32xi1>
    %70 = arith.select %69, %38, %8 : vector<8x32xi1>, vector<8x32xf32>
    %71 = vector.shape_cast %64 : vector<8x1xi1> to vector<8x1xi1>
    %72 = vector.broadcast %71 : vector<8x1xi1> to vector<8x32xi1>
    %73 = arith.select %72, %56, %8 : vector<8x32xi1>, vector<8x32xf32>
    %74 = vector.shape_cast %64 : vector<8x1xi1> to vector<8x1xi1>
    %75 = vector.broadcast %74 : vector<8x1xi1> to vector<8x32xi1>
    %76 = arith.select %75, %54, %8 : vector<8x32xi1>, vector<8x32xf32>
    %77 = arith.truncf %67 : vector<8x32xf32> to vector<8x32xbf16>
    %78 = arith.index_cast %10 : i32 to index
    %c0_19 = arith.constant 0 : index
    %79 = vector.load %arg12[%78, %c0_19] : memref<64x64xbf16, #tpu.memory_space<vmem>>, vector<8x32xbf16>
    tpu.vector_store %arg12[%78, %c0_19], %77 {strides = array<i32>} : memref<64x64xbf16, #tpu.memory_space<vmem>>, vector<8x32xbf16>,
    %80 = arith.truncf %73 : vector<8x32xf32> to vector<8x32xbf16>
    %81 = arith.index_cast %13 : i32 to index
    %c32 = arith.constant 32 : index
    %82 = vector.load %arg12[%81, %c32] : memref<64x64xbf16, #tpu.memory_space<vmem>>, vector<8x32xbf16>
    tpu.vector_store %arg12[%81, %c32], %80 {strides = array<i32>} : memref<64x64xbf16, #tpu.memory_space<vmem>>, vector<8x32xbf16>,
    %c1_i32 = arith.constant 1 : i32
    %c8_i32_20 = arith.constant 8 : i32
    %83 = arith.muli %c1_i32, %c8_i32_20 : i32
    %84 = tpu.assume_multiple %83, 8 : i32
    %c7_i32_21 = arith.constant 7 : i32
    %85 = arith.subi %c7_i32_21, %c1_i32 : i32
    %c8_i32_22 = arith.constant 8 : i32
    %86 = arith.muli %85, %c8_i32_22 : i32
    %87 = tpu.assume_multiple %86, 8 : i32
    %88 = tpu.concatenate %67, %73 in 1 : vector<8x32xf32>, vector<8x32xf32> -> vector<8x64xf32>
    %89 = arith.truncf %88 : vector<8x64xf32> to vector<8x64xbf16>
    %cst_23 = arith.constant dense<0.000000e+00> : vector<8x256xf32>
    %90 = tpu.matmul %89, %7, %cst_23 {dimension_numbers = #tpu.dot_dimension_numbers<[1], [0], [0], [1], [0, 0, 1, 1], [], []>} : vector<8x64xbf16>, vector<64x256xbf16>, vector<8x256xf32> -> vector<8x256xf32>
    %91 = arith.index_cast %84 : i32 to index
    %c0_24 = arith.constant 0 : index
    %92 = vector.load %arg11[%91, %c0_24] : memref<64x256xf32, #tpu.memory_space<vmem>>, vector<8x128xf32>
    %93 = vector.extract_strided_slice %90 {offsets = [0, 0], sizes = [8, 128], strides = [1, 1]} : vector<8x256xf32> to vector<8x128xf32>
    %94 = arith.addf %92, %93 : vector<8x128xf32>
    %95 = arith.index_cast %87 : i32 to index
    %c128_25 = arith.constant 128 : index
    %96 = vector.load %arg11[%95, %c128_25] : memref<64x256xf32, #tpu.memory_space<vmem>>, vector<8x128xf32>
    %97 = vector.extract_strided_slice %90 {offsets = [0, 128], sizes = [8, 128], strides = [1, 1]} : vector<8x256xf32> to vector<8x128xf32>
    %98 = arith.addf %96, %97 : vector<8x128xf32>
    %99 = vector.extract_strided_slice %94 {offsets = [0, 0], sizes = [8, 96], strides = [1, 1]} : vector<8x128xf32> to vector<8x96xf32>
    %100 = arith.negf %99 : vector<8x96xf32>
    %101 = math.exp %100 : vector<8x96xf32>
    %cst_26 = arith.constant 1.000000e+00 : f32
    %102 = vector.broadcast %cst_26 : f32 to vector<8x96xf32>
    %103 = arith.addf %102, %101 : vector<8x96xf32>
    %104 = arith.divf %102, %103 : vector<8x96xf32>
    %105 = vector.extract_strided_slice %104 {offsets = [0, 0], sizes = [8, 32], strides = [1, 1]} : vector<8x96xf32> to vector<8x32xf32>
    %106 = vector.extract_strided_slice %104 {offsets = [0, 32], sizes = [8, 32], strides = [1, 1]} : vector<8x96xf32> to vector<8x32xf32>
    %107 = vector.extract_strided_slice %104 {offsets = [0, 64], sizes = [8, 32], strides = [1, 1]} : vector<8x96xf32> to vector<8x32xf32>
    %108 = vector.extract_strided_slice %94 {offsets = [0, 96], sizes = [8, 32], strides = [1, 1]} : vector<8x128xf32> to vector<8x32xf32>
    %109 = math.tanh %108 : vector<8x32xf32>
    %110 = arith.mulf %106, %70 : vector<8x32xf32>
    %111 = arith.mulf %105, %109 : vector<8x32xf32>
    %112 = arith.addf %110, %111 : vector<8x32xf32>
    %113 = math.tanh %112 : vector<8x32xf32>
    %114 = arith.mulf %107, %113 : vector<8x32xf32>
    %115 = vector.extract_strided_slice %98 {offsets = [0, 0], sizes = [8, 96], strides = [1, 1]} : vector<8x128xf32> to vector<8x96xf32>
    %116 = arith.negf %115 : vector<8x96xf32>
    %117 = math.exp %116 : vector<8x96xf32>
    %cst_27 = arith.constant 1.000000e+00 : f32
    %118 = vector.broadcast %cst_27 : f32 to vector<8x96xf32>
    %119 = arith.addf %118, %117 : vector<8x96xf32>
    %120 = arith.divf %118, %119 : vector<8x96xf32>
    %121 = vector.extract_strided_slice %120 {offsets = [0, 0], sizes = [8, 32], strides = [1, 1]} : vector<8x96xf32> to vector<8x32xf32>
    %122 = vector.extract_strided_slice %120 {offsets = [0, 32], sizes = [8, 32], strides = [1, 1]} : vector<8x96xf32> to vector<8x32xf32>
    %123 = vector.extract_strided_slice %120 {offsets = [0, 64], sizes = [8, 32], strides = [1, 1]} : vector<8x96xf32> to vector<8x32xf32>
    %124 = vector.extract_strided_slice %98 {offsets = [0, 96], sizes = [8, 32], strides = [1, 1]} : vector<8x128xf32> to vector<8x32xf32>
    %125 = math.tanh %124 : vector<8x32xf32>
    %126 = arith.mulf %122, %76 : vector<8x32xf32>
    %127 = arith.mulf %121, %125 : vector<8x32xf32>
    %128 = arith.addf %126, %127 : vector<8x32xf32>
    %129 = math.tanh %128 : vector<8x32xf32>
    %130 = arith.mulf %123, %129 : vector<8x32xf32>
    %131 = arith.index_cast %84 : i32 to index
    %c0_28 = arith.constant 0 : index
    %132 = vector.load %arg1[%131, %c0_28] : memref<64x1xf32, #tpu.memory_space<vmem>>, vector<8x1xf32>
    %cst_29 = arith.constant 0.000000e+00 : f32
    %133 = vector.broadcast %cst_29 : f32 to vector<8x1xf32>
    %134 = arith.cmpf one, %132, %133 : vector<8x1xf32>
    %135 = arith.index_cast %87 : i32 to index
    %c0_30 = arith.constant 0 : index
    %136 = vector.load %arg1[%135, %c0_30] : memref<64x1xf32, #tpu.memory_space<vmem>>, vector<8x1xf32>
    %cst_31 = arith.constant 0.000000e+00 : f32
    %137 = vector.broadcast %cst_31 : f32 to vector<8x1xf32>
    %138 = arith.cmpf one, %136, %137 : vector<8x1xf32>
    %139 = vector.shape_cast %134 : vector<8x1xi1> to vector<8x1xi1>
    %140 = vector.broadcast %139 : vector<8x1xi1> to vector<8x32xi1>
    %141 = arith.select %140, %114, %67 : vector<8x32xi1>, vector<8x32xf32>
    %142 = vector.shape_cast %134 : vector<8x1xi1> to vector<8x1xi1>
    %143 = vector.broadcast %142 : vector<8x1xi1> to vector<8x32xi1>
    %144 = arith.select %143, %112, %70 : vector<8x32xi1>, vector<8x32xf32>
    %145 = vector.shape_cast %138 : vector<8x1xi1> to vector<8x1xi1>
    %146 = vector.broadcast %145 : vector<8x1xi1> to vector<8x32xi1>
    %147 = arith.select %146, %130, %73 : vector<8x32xi1>, vector<8x32xf32>
    %148 = vector.shape_cast %138 : vector<8x1xi1> to vector<8x1xi1>
    %149 = vector.broadcast %148 : vector<8x1xi1> to vector<8x32xi1>
    %150 = arith.select %149, %128, %76 : vector<8x32xi1>, vector<8x32xf32>
    %151 = arith.truncf %141 : vector<8x32xf32> to vector<8x32xbf16>
    %152 = arith.index_cast %84 : i32 to index
    %c0_32 = arith.constant 0 : index
    %153 = vector.load %arg12[%152, %c0_32] : memref<64x64xbf16, #tpu.memory_space<vmem>>, vector<8x32xbf16>
    tpu.vector_store %arg12[%152, %c0_32], %151 {strides = array<i32>} : memref<64x64xbf16, #tpu.memory_space<vmem>>, vector<8x32xbf16>,
    %154 = arith.truncf %147 : vector<8x32xf32> to vector<8x32xbf16>
    %155 = arith.index_cast %87 : i32 to index
    %c32_33 = arith.constant 32 : index
    %156 = vector.load %arg12[%155, %c32_33] : memref<64x64xbf16, #tpu.memory_space<vmem>>, vector<8x32xbf16>
    tpu.vector_store %arg12[%155, %c32_33], %154 {strides = array<i32>} : memref<64x64xbf16, #tpu.memory_space<vmem>>, vector<8x32xbf16>,
    %c2_i32 = arith.constant 2 : i32
    %c8_i32_34 = arith.constant 8 : i32
    %157 = arith.muli %c2_i32, %c8_i32_34 : i32
    %158 = tpu.assume_multiple %157, 8 : i32
    %c7_i32_35 = arith.constant 7 : i32
    %159 = arith.subi %c7_i32_35, %c2_i32 : i32
    %c8_i32_36 = arith.constant 8 : i32
    %160 = arith.muli %159, %c8_i32_36 : i32
    %161 = tpu.assume_multiple %160, 8 : i32
    %162 = tpu.concatenate %141, %147 in 1 : vector<8x32xf32>, vector<8x32xf32> -> vector<8x64xf32>
    %163 = arith.truncf %162 : vector<8x64xf32> to vector<8x64xbf16>
    %cst_37 = arith.constant dense<0.000000e+00> : vector<8x256xf32>
    %164 = tpu.matmul %163, %7, %cst_37 {dimension_numbers = #tpu.dot_dimension_numbers<[1], [0], [0], [1], [0, 0, 1, 1], [], []>} : vector<8x64xbf16>, vector<64x256xbf16>, vector<8x256xf32> -> vector<8x256xf32>
    %165 = arith.index_cast %158 : i32 to index
    %c0_38 = arith.constant 0 : index
    %166 = vector.load %arg11[%165, %c0_38] : memref<64x256xf32, #tpu.memory_space<vmem>>, vector<8x128xf32>
    %167 = vector.extract_strided_slice %164 {offsets = [0, 0], sizes = [8, 128], strides = [1, 1]} : vector<8x256xf32> to vector<8x128xf32>
    %168 = arith.addf %166, %167 : vector<8x128xf32>
    %169 = arith.index_cast %161 : i32 to index
    %c128_39 = arith.constant 128 : index
    %170 = vector.load %arg11[%169, %c128_39] : memref<64x256xf32, #tpu.memory_space<vmem>>, vector<8x128xf32>
    %171 = vector.extract_strided_slice %164 {offsets = [0, 128], sizes = [8, 128], strides = [1, 1]} : vector<8x256xf32> to vector<8x128xf32>
    %172 = arith.addf %170, %171 : vector<8x128xf32>
    %173 = vector.extract_strided_slice %168 {offsets = [0, 0], sizes = [8, 96], strides = [1, 1]} : vector<8x128xf32> to vector<8x96xf32>
    %174 = arith.negf %173 : vector<8x96xf32>
    %175 = math.exp %174 : vector<8x96xf32>
    %cst_40 = arith.constant 1.000000e+00 : f32
    %176 = vector.broadcast %cst_40 : f32 to vector<8x96xf32>
    %177 = arith.addf %176, %175 : vector<8x96xf32>
    %178 = arith.divf %176, %177 : vector<8x96xf32>
    %179 = vector.extract_strided_slice %178 {offsets = [0, 0], sizes = [8, 32], strides = [1, 1]} : vector<8x96xf32> to vector<8x32xf32>
    %180 = vector.extract_strided_slice %178 {offsets = [0, 32], sizes = [8, 32], strides = [1, 1]} : vector<8x96xf32> to vector<8x32xf32>
    %181 = vector.extract_strided_slice %178 {offsets = [0, 64], sizes = [8, 32], strides = [1, 1]} : vector<8x96xf32> to vector<8x32xf32>
    %182 = vector.extract_strided_slice %168 {offsets = [0, 96], sizes = [8, 32], strides = [1, 1]} : vector<8x128xf32> to vector<8x32xf32>
    %183 = math.tanh %182 : vector<8x32xf32>
    %184 = arith.mulf %180, %144 : vector<8x32xf32>
    %185 = arith.mulf %179, %183 : vector<8x32xf32>
    %186 = arith.addf %184, %185 : vector<8x32xf32>
    %187 = math.tanh %186 : vector<8x32xf32>
    %188 = arith.mulf %181, %187 : vector<8x32xf32>
    %189 = vector.extract_strided_slice %172 {offsets = [0, 0], sizes = [8, 96], strides = [1, 1]} : vector<8x128xf32> to vector<8x96xf32>
    %190 = arith.negf %189 : vector<8x96xf32>
    %191 = math.exp %190 : vector<8x96xf32>
    %cst_41 = arith.constant 1.000000e+00 : f32
    %192 = vector.broadcast %cst_41 : f32 to vector<8x96xf32>
    %193 = arith.addf %192, %191 : vector<8x96xf32>
    %194 = arith.divf %192, %193 : vector<8x96xf32>
    %195 = vector.extract_strided_slice %194 {offsets = [0, 0], sizes = [8, 32], strides = [1, 1]} : vector<8x96xf32> to vector<8x32xf32>
    %196 = vector.extract_strided_slice %194 {offsets = [0, 32], sizes = [8, 32], strides = [1, 1]} : vector<8x96xf32> to vector<8x32xf32>
    %197 = vector.extract_strided_slice %194 {offsets = [0, 64], sizes = [8, 32], strides = [1, 1]} : vector<8x96xf32> to vector<8x32xf32>
    %198 = vector.extract_strided_slice %172 {offsets = [0, 96], sizes = [8, 32], strides = [1, 1]} : vector<8x128xf32> to vector<8x32xf32>
    %199 = math.tanh %198 : vector<8x32xf32>
    %200 = arith.mulf %196, %150 : vector<8x32xf32>
    %201 = arith.mulf %195, %199 : vector<8x32xf32>
    %202 = arith.addf %200, %201 : vector<8x32xf32>
    %203 = math.tanh %202 : vector<8x32xf32>
    %204 = arith.mulf %197, %203 : vector<8x32xf32>
    %205 = arith.index_cast %158 : i32 to index
    %c0_42 = arith.constant 0 : index
    %206 = vector.load %arg1[%205, %c0_42] : memref<64x1xf32, #tpu.memory_space<vmem>>, vector<8x1xf32>
    %cst_43 = arith.constant 0.000000e+00 : f32
    %207 = vector.broadcast %cst_43 : f32 to vector<8x1xf32>
    %208 = arith.cmpf one, %206, %207 : vector<8x1xf32>
    %209 = arith.index_cast %161 : i32 to index
    %c0_44 = arith.constant 0 : index
    %210 = vector.load %arg1[%209, %c0_44] : memref<64x1xf32, #tpu.memory_space<vmem>>, vector<8x1xf32>
    %cst_45 = arith.constant 0.000000e+00 : f32
    %211 = vector.broadcast %cst_45 : f32 to vector<8x1xf32>
    %212 = arith.cmpf one, %210, %211 : vector<8x1xf32>
    %213 = vector.shape_cast %208 : vector<8x1xi1> to vector<8x1xi1>
    %214 = vector.broadcast %213 : vector<8x1xi1> to vector<8x32xi1>
    %215 = arith.select %214, %188, %141 : vector<8x32xi1>, vector<8x32xf32>
    %216 = vector.shape_cast %208 : vector<8x1xi1> to vector<8x1xi1>
    %217 = vector.broadcast %216 : vector<8x1xi1> to vector<8x32xi1>
    %218 = arith.select %217, %186, %144 : vector<8x32xi1>, vector<8x32xf32>
    %219 = vector.shape_cast %212 : vector<8x1xi1> to vector<8x1xi1>
    %220 = vector.broadcast %219 : vector<8x1xi1> to vector<8x32xi1>
    %221 = arith.select %220, %204, %147 : vector<8x32xi1>, vector<8x32xf32>
    %222 = vector.shape_cast %212 : vector<8x1xi1> to vector<8x1xi1>
    %223 = vector.broadcast %222 : vector<8x1xi1> to vector<8x32xi1>
    %224 = arith.select %223, %202, %150 : vector<8x32xi1>, vector<8x32xf32>
    %225 = arith.truncf %215 : vector<8x32xf32> to vector<8x32xbf16>
    %226 = arith.index_cast %158 : i32 to index
    %c0_46 = arith.constant 0 : index
    %227 = vector.load %arg12[%226, %c0_46] : memref<64x64xbf16, #tpu.memory_space<vmem>>, vector<8x32xbf16>
    tpu.vector_store %arg12[%226, %c0_46], %225 {strides = array<i32>} : memref<64x64xbf16, #tpu.memory_space<vmem>>, vector<8x32xbf16>,
    %228 = arith.truncf %221 : vector<8x32xf32> to vector<8x32xbf16>
    %229 = arith.index_cast %161 : i32 to index
    %c32_47 = arith.constant 32 : index
    %230 = vector.load %arg12[%229, %c32_47] : memref<64x64xbf16, #tpu.memory_space<vmem>>, vector<8x32xbf16>
    tpu.vector_store %arg12[%229, %c32_47], %228 {strides = array<i32>} : memref<64x64xbf16, #tpu.memory_space<vmem>>, vector<8x32xbf16>,
    %c3_i32 = arith.constant 3 : i32
    %c8_i32_48 = arith.constant 8 : i32
    %231 = arith.muli %c3_i32, %c8_i32_48 : i32
    %232 = tpu.assume_multiple %231, 8 : i32
    %c7_i32_49 = arith.constant 7 : i32
    %233 = arith.subi %c7_i32_49, %c3_i32 : i32
    %c8_i32_50 = arith.constant 8 : i32
    %234 = arith.muli %233, %c8_i32_50 : i32
    %235 = tpu.assume_multiple %234, 8 : i32
    %236 = tpu.concatenate %215, %221 in 1 : vector<8x32xf32>, vector<8x32xf32> -> vector<8x64xf32>
    %237 = arith.truncf %236 : vector<8x64xf32> to vector<8x64xbf16>
    %cst_51 = arith.constant dense<0.000000e+00> : vector<8x256xf32>
    %238 = tpu.matmul %237, %7, %cst_51 {dimension_numbers = #tpu.dot_dimension_numbers<[1], [0], [0], [1], [0, 0, 1, 1], [], []>} : vector<8x64xbf16>, vector<64x256xbf16>, vector<8x256xf32> -> vector<8x256xf32>
    %239 = arith.index_cast %232 : i32 to index
    %c0_52 = arith.constant 0 : index
    %240 = vector.load %arg11[%239, %c0_52] : memref<64x256xf32, #tpu.memory_space<vmem>>, vector<8x128xf32>
    %241 = vector.extract_strided_slice %238 {offsets = [0, 0], sizes = [8, 128], strides = [1, 1]} : vector<8x256xf32> to vector<8x128xf32>
    %242 = arith.addf %240, %241 : vector<8x128xf32>
    %243 = arith.index_cast %235 : i32 to index
    %c128_53 = arith.constant 128 : index
    %244 = vector.load %arg11[%243, %c128_53] : memref<64x256xf32, #tpu.memory_space<vmem>>, vector<8x128xf32>
    %245 = vector.extract_strided_slice %238 {offsets = [0, 128], sizes = [8, 128], strides = [1, 1]} : vector<8x256xf32> to vector<8x128xf32>
    %246 = arith.addf %244, %245 : vector<8x128xf32>
    %247 = vector.extract_strided_slice %242 {offsets = [0, 0], sizes = [8, 96], strides = [1, 1]} : vector<8x128xf32> to vector<8x96xf32>
    %248 = arith.negf %247 : vector<8x96xf32>
    %249 = math.exp %248 : vector<8x96xf32>
    %cst_54 = arith.constant 1.000000e+00 : f32
    %250 = vector.broadcast %cst_54 : f32 to vector<8x96xf32>
    %251 = arith.addf %250, %249 : vector<8x96xf32>
    %252 = arith.divf %250, %251 : vector<8x96xf32>
    %253 = vector.extract_strided_slice %252 {offsets = [0, 0], sizes = [8, 32], strides = [1, 1]} : vector<8x96xf32> to vector<8x32xf32>
    %254 = vector.extract_strided_slice %252 {offsets = [0, 32], sizes = [8, 32], strides = [1, 1]} : vector<8x96xf32> to vector<8x32xf32>
    %255 = vector.extract_strided_slice %252 {offsets = [0, 64], sizes = [8, 32], strides = [1, 1]} : vector<8x96xf32> to vector<8x32xf32>
    %256 = vector.extract_strided_slice %242 {offsets = [0, 96], sizes = [8, 32], strides = [1, 1]} : vector<8x128xf32> to vector<8x32xf32>
    %257 = math.tanh %256 : vector<8x32xf32>
    %258 = arith.mulf %254, %218 : vector<8x32xf32>
    %259 = arith.mulf %253, %257 : vector<8x32xf32>
    %260 = arith.addf %258, %259 : vector<8x32xf32>
    %261 = math.tanh %260 : vector<8x32xf32>
    %262 = arith.mulf %255, %261 : vector<8x32xf32>
    %263 = vector.extract_strided_slice %246 {offsets = [0, 0], sizes = [8, 96], strides = [1, 1]} : vector<8x128xf32> to vector<8x96xf32>
    %264 = arith.negf %263 : vector<8x96xf32>
    %265 = math.exp %264 : vector<8x96xf32>
    %cst_55 = arith.constant 1.000000e+00 : f32
    %266 = vector.broadcast %cst_55 : f32 to vector<8x96xf32>
    %267 = arith.addf %266, %265 : vector<8x96xf32>
    %268 = arith.divf %266, %267 : vector<8x96xf32>
    %269 = vector.extract_strided_slice %268 {offsets = [0, 0], sizes = [8, 32], strides = [1, 1]} : vector<8x96xf32> to vector<8x32xf32>
    %270 = vector.extract_strided_slice %268 {offsets = [0, 32], sizes = [8, 32], strides = [1, 1]} : vector<8x96xf32> to vector<8x32xf32>
    %271 = vector.extract_strided_slice %268 {offsets = [0, 64], sizes = [8, 32], strides = [1, 1]} : vector<8x96xf32> to vector<8x32xf32>
    %272 = vector.extract_strided_slice %246 {offsets = [0, 96], sizes = [8, 32], strides = [1, 1]} : vector<8x128xf32> to vector<8x32xf32>
    %273 = math.tanh %272 : vector<8x32xf32>
    %274 = arith.mulf %270, %224 : vector<8x32xf32>
    %275 = arith.mulf %269, %273 : vector<8x32xf32>
    %276 = arith.addf %274, %275 : vector<8x32xf32>
    %277 = math.tanh %276 : vector<8x32xf32>
    %278 = arith.mulf %271, %277 : vector<8x32xf32>
    %279 = arith.index_cast %232 : i32 to index
    %c0_56 = arith.constant 0 : index
    %280 = vector.load %arg1[%279, %c0_56] : memref<64x1xf32, #tpu.memory_space<vmem>>, vector<8x1xf32>
    %cst_57 = arith.constant 0.000000e+00 : f32
    %281 = vector.broadcast %cst_57 : f32 to vector<8x1xf32>
    %282 = arith.cmpf one, %280, %281 : vector<8x1xf32>
    %283 = arith.index_cast %235 : i32 to index
    %c0_58 = arith.constant 0 : index
    %284 = vector.load %arg1[%283, %c0_58] : memref<64x1xf32, #tpu.memory_space<vmem>>, vector<8x1xf32>
    %cst_59 = arith.constant 0.000000e+00 : f32
    %285 = vector.broadcast %cst_59 : f32 to vector<8x1xf32>
    %286 = arith.cmpf one, %284, %285 : vector<8x1xf32>
    %287 = vector.shape_cast %282 : vector<8x1xi1> to vector<8x1xi1>
    %288 = vector.broadcast %287 : vector<8x1xi1> to vector<8x32xi1>
    %289 = arith.select %288, %262, %215 : vector<8x32xi1>, vector<8x32xf32>
    %290 = vector.shape_cast %282 : vector<8x1xi1> to vector<8x1xi1>
    %291 = vector.broadcast %290 : vector<8x1xi1> to vector<8x32xi1>
    %292 = arith.select %291, %260, %218 : vector<8x32xi1>, vector<8x32xf32>
    %293 = vector.shape_cast %286 : vector<8x1xi1> to vector<8x1xi1>
    %294 = vector.broadcast %293 : vector<8x1xi1> to vector<8x32xi1>
    %295 = arith.select %294, %278, %221 : vector<8x32xi1>, vector<8x32xf32>
    %296 = vector.shape_cast %286 : vector<8x1xi1> to vector<8x1xi1>
    %297 = vector.broadcast %296 : vector<8x1xi1> to vector<8x32xi1>
    %298 = arith.select %297, %276, %224 : vector<8x32xi1>, vector<8x32xf32>
    %299 = arith.truncf %289 : vector<8x32xf32> to vector<8x32xbf16>
    %300 = arith.index_cast %232 : i32 to index
    %c0_60 = arith.constant 0 : index
    %301 = vector.load %arg12[%300, %c0_60] : memref<64x64xbf16, #tpu.memory_space<vmem>>, vector<8x32xbf16>
    tpu.vector_store %arg12[%300, %c0_60], %299 {strides = array<i32>} : memref<64x64xbf16, #tpu.memory_space<vmem>>, vector<8x32xbf16>,
    %302 = arith.truncf %295 : vector<8x32xf32> to vector<8x32xbf16>
    %303 = arith.index_cast %235 : i32 to index
    %c32_61 = arith.constant 32 : index
    %304 = vector.load %arg12[%303, %c32_61] : memref<64x64xbf16, #tpu.memory_space<vmem>>, vector<8x32xbf16>
    tpu.vector_store %arg12[%303, %c32_61], %302 {strides = array<i32>} : memref<64x64xbf16, #tpu.memory_space<vmem>>, vector<8x32xbf16>,
    %c4_i32 = arith.constant 4 : i32
    %c8_i32_62 = arith.constant 8 : i32
    %305 = arith.muli %c4_i32, %c8_i32_62 : i32
    %306 = tpu.assume_multiple %305, 8 : i32
    %c7_i32_63 = arith.constant 7 : i32
    %307 = arith.subi %c7_i32_63, %c4_i32 : i32
    %c8_i32_64 = arith.constant 8 : i32
    %308 = arith.muli %307, %c8_i32_64 : i32
    %309 = tpu.assume_multiple %308, 8 : i32
    %310 = tpu.concatenate %289, %295 in 1 : vector<8x32xf32>, vector<8x32xf32> -> vector<8x64xf32>
    %311 = arith.truncf %310 : vector<8x64xf32> to vector<8x64xbf16>
    %cst_65 = arith.constant dense<0.000000e+00> : vector<8x256xf32>
    %312 = tpu.matmul %311, %7, %cst_65 {dimension_numbers = #tpu.dot_dimension_numbers<[1], [0], [0], [1], [0, 0, 1, 1], [], []>} : vector<8x64xbf16>, vector<64x256xbf16>, vector<8x256xf32> -> vector<8x256xf32>
    %313 = arith.index_cast %306 : i32 to index
    %c0_66 = arith.constant 0 : index
    %314 = vector.load %arg11[%313, %c0_66] : memref<64x256xf32, #tpu.memory_space<vmem>>, vector<8x128xf32>
    %315 = vector.extract_strided_slice %312 {offsets = [0, 0], sizes = [8, 128], strides = [1, 1]} : vector<8x256xf32> to vector<8x128xf32>
    %316 = arith.addf %314, %315 : vector<8x128xf32>
    %317 = arith.index_cast %309 : i32 to index
    %c128_67 = arith.constant 128 : index
    %318 = vector.load %arg11[%317, %c128_67] : memref<64x256xf32, #tpu.memory_space<vmem>>, vector<8x128xf32>
    %319 = vector.extract_strided_slice %312 {offsets = [0, 128], sizes = [8, 128], strides = [1, 1]} : vector<8x256xf32> to vector<8x128xf32>
    %320 = arith.addf %318, %319 : vector<8x128xf32>
    %321 = vector.extract_strided_slice %316 {offsets = [0, 0], sizes = [8, 96], strides = [1, 1]} : vector<8x128xf32> to vector<8x96xf32>
    %322 = arith.negf %321 : vector<8x96xf32>
    %323 = math.exp %322 : vector<8x96xf32>
    %cst_68 = arith.constant 1.000000e+00 : f32
    %324 = vector.broadcast %cst_68 : f32 to vector<8x96xf32>
    %325 = arith.addf %324, %323 : vector<8x96xf32>
    %326 = arith.divf %324, %325 : vector<8x96xf32>
    %327 = vector.extract_strided_slice %326 {offsets = [0, 0], sizes = [8, 32], strides = [1, 1]} : vector<8x96xf32> to vector<8x32xf32>
    %328 = vector.extract_strided_slice %326 {offsets = [0, 32], sizes = [8, 32], strides = [1, 1]} : vector<8x96xf32> to vector<8x32xf32>
    %329 = vector.extract_strided_slice %326 {offsets = [0, 64], sizes = [8, 32], strides = [1, 1]} : vector<8x96xf32> to vector<8x32xf32>
    %330 = vector.extract_strided_slice %316 {offsets = [0, 96], sizes = [8, 32], strides = [1, 1]} : vector<8x128xf32> to vector<8x32xf32>
    %331 = math.tanh %330 : vector<8x32xf32>
    %332 = arith.mulf %328, %292 : vector<8x32xf32>
    %333 = arith.mulf %327, %331 : vector<8x32xf32>
    %334 = arith.addf %332, %333 : vector<8x32xf32>
    %335 = math.tanh %334 : vector<8x32xf32>
    %336 = arith.mulf %329, %335 : vector<8x32xf32>
    %337 = vector.extract_strided_slice %320 {offsets = [0, 0], sizes = [8, 96], strides = [1, 1]} : vector<8x128xf32> to vector<8x96xf32>
    %338 = arith.negf %337 : vector<8x96xf32>
    %339 = math.exp %338 : vector<8x96xf32>
    %cst_69 = arith.constant 1.000000e+00 : f32
    %340 = vector.broadcast %cst_69 : f32 to vector<8x96xf32>
    %341 = arith.addf %340, %339 : vector<8x96xf32>
    %342 = arith.divf %340, %341 : vector<8x96xf32>
    %343 = vector.extract_strided_slice %342 {offsets = [0, 0], sizes = [8, 32], strides = [1, 1]} : vector<8x96xf32> to vector<8x32xf32>
    %344 = vector.extract_strided_slice %342 {offsets = [0, 32], sizes = [8, 32], strides = [1, 1]} : vector<8x96xf32> to vector<8x32xf32>
    %345 = vector.extract_strided_slice %342 {offsets = [0, 64], sizes = [8, 32], strides = [1, 1]} : vector<8x96xf32> to vector<8x32xf32>
    %346 = vector.extract_strided_slice %320 {offsets = [0, 96], sizes = [8, 32], strides = [1, 1]} : vector<8x128xf32> to vector<8x32xf32>
    %347 = math.tanh %346 : vector<8x32xf32>
    %348 = arith.mulf %344, %298 : vector<8x32xf32>
    %349 = arith.mulf %343, %347 : vector<8x32xf32>
    %350 = arith.addf %348, %349 : vector<8x32xf32>
    %351 = math.tanh %350 : vector<8x32xf32>
    %352 = arith.mulf %345, %351 : vector<8x32xf32>
    %353 = arith.index_cast %306 : i32 to index
    %c0_70 = arith.constant 0 : index
    %354 = vector.load %arg1[%353, %c0_70] : memref<64x1xf32, #tpu.memory_space<vmem>>, vector<8x1xf32>
    %cst_71 = arith.constant 0.000000e+00 : f32
    %355 = vector.broadcast %cst_71 : f32 to vector<8x1xf32>
    %356 = arith.cmpf one, %354, %355 : vector<8x1xf32>
    %357 = arith.index_cast %309 : i32 to index
    %c0_72 = arith.constant 0 : index
    %358 = vector.load %arg1[%357, %c0_72] : memref<64x1xf32, #tpu.memory_space<vmem>>, vector<8x1xf32>
    %cst_73 = arith.constant 0.000000e+00 : f32
    %359 = vector.broadcast %cst_73 : f32 to vector<8x1xf32>
    %360 = arith.cmpf one, %358, %359 : vector<8x1xf32>
    %361 = vector.shape_cast %356 : vector<8x1xi1> to vector<8x1xi1>
    %362 = vector.broadcast %361 : vector<8x1xi1> to vector<8x32xi1>
    %363 = arith.select %362, %336, %289 : vector<8x32xi1>, vector<8x32xf32>
    %364 = vector.shape_cast %356 : vector<8x1xi1> to vector<8x1xi1>
    %365 = vector.broadcast %364 : vector<8x1xi1> to vector<8x32xi1>
    %366 = arith.select %365, %334, %292 : vector<8x32xi1>, vector<8x32xf32>
    %367 = vector.shape_cast %360 : vector<8x1xi1> to vector<8x1xi1>
    %368 = vector.broadcast %367 : vector<8x1xi1> to vector<8x32xi1>
    %369 = arith.select %368, %352, %295 : vector<8x32xi1>, vector<8x32xf32>
    %370 = vector.shape_cast %360 : vector<8x1xi1> to vector<8x1xi1>
    %371 = vector.broadcast %370 : vector<8x1xi1> to vector<8x32xi1>
    %372 = arith.select %371, %350, %298 : vector<8x32xi1>, vector<8x32xf32>
    %373 = arith.truncf %363 : vector<8x32xf32> to vector<8x32xbf16>
    %374 = arith.index_cast %306 : i32 to index
    %c0_74 = arith.constant 0 : index
    %375 = vector.load %arg12[%374, %c0_74] : memref<64x64xbf16, #tpu.memory_space<vmem>>, vector<8x32xbf16>
    tpu.vector_store %arg12[%374, %c0_74], %373 {strides = array<i32>} : memref<64x64xbf16, #tpu.memory_space<vmem>>, vector<8x32xbf16>,
    %376 = arith.truncf %369 : vector<8x32xf32> to vector<8x32xbf16>
    %377 = arith.index_cast %309 : i32 to index
    %c32_75 = arith.constant 32 : index
    %378 = vector.load %arg12[%377, %c32_75] : memref<64x64xbf16, #tpu.memory_space<vmem>>, vector<8x32xbf16>
    tpu.vector_store %arg12[%377, %c32_75], %376 {strides = array<i32>} : memref<64x64xbf16, #tpu.memory_space<vmem>>, vector<8x32xbf16>,
    %c5_i32 = arith.constant 5 : i32
    %c8_i32_76 = arith.constant 8 : i32
    %379 = arith.muli %c5_i32, %c8_i32_76 : i32
    %380 = tpu.assume_multiple %379, 8 : i32
    %c7_i32_77 = arith.constant 7 : i32
    %381 = arith.subi %c7_i32_77, %c5_i32 : i32
    %c8_i32_78 = arith.constant 8 : i32
    %382 = arith.muli %381, %c8_i32_78 : i32
    %383 = tpu.assume_multiple %382, 8 : i32
    %384 = tpu.concatenate %363, %369 in 1 : vector<8x32xf32>, vector<8x32xf32> -> vector<8x64xf32>
    %385 = arith.truncf %384 : vector<8x64xf32> to vector<8x64xbf16>
    %cst_79 = arith.constant dense<0.000000e+00> : vector<8x256xf32>
    %386 = tpu.matmul %385, %7, %cst_79 {dimension_numbers = #tpu.dot_dimension_numbers<[1], [0], [0], [1], [0, 0, 1, 1], [], []>} : vector<8x64xbf16>, vector<64x256xbf16>, vector<8x256xf32> -> vector<8x256xf32>
    %387 = arith.index_cast %380 : i32 to index
    %c0_80 = arith.constant 0 : index
    %388 = vector.load %arg11[%387, %c0_80] : memref<64x256xf32, #tpu.memory_space<vmem>>, vector<8x128xf32>
    %389 = vector.extract_strided_slice %386 {offsets = [0, 0], sizes = [8, 128], strides = [1, 1]} : vector<8x256xf32> to vector<8x128xf32>
    %390 = arith.addf %388, %389 : vector<8x128xf32>
    %391 = arith.index_cast %383 : i32 to index
    %c128_81 = arith.constant 128 : index
    %392 = vector.load %arg11[%391, %c128_81] : memref<64x256xf32, #tpu.memory_space<vmem>>, vector<8x128xf32>
    %393 = vector.extract_strided_slice %386 {offsets = [0, 128], sizes = [8, 128], strides = [1, 1]} : vector<8x256xf32> to vector<8x128xf32>
    %394 = arith.addf %392, %393 : vector<8x128xf32>
    %395 = vector.extract_strided_slice %390 {offsets = [0, 0], sizes = [8, 96], strides = [1, 1]} : vector<8x128xf32> to vector<8x96xf32>
    %396 = arith.negf %395 : vector<8x96xf32>
    %397 = math.exp %396 : vector<8x96xf32>
    %cst_82 = arith.constant 1.000000e+00 : f32
    %398 = vector.broadcast %cst_82 : f32 to vector<8x96xf32>
    %399 = arith.addf %398, %397 : vector<8x96xf32>
    %400 = arith.divf %398, %399 : vector<8x96xf32>
    %401 = vector.extract_strided_slice %400 {offsets = [0, 0], sizes = [8, 32], strides = [1, 1]} : vector<8x96xf32> to vector<8x32xf32>
    %402 = vector.extract_strided_slice %400 {offsets = [0, 32], sizes = [8, 32], strides = [1, 1]} : vector<8x96xf32> to vector<8x32xf32>
    %403 = vector.extract_strided_slice %400 {offsets = [0, 64], sizes = [8, 32], strides = [1, 1]} : vector<8x96xf32> to vector<8x32xf32>
    %404 = vector.extract_strided_slice %390 {offsets = [0, 96], sizes = [8, 32], strides = [1, 1]} : vector<8x128xf32> to vector<8x32xf32>
    %405 = math.tanh %404 : vector<8x32xf32>
    %406 = arith.mulf %402, %366 : vector<8x32xf32>
    %407 = arith.mulf %401, %405 : vector<8x32xf32>
    %408 = arith.addf %406, %407 : vector<8x32xf32>
    %409 = math.tanh %408 : vector<8x32xf32>
    %410 = arith.mulf %403, %409 : vector<8x32xf32>
    %411 = vector.extract_strided_slice %394 {offsets = [0, 0], sizes = [8, 96], strides = [1, 1]} : vector<8x128xf32> to vector<8x96xf32>
    %412 = arith.negf %411 : vector<8x96xf32>
    %413 = math.exp %412 : vector<8x96xf32>
    %cst_83 = arith.constant 1.000000e+00 : f32
    %414 = vector.broadcast %cst_83 : f32 to vector<8x96xf32>
    %415 = arith.addf %414, %413 : vector<8x96xf32>
    %416 = arith.divf %414, %415 : vector<8x96xf32>
    %417 = vector.extract_strided_slice %416 {offsets = [0, 0], sizes = [8, 32], strides = [1, 1]} : vector<8x96xf32> to vector<8x32xf32>
    %418 = vector.extract_strided_slice %416 {offsets = [0, 32], sizes = [8, 32], strides = [1, 1]} : vector<8x96xf32> to vector<8x32xf32>
    %419 = vector.extract_strided_slice %416 {offsets = [0, 64], sizes = [8, 32], strides = [1, 1]} : vector<8x96xf32> to vector<8x32xf32>
    %420 = vector.extract_strided_slice %394 {offsets = [0, 96], sizes = [8, 32], strides = [1, 1]} : vector<8x128xf32> to vector<8x32xf32>
    %421 = math.tanh %420 : vector<8x32xf32>
    %422 = arith.mulf %418, %372 : vector<8x32xf32>
    %423 = arith.mulf %417, %421 : vector<8x32xf32>
    %424 = arith.addf %422, %423 : vector<8x32xf32>
    %425 = math.tanh %424 : vector<8x32xf32>
    %426 = arith.mulf %419, %425 : vector<8x32xf32>
    %427 = arith.index_cast %380 : i32 to index
    %c0_84 = arith.constant 0 : index
    %428 = vector.load %arg1[%427, %c0_84] : memref<64x1xf32, #tpu.memory_space<vmem>>, vector<8x1xf32>
    %cst_85 = arith.constant 0.000000e+00 : f32
    %429 = vector.broadcast %cst_85 : f32 to vector<8x1xf32>
    %430 = arith.cmpf one, %428, %429 : vector<8x1xf32>
    %431 = arith.index_cast %383 : i32 to index
    %c0_86 = arith.constant 0 : index
    %432 = vector.load %arg1[%431, %c0_86] : memref<64x1xf32, #tpu.memory_space<vmem>>, vector<8x1xf32>
    %cst_87 = arith.constant 0.000000e+00 : f32
    %433 = vector.broadcast %cst_87 : f32 to vector<8x1xf32>
    %434 = arith.cmpf one, %432, %433 : vector<8x1xf32>
    %435 = vector.shape_cast %430 : vector<8x1xi1> to vector<8x1xi1>
    %436 = vector.broadcast %435 : vector<8x1xi1> to vector<8x32xi1>
    %437 = arith.select %436, %410, %363 : vector<8x32xi1>, vector<8x32xf32>
    %438 = vector.shape_cast %430 : vector<8x1xi1> to vector<8x1xi1>
    %439 = vector.broadcast %438 : vector<8x1xi1> to vector<8x32xi1>
    %440 = arith.select %439, %408, %366 : vector<8x32xi1>, vector<8x32xf32>
    %441 = vector.shape_cast %434 : vector<8x1xi1> to vector<8x1xi1>
    %442 = vector.broadcast %441 : vector<8x1xi1> to vector<8x32xi1>
    %443 = arith.select %442, %426, %369 : vector<8x32xi1>, vector<8x32xf32>
    %444 = vector.shape_cast %434 : vector<8x1xi1> to vector<8x1xi1>
    %445 = vector.broadcast %444 : vector<8x1xi1> to vector<8x32xi1>
    %446 = arith.select %445, %424, %372 : vector<8x32xi1>, vector<8x32xf32>
    %447 = arith.truncf %437 : vector<8x32xf32> to vector<8x32xbf16>
    %448 = arith.index_cast %380 : i32 to index
    %c0_88 = arith.constant 0 : index
    %449 = vector.load %arg12[%448, %c0_88] : memref<64x64xbf16, #tpu.memory_space<vmem>>, vector<8x32xbf16>
    tpu.vector_store %arg12[%448, %c0_88], %447 {strides = array<i32>} : memref<64x64xbf16, #tpu.memory_space<vmem>>, vector<8x32xbf16>,
    %450 = arith.truncf %443 : vector<8x32xf32> to vector<8x32xbf16>
    %451 = arith.index_cast %383 : i32 to index
    %c32_89 = arith.constant 32 : index
    %452 = vector.load %arg12[%451, %c32_89] : memref<64x64xbf16, #tpu.memory_space<vmem>>, vector<8x32xbf16>
    tpu.vector_store %arg12[%451, %c32_89], %450 {strides = array<i32>} : memref<64x64xbf16, #tpu.memory_space<vmem>>, vector<8x32xbf16>,
    %c6_i32 = arith.constant 6 : i32
    %c8_i32_90 = arith.constant 8 : i32
    %453 = arith.muli %c6_i32, %c8_i32_90 : i32
    %454 = tpu.assume_multiple %453, 8 : i32
    %c7_i32_91 = arith.constant 7 : i32
    %455 = arith.subi %c7_i32_91, %c6_i32 : i32
    %c8_i32_92 = arith.constant 8 : i32
    %456 = arith.muli %455, %c8_i32_92 : i32
    %457 = tpu.assume_multiple %456, 8 : i32
    %458 = tpu.concatenate %437, %443 in 1 : vector<8x32xf32>, vector<8x32xf32> -> vector<8x64xf32>
    %459 = arith.truncf %458 : vector<8x64xf32> to vector<8x64xbf16>
    %cst_93 = arith.constant dense<0.000000e+00> : vector<8x256xf32>
    %460 = tpu.matmul %459, %7, %cst_93 {dimension_numbers = #tpu.dot_dimension_numbers<[1], [0], [0], [1], [0, 0, 1, 1], [], []>} : vector<8x64xbf16>, vector<64x256xbf16>, vector<8x256xf32> -> vector<8x256xf32>
    %461 = arith.index_cast %454 : i32 to index
    %c0_94 = arith.constant 0 : index
    %462 = vector.load %arg11[%461, %c0_94] : memref<64x256xf32, #tpu.memory_space<vmem>>, vector<8x128xf32>
    %463 = vector.extract_strided_slice %460 {offsets = [0, 0], sizes = [8, 128], strides = [1, 1]} : vector<8x256xf32> to vector<8x128xf32>
    %464 = arith.addf %462, %463 : vector<8x128xf32>
    %465 = arith.index_cast %457 : i32 to index
    %c128_95 = arith.constant 128 : index
    %466 = vector.load %arg11[%465, %c128_95] : memref<64x256xf32, #tpu.memory_space<vmem>>, vector<8x128xf32>
    %467 = vector.extract_strided_slice %460 {offsets = [0, 128], sizes = [8, 128], strides = [1, 1]} : vector<8x256xf32> to vector<8x128xf32>
    %468 = arith.addf %466, %467 : vector<8x128xf32>
    %469 = vector.extract_strided_slice %464 {offsets = [0, 0], sizes = [8, 96], strides = [1, 1]} : vector<8x128xf32> to vector<8x96xf32>
    %470 = arith.negf %469 : vector<8x96xf32>
    %471 = math.exp %470 : vector<8x96xf32>
    %cst_96 = arith.constant 1.000000e+00 : f32
    %472 = vector.broadcast %cst_96 : f32 to vector<8x96xf32>
    %473 = arith.addf %472, %471 : vector<8x96xf32>
    %474 = arith.divf %472, %473 : vector<8x96xf32>
    %475 = vector.extract_strided_slice %474 {offsets = [0, 0], sizes = [8, 32], strides = [1, 1]} : vector<8x96xf32> to vector<8x32xf32>
    %476 = vector.extract_strided_slice %474 {offsets = [0, 32], sizes = [8, 32], strides = [1, 1]} : vector<8x96xf32> to vector<8x32xf32>
    %477 = vector.extract_strided_slice %474 {offsets = [0, 64], sizes = [8, 32], strides = [1, 1]} : vector<8x96xf32> to vector<8x32xf32>
    %478 = vector.extract_strided_slice %464 {offsets = [0, 96], sizes = [8, 32], strides = [1, 1]} : vector<8x128xf32> to vector<8x32xf32>
    %479 = math.tanh %478 : vector<8x32xf32>
    %480 = arith.mulf %476, %440 : vector<8x32xf32>
    %481 = arith.mulf %475, %479 : vector<8x32xf32>
    %482 = arith.addf %480, %481 : vector<8x32xf32>
    %483 = math.tanh %482 : vector<8x32xf32>
    %484 = arith.mulf %477, %483 : vector<8x32xf32>
    %485 = vector.extract_strided_slice %468 {offsets = [0, 0], sizes = [8, 96], strides = [1, 1]} : vector<8x128xf32> to vector<8x96xf32>
    %486 = arith.negf %485 : vector<8x96xf32>
    %487 = math.exp %486 : vector<8x96xf32>
    %cst_97 = arith.constant 1.000000e+00 : f32
    %488 = vector.broadcast %cst_97 : f32 to vector<8x96xf32>
    %489 = arith.addf %488, %487 : vector<8x96xf32>
    %490 = arith.divf %488, %489 : vector<8x96xf32>
    %491 = vector.extract_strided_slice %490 {offsets = [0, 0], sizes = [8, 32], strides = [1, 1]} : vector<8x96xf32> to vector<8x32xf32>
    %492 = vector.extract_strided_slice %490 {offsets = [0, 32], sizes = [8, 32], strides = [1, 1]} : vector<8x96xf32> to vector<8x32xf32>
    %493 = vector.extract_strided_slice %490 {offsets = [0, 64], sizes = [8, 32], strides = [1, 1]} : vector<8x96xf32> to vector<8x32xf32>
    %494 = vector.extract_strided_slice %468 {offsets = [0, 96], sizes = [8, 32], strides = [1, 1]} : vector<8x128xf32> to vector<8x32xf32>
    %495 = math.tanh %494 : vector<8x32xf32>
    %496 = arith.mulf %492, %446 : vector<8x32xf32>
    %497 = arith.mulf %491, %495 : vector<8x32xf32>
    %498 = arith.addf %496, %497 : vector<8x32xf32>
    %499 = math.tanh %498 : vector<8x32xf32>
    %500 = arith.mulf %493, %499 : vector<8x32xf32>
    %501 = arith.index_cast %454 : i32 to index
    %c0_98 = arith.constant 0 : index
    %502 = vector.load %arg1[%501, %c0_98] : memref<64x1xf32, #tpu.memory_space<vmem>>, vector<8x1xf32>
    %cst_99 = arith.constant 0.000000e+00 : f32
    %503 = vector.broadcast %cst_99 : f32 to vector<8x1xf32>
    %504 = arith.cmpf one, %502, %503 : vector<8x1xf32>
    %505 = arith.index_cast %457 : i32 to index
    %c0_100 = arith.constant 0 : index
    %506 = vector.load %arg1[%505, %c0_100] : memref<64x1xf32, #tpu.memory_space<vmem>>, vector<8x1xf32>
    %cst_101 = arith.constant 0.000000e+00 : f32
    %507 = vector.broadcast %cst_101 : f32 to vector<8x1xf32>
    %508 = arith.cmpf one, %506, %507 : vector<8x1xf32>
    %509 = vector.shape_cast %504 : vector<8x1xi1> to vector<8x1xi1>
    %510 = vector.broadcast %509 : vector<8x1xi1> to vector<8x32xi1>
    %511 = arith.select %510, %484, %437 : vector<8x32xi1>, vector<8x32xf32>
    %512 = vector.shape_cast %504 : vector<8x1xi1> to vector<8x1xi1>
    %513 = vector.broadcast %512 : vector<8x1xi1> to vector<8x32xi1>
    %514 = arith.select %513, %482, %440 : vector<8x32xi1>, vector<8x32xf32>
    %515 = vector.shape_cast %508 : vector<8x1xi1> to vector<8x1xi1>
    %516 = vector.broadcast %515 : vector<8x1xi1> to vector<8x32xi1>
    %517 = arith.select %516, %500, %443 : vector<8x32xi1>, vector<8x32xf32>
    %518 = vector.shape_cast %508 : vector<8x1xi1> to vector<8x1xi1>
    %519 = vector.broadcast %518 : vector<8x1xi1> to vector<8x32xi1>
    %520 = arith.select %519, %498, %446 : vector<8x32xi1>, vector<8x32xf32>
    %521 = arith.truncf %511 : vector<8x32xf32> to vector<8x32xbf16>
    %522 = arith.index_cast %454 : i32 to index
    %c0_102 = arith.constant 0 : index
    %523 = vector.load %arg12[%522, %c0_102] : memref<64x64xbf16, #tpu.memory_space<vmem>>, vector<8x32xbf16>
    tpu.vector_store %arg12[%522, %c0_102], %521 {strides = array<i32>} : memref<64x64xbf16, #tpu.memory_space<vmem>>, vector<8x32xbf16>,
    %524 = arith.truncf %517 : vector<8x32xf32> to vector<8x32xbf16>
    %525 = arith.index_cast %457 : i32 to index
    %c32_103 = arith.constant 32 : index
    %526 = vector.load %arg12[%525, %c32_103] : memref<64x64xbf16, #tpu.memory_space<vmem>>, vector<8x32xbf16>
    tpu.vector_store %arg12[%525, %c32_103], %524 {strides = array<i32>} : memref<64x64xbf16, #tpu.memory_space<vmem>>, vector<8x32xbf16>,
    %c7_i32_104 = arith.constant 7 : i32
    %c8_i32_105 = arith.constant 8 : i32
    %527 = arith.muli %c7_i32_104, %c8_i32_105 : i32
    %528 = tpu.assume_multiple %527, 8 : i32
    %c7_i32_106 = arith.constant 7 : i32
    %529 = arith.subi %c7_i32_106, %c7_i32_104 : i32
    %c8_i32_107 = arith.constant 8 : i32
    %530 = arith.muli %529, %c8_i32_107 : i32
    %531 = tpu.assume_multiple %530, 8 : i32
    %532 = tpu.concatenate %511, %517 in 1 : vector<8x32xf32>, vector<8x32xf32> -> vector<8x64xf32>
    %533 = arith.truncf %532 : vector<8x64xf32> to vector<8x64xbf16>
    %cst_108 = arith.constant dense<0.000000e+00> : vector<8x256xf32>
    %534 = tpu.matmul %533, %7, %cst_108 {dimension_numbers = #tpu.dot_dimension_numbers<[1], [0], [0], [1], [0, 0, 1, 1], [], []>} : vector<8x64xbf16>, vector<64x256xbf16>, vector<8x256xf32> -> vector<8x256xf32>
    %535 = arith.index_cast %528 : i32 to index
    %c0_109 = arith.constant 0 : index
    %536 = vector.load %arg11[%535, %c0_109] : memref<64x256xf32, #tpu.memory_space<vmem>>, vector<8x128xf32>
    %537 = vector.extract_strided_slice %534 {offsets = [0, 0], sizes = [8, 128], strides = [1, 1]} : vector<8x256xf32> to vector<8x128xf32>
    %538 = arith.addf %536, %537 : vector<8x128xf32>
    %539 = arith.index_cast %531 : i32 to index
    %c128_110 = arith.constant 128 : index
    %540 = vector.load %arg11[%539, %c128_110] : memref<64x256xf32, #tpu.memory_space<vmem>>, vector<8x128xf32>
    %541 = vector.extract_strided_slice %534 {offsets = [0, 128], sizes = [8, 128], strides = [1, 1]} : vector<8x256xf32> to vector<8x128xf32>
    %542 = arith.addf %540, %541 : vector<8x128xf32>
    %543 = vector.extract_strided_slice %538 {offsets = [0, 0], sizes = [8, 96], strides = [1, 1]} : vector<8x128xf32> to vector<8x96xf32>
    %544 = arith.negf %543 : vector<8x96xf32>
    %545 = math.exp %544 : vector<8x96xf32>
    %cst_111 = arith.constant 1.000000e+00 : f32
    %546 = vector.broadcast %cst_111 : f32 to vector<8x96xf32>
    %547 = arith.addf %546, %545 : vector<8x96xf32>
    %548 = arith.divf %546, %547 : vector<8x96xf32>
    %549 = vector.extract_strided_slice %548 {offsets = [0, 0], sizes = [8, 32], strides = [1, 1]} : vector<8x96xf32> to vector<8x32xf32>
    %550 = vector.extract_strided_slice %548 {offsets = [0, 32], sizes = [8, 32], strides = [1, 1]} : vector<8x96xf32> to vector<8x32xf32>
    %551 = vector.extract_strided_slice %548 {offsets = [0, 64], sizes = [8, 32], strides = [1, 1]} : vector<8x96xf32> to vector<8x32xf32>
    %552 = vector.extract_strided_slice %538 {offsets = [0, 96], sizes = [8, 32], strides = [1, 1]} : vector<8x128xf32> to vector<8x32xf32>
    %553 = math.tanh %552 : vector<8x32xf32>
    %554 = arith.mulf %550, %514 : vector<8x32xf32>
    %555 = arith.mulf %549, %553 : vector<8x32xf32>
    %556 = arith.addf %554, %555 : vector<8x32xf32>
    %557 = math.tanh %556 : vector<8x32xf32>
    %558 = arith.mulf %551, %557 : vector<8x32xf32>
    %559 = vector.extract_strided_slice %542 {offsets = [0, 0], sizes = [8, 96], strides = [1, 1]} : vector<8x128xf32> to vector<8x96xf32>
    %560 = arith.negf %559 : vector<8x96xf32>
    %561 = math.exp %560 : vector<8x96xf32>
    %cst_112 = arith.constant 1.000000e+00 : f32
    %562 = vector.broadcast %cst_112 : f32 to vector<8x96xf32>
    %563 = arith.addf %562, %561 : vector<8x96xf32>
    %564 = arith.divf %562, %563 : vector<8x96xf32>
    %565 = vector.extract_strided_slice %564 {offsets = [0, 0], sizes = [8, 32], strides = [1, 1]} : vector<8x96xf32> to vector<8x32xf32>
    %566 = vector.extract_strided_slice %564 {offsets = [0, 32], sizes = [8, 32], strides = [1, 1]} : vector<8x96xf32> to vector<8x32xf32>
    %567 = vector.extract_strided_slice %564 {offsets = [0, 64], sizes = [8, 32], strides = [1, 1]} : vector<8x96xf32> to vector<8x32xf32>
    %568 = vector.extract_strided_slice %542 {offsets = [0, 96], sizes = [8, 32], strides = [1, 1]} : vector<8x128xf32> to vector<8x32xf32>
    %569 = math.tanh %568 : vector<8x32xf32>
    %570 = arith.mulf %566, %520 : vector<8x32xf32>
    %571 = arith.mulf %565, %569 : vector<8x32xf32>
    %572 = arith.addf %570, %571 : vector<8x32xf32>
    %573 = math.tanh %572 : vector<8x32xf32>
    %574 = arith.mulf %567, %573 : vector<8x32xf32>
    %575 = arith.index_cast %528 : i32 to index
    %c0_113 = arith.constant 0 : index
    %576 = vector.load %arg1[%575, %c0_113] : memref<64x1xf32, #tpu.memory_space<vmem>>, vector<8x1xf32>
    %cst_114 = arith.constant 0.000000e+00 : f32
    %577 = vector.broadcast %cst_114 : f32 to vector<8x1xf32>
    %578 = arith.cmpf one, %576, %577 : vector<8x1xf32>
    %579 = arith.index_cast %531 : i32 to index
    %c0_115 = arith.constant 0 : index
    %580 = vector.load %arg1[%579, %c0_115] : memref<64x1xf32, #tpu.memory_space<vmem>>, vector<8x1xf32>
    %cst_116 = arith.constant 0.000000e+00 : f32
    %581 = vector.broadcast %cst_116 : f32 to vector<8x1xf32>
    %582 = arith.cmpf one, %580, %581 : vector<8x1xf32>
    %583 = vector.shape_cast %578 : vector<8x1xi1> to vector<8x1xi1>
    %584 = vector.broadcast %583 : vector<8x1xi1> to vector<8x32xi1>
    %585 = arith.select %584, %558, %511 : vector<8x32xi1>, vector<8x32xf32>
    %586 = vector.shape_cast %578 : vector<8x1xi1> to vector<8x1xi1>
    %587 = vector.broadcast %586 : vector<8x1xi1> to vector<8x32xi1>
    %588 = arith.select %587, %556, %514 : vector<8x32xi1>, vector<8x32xf32>
    %589 = vector.shape_cast %582 : vector<8x1xi1> to vector<8x1xi1>
    %590 = vector.broadcast %589 : vector<8x1xi1> to vector<8x32xi1>
    %591 = arith.select %590, %574, %517 : vector<8x32xi1>, vector<8x32xf32>
    %592 = vector.shape_cast %582 : vector<8x1xi1> to vector<8x1xi1>
    %593 = vector.broadcast %592 : vector<8x1xi1> to vector<8x32xi1>
    %594 = arith.select %593, %572, %520 : vector<8x32xi1>, vector<8x32xf32>
    %595 = arith.truncf %585 : vector<8x32xf32> to vector<8x32xbf16>
    %596 = arith.index_cast %528 : i32 to index
    %c0_117 = arith.constant 0 : index
    %597 = vector.load %arg12[%596, %c0_117] : memref<64x64xbf16, #tpu.memory_space<vmem>>, vector<8x32xbf16>
    tpu.vector_store %arg12[%596, %c0_117], %595 {strides = array<i32>} : memref<64x64xbf16, #tpu.memory_space<vmem>>, vector<8x32xbf16>,
    %598 = arith.truncf %591 : vector<8x32xf32> to vector<8x32xbf16>
    %599 = arith.index_cast %531 : i32 to index
    %c32_118 = arith.constant 32 : index
    %600 = vector.load %arg12[%599, %c32_118] : memref<64x64xbf16, #tpu.memory_space<vmem>>, vector<8x32xbf16>
    tpu.vector_store %arg12[%599, %c32_118], %598 {strides = array<i32>} : memref<64x64xbf16, #tpu.memory_space<vmem>>, vector<8x32xbf16>,
    %c8_i32_119 = arith.constant 8 : i32
    %c0_120 = arith.constant 0 : index
    %c0_121 = arith.constant 0 : index
    %601 = vector.load %arg12[%c0_120, %c0_121] : memref<64x64xbf16, #tpu.memory_space<vmem>>, vector<64x64xbf16>
    %c0_122 = arith.constant 0 : index
    %c0_123 = arith.constant 0 : index
    %602 = vector.load %arg5[%c0_122, %c0_123] : memref<64x256xbf16, #tpu.memory_space<vmem>>, vector<64x256xbf16>
    %cst_124 = arith.constant dense<0.000000e+00> : vector<64x256xf32>
    %603 = tpu.matmul %601, %602, %cst_124 {dimension_numbers = #tpu.dot_dimension_numbers<[1], [0], [0], [1], [0, 0, 1, 1], [], []>} : vector<64x64xbf16>, vector<64x256xbf16>, vector<64x256xf32> -> vector<64x256xf32>
    %c0_125 = arith.constant 0 : index
    %c0_126 = arith.constant 0 : index
    %604 = vector.load %arg7[%c0_125, %c0_126] : memref<1x256xf32, #tpu.memory_space<vmem>>, vector<1x256xf32>
    %605 = vector.broadcast %604 : vector<1x256xf32> to vector<64x256xf32>
    %606 = arith.addf %603, %605 : vector<64x256xf32>
    %c0_127 = arith.constant 0 : index
    %c0_128 = arith.constant 0 : index
    %607 = vector.load %arg11[%c0_127, %c0_128] : memref<64x256xf32, #tpu.memory_space<vmem>>, vector<64x256xf32>
    tpu.vector_store %arg11[%c0_127, %c0_128], %606 {strides = array<i32>} : memref<64x256xf32, #tpu.memory_space<vmem>>, vector<64x256xf32>,
    %c0_129 = arith.constant 0 : index
    %c0_130 = arith.constant 0 : index
    %608 = vector.load %arg6[%c0_129, %c0_130] : memref<64x256xbf16, #tpu.memory_space<vmem>>, vector<64x256xbf16>
    %cst_131 = arith.constant 0.000000e+00 : f32
    %609 = vector.broadcast %cst_131 : f32 to vector<8x32xf32>
    %c0_i32_132 = arith.constant 0 : i32
    %c8_i32_133 = arith.constant 8 : i32
    %610 = arith.muli %c0_i32_132, %c8_i32_133 : i32
    %611 = tpu.assume_multiple %610, 8 : i32
    %c7_i32_134 = arith.constant 7 : i32
    %612 = arith.subi %c7_i32_134, %c0_i32_132 : i32
    %c8_i32_135 = arith.constant 8 : i32
    %613 = arith.muli %612, %c8_i32_135 : i32
    %614 = tpu.assume_multiple %613, 8 : i32
    %615 = tpu.concatenate %609, %609 in 1 : vector<8x32xf32>, vector<8x32xf32> -> vector<8x64xf32>
    %616 = arith.truncf %615 : vector<8x64xf32> to vector<8x64xbf16>
    %cst_136 = arith.constant dense<0.000000e+00> : vector<8x256xf32>
    %617 = tpu.matmul %616, %608, %cst_136 {dimension_numbers = #tpu.dot_dimension_numbers<[1], [0], [0], [1], [0, 0, 1, 1], [], []>} : vector<8x64xbf16>, vector<64x256xbf16>, vector<8x256xf32> -> vector<8x256xf32>
    %618 = arith.index_cast %611 : i32 to index
    %c0_137 = arith.constant 0 : index
    %619 = vector.load %arg11[%618, %c0_137] : memref<64x256xf32, #tpu.memory_space<vmem>>, vector<8x128xf32>
    %620 = vector.extract_strided_slice %617 {offsets = [0, 0], sizes = [8, 128], strides = [1, 1]} : vector<8x256xf32> to vector<8x128xf32>
    %621 = arith.addf %619, %620 : vector<8x128xf32>
    %622 = arith.index_cast %614 : i32 to index
    %c128_138 = arith.constant 128 : index
    %623 = vector.load %arg11[%622, %c128_138] : memref<64x256xf32, #tpu.memory_space<vmem>>, vector<8x128xf32>
    %624 = vector.extract_strided_slice %617 {offsets = [0, 128], sizes = [8, 128], strides = [1, 1]} : vector<8x256xf32> to vector<8x128xf32>
    %625 = arith.addf %623, %624 : vector<8x128xf32>
    %626 = vector.extract_strided_slice %621 {offsets = [0, 0], sizes = [8, 96], strides = [1, 1]} : vector<8x128xf32> to vector<8x96xf32>
    %627 = arith.negf %626 : vector<8x96xf32>
    %628 = math.exp %627 : vector<8x96xf32>
    %cst_139 = arith.constant 1.000000e+00 : f32
    %629 = vector.broadcast %cst_139 : f32 to vector<8x96xf32>
    %630 = arith.addf %629, %628 : vector<8x96xf32>
    %631 = arith.divf %629, %630 : vector<8x96xf32>
    %632 = vector.extract_strided_slice %631 {offsets = [0, 0], sizes = [8, 32], strides = [1, 1]} : vector<8x96xf32> to vector<8x32xf32>
    %633 = vector.extract_strided_slice %631 {offsets = [0, 32], sizes = [8, 32], strides = [1, 1]} : vector<8x96xf32> to vector<8x32xf32>
    %634 = vector.extract_strided_slice %631 {offsets = [0, 64], sizes = [8, 32], strides = [1, 1]} : vector<8x96xf32> to vector<8x32xf32>
    %635 = vector.extract_strided_slice %621 {offsets = [0, 96], sizes = [8, 32], strides = [1, 1]} : vector<8x128xf32> to vector<8x32xf32>
    %636 = math.tanh %635 : vector<8x32xf32>
    %637 = arith.mulf %633, %609 : vector<8x32xf32>
    %638 = arith.mulf %632, %636 : vector<8x32xf32>
    %639 = arith.addf %637, %638 : vector<8x32xf32>
    %640 = math.tanh %639 : vector<8x32xf32>
    %641 = arith.mulf %634, %640 : vector<8x32xf32>
    %642 = vector.extract_strided_slice %625 {offsets = [0, 0], sizes = [8, 96], strides = [1, 1]} : vector<8x128xf32> to vector<8x96xf32>
    %643 = arith.negf %642 : vector<8x96xf32>
    %644 = math.exp %643 : vector<8x96xf32>
    %cst_140 = arith.constant 1.000000e+00 : f32
    %645 = vector.broadcast %cst_140 : f32 to vector<8x96xf32>
    %646 = arith.addf %645, %644 : vector<8x96xf32>
    %647 = arith.divf %645, %646 : vector<8x96xf32>
    %648 = vector.extract_strided_slice %647 {offsets = [0, 0], sizes = [8, 32], strides = [1, 1]} : vector<8x96xf32> to vector<8x32xf32>
    %649 = vector.extract_strided_slice %647 {offsets = [0, 32], sizes = [8, 32], strides = [1, 1]} : vector<8x96xf32> to vector<8x32xf32>
    %650 = vector.extract_strided_slice %647 {offsets = [0, 64], sizes = [8, 32], strides = [1, 1]} : vector<8x96xf32> to vector<8x32xf32>
    %651 = vector.extract_strided_slice %625 {offsets = [0, 96], sizes = [8, 32], strides = [1, 1]} : vector<8x128xf32> to vector<8x32xf32>
    %652 = math.tanh %651 : vector<8x32xf32>
    %653 = arith.mulf %649, %609 : vector<8x32xf32>
    %654 = arith.mulf %648, %652 : vector<8x32xf32>
    %655 = arith.addf %653, %654 : vector<8x32xf32>
    %656 = math.tanh %655 : vector<8x32xf32>
    %657 = arith.mulf %650, %656 : vector<8x32xf32>
    %658 = arith.index_cast %611 : i32 to index
    %c0_141 = arith.constant 0 : index
    %659 = vector.load %arg1[%658, %c0_141] : memref<64x1xf32, #tpu.memory_space<vmem>>, vector<8x1xf32>
    %cst_142 = arith.constant 0.000000e+00 : f32
    %660 = vector.broadcast %cst_142 : f32 to vector<8x1xf32>
    %661 = arith.cmpf one, %659, %660 : vector<8x1xf32>
    %662 = arith.index_cast %614 : i32 to index
    %c0_143 = arith.constant 0 : index
    %663 = vector.load %arg1[%662, %c0_143] : memref<64x1xf32, #tpu.memory_space<vmem>>, vector<8x1xf32>
    %cst_144 = arith.constant 0.000000e+00 : f32
    %664 = vector.broadcast %cst_144 : f32 to vector<8x1xf32>
    %665 = arith.cmpf one, %663, %664 : vector<8x1xf32>
    %666 = vector.shape_cast %661 : vector<8x1xi1> to vector<8x1xi1>
    %667 = vector.broadcast %666 : vector<8x1xi1> to vector<8x32xi1>
    %668 = arith.select %667, %641, %609 : vector<8x32xi1>, vector<8x32xf32>
    %669 = vector.shape_cast %661 : vector<8x1xi1> to vector<8x1xi1>
    %670 = vector.broadcast %669 : vector<8x1xi1> to vector<8x32xi1>
    %671 = arith.select %670, %639, %609 : vector<8x32xi1>, vector<8x32xf32>
    %672 = vector.shape_cast %665 : vector<8x1xi1> to vector<8x1xi1>
    %673 = vector.broadcast %672 : vector<8x1xi1> to vector<8x32xi1>
    %674 = arith.select %673, %657, %609 : vector<8x32xi1>, vector<8x32xf32>
    %675 = vector.shape_cast %665 : vector<8x1xi1> to vector<8x1xi1>
    %676 = vector.broadcast %675 : vector<8x1xi1> to vector<8x32xi1>
    %677 = arith.select %676, %655, %609 : vector<8x32xi1>, vector<8x32xf32>
    %c1_i32_145 = arith.constant 1 : i32
    %c8_i32_146 = arith.constant 8 : i32
    %678 = arith.muli %c1_i32_145, %c8_i32_146 : i32
    %679 = tpu.assume_multiple %678, 8 : i32
    %c7_i32_147 = arith.constant 7 : i32
    %680 = arith.subi %c7_i32_147, %c1_i32_145 : i32
    %c8_i32_148 = arith.constant 8 : i32
    %681 = arith.muli %680, %c8_i32_148 : i32
    %682 = tpu.assume_multiple %681, 8 : i32
    %683 = tpu.concatenate %668, %674 in 1 : vector<8x32xf32>, vector<8x32xf32> -> vector<8x64xf32>
    %684 = arith.truncf %683 : vector<8x64xf32> to vector<8x64xbf16>
    %cst_149 = arith.constant dense<0.000000e+00> : vector<8x256xf32>
    %685 = tpu.matmul %684, %608, %cst_149 {dimension_numbers = #tpu.dot_dimension_numbers<[1], [0], [0], [1], [0, 0, 1, 1], [], []>} : vector<8x64xbf16>, vector<64x256xbf16>, vector<8x256xf32> -> vector<8x256xf32>
    %686 = arith.index_cast %679 : i32 to index
    %c0_150 = arith.constant 0 : index
    %687 = vector.load %arg11[%686, %c0_150] : memref<64x256xf32, #tpu.memory_space<vmem>>, vector<8x128xf32>
    %688 = vector.extract_strided_slice %685 {offsets = [0, 0], sizes = [8, 128], strides = [1, 1]} : vector<8x256xf32> to vector<8x128xf32>
    %689 = arith.addf %687, %688 : vector<8x128xf32>
    %690 = arith.index_cast %682 : i32 to index
    %c128_151 = arith.constant 128 : index
    %691 = vector.load %arg11[%690, %c128_151] : memref<64x256xf32, #tpu.memory_space<vmem>>, vector<8x128xf32>
    %692 = vector.extract_strided_slice %685 {offsets = [0, 128], sizes = [8, 128], strides = [1, 1]} : vector<8x256xf32> to vector<8x128xf32>
    %693 = arith.addf %691, %692 : vector<8x128xf32>
    %694 = vector.extract_strided_slice %689 {offsets = [0, 0], sizes = [8, 96], strides = [1, 1]} : vector<8x128xf32> to vector<8x96xf32>
    %695 = arith.negf %694 : vector<8x96xf32>
    %696 = math.exp %695 : vector<8x96xf32>
    %cst_152 = arith.constant 1.000000e+00 : f32
    %697 = vector.broadcast %cst_152 : f32 to vector<8x96xf32>
    %698 = arith.addf %697, %696 : vector<8x96xf32>
    %699 = arith.divf %697, %698 : vector<8x96xf32>
    %700 = vector.extract_strided_slice %699 {offsets = [0, 0], sizes = [8, 32], strides = [1, 1]} : vector<8x96xf32> to vector<8x32xf32>
    %701 = vector.extract_strided_slice %699 {offsets = [0, 32], sizes = [8, 32], strides = [1, 1]} : vector<8x96xf32> to vector<8x32xf32>
    %702 = vector.extract_strided_slice %699 {offsets = [0, 64], sizes = [8, 32], strides = [1, 1]} : vector<8x96xf32> to vector<8x32xf32>
    %703 = vector.extract_strided_slice %689 {offsets = [0, 96], sizes = [8, 32], strides = [1, 1]} : vector<8x128xf32> to vector<8x32xf32>
    %704 = math.tanh %703 : vector<8x32xf32>
    %705 = arith.mulf %701, %671 : vector<8x32xf32>
    %706 = arith.mulf %700, %704 : vector<8x32xf32>
    %707 = arith.addf %705, %706 : vector<8x32xf32>
    %708 = math.tanh %707 : vector<8x32xf32>
    %709 = arith.mulf %702, %708 : vector<8x32xf32>
    %710 = vector.extract_strided_slice %693 {offsets = [0, 0], sizes = [8, 96], strides = [1, 1]} : vector<8x128xf32> to vector<8x96xf32>
    %711 = arith.negf %710 : vector<8x96xf32>
    %712 = math.exp %711 : vector<8x96xf32>
    %cst_153 = arith.constant 1.000000e+00 : f32
    %713 = vector.broadcast %cst_153 : f32 to vector<8x96xf32>
    %714 = arith.addf %713, %712 : vector<8x96xf32>
    %715 = arith.divf %713, %714 : vector<8x96xf32>
    %716 = vector.extract_strided_slice %715 {offsets = [0, 0], sizes = [8, 32], strides = [1, 1]} : vector<8x96xf32> to vector<8x32xf32>
    %717 = vector.extract_strided_slice %715 {offsets = [0, 32], sizes = [8, 32], strides = [1, 1]} : vector<8x96xf32> to vector<8x32xf32>
    %718 = vector.extract_strided_slice %715 {offsets = [0, 64], sizes = [8, 32], strides = [1, 1]} : vector<8x96xf32> to vector<8x32xf32>
    %719 = vector.extract_strided_slice %693 {offsets = [0, 96], sizes = [8, 32], strides = [1, 1]} : vector<8x128xf32> to vector<8x32xf32>
    %720 = math.tanh %719 : vector<8x32xf32>
    %721 = arith.mulf %717, %677 : vector<8x32xf32>
    %722 = arith.mulf %716, %720 : vector<8x32xf32>
    %723 = arith.addf %721, %722 : vector<8x32xf32>
    %724 = math.tanh %723 : vector<8x32xf32>
    %725 = arith.mulf %718, %724 : vector<8x32xf32>
    %726 = arith.index_cast %679 : i32 to index
    %c0_154 = arith.constant 0 : index
    %727 = vector.load %arg1[%726, %c0_154] : memref<64x1xf32, #tpu.memory_space<vmem>>, vector<8x1xf32>
    %cst_155 = arith.constant 0.000000e+00 : f32
    %728 = vector.broadcast %cst_155 : f32 to vector<8x1xf32>
    %729 = arith.cmpf one, %727, %728 : vector<8x1xf32>
    %730 = arith.index_cast %682 : i32 to index
    %c0_156 = arith.constant 0 : index
    %731 = vector.load %arg1[%730, %c0_156] : memref<64x1xf32, #tpu.memory_space<vmem>>, vector<8x1xf32>
    %cst_157 = arith.constant 0.000000e+00 : f32
    %732 = vector.broadcast %cst_157 : f32 to vector<8x1xf32>
    %733 = arith.cmpf one, %731, %732 : vector<8x1xf32>
    %734 = vector.shape_cast %729 : vector<8x1xi1> to vector<8x1xi1>
    %735 = vector.broadcast %734 : vector<8x1xi1> to vector<8x32xi1>
    %736 = arith.select %735, %709, %668 : vector<8x32xi1>, vector<8x32xf32>
    %737 = vector.shape_cast %729 : vector<8x1xi1> to vector<8x1xi1>
    %738 = vector.broadcast %737 : vector<8x1xi1> to vector<8x32xi1>
    %739 = arith.select %738, %707, %671 : vector<8x32xi1>, vector<8x32xf32>
    %740 = vector.shape_cast %733 : vector<8x1xi1> to vector<8x1xi1>
    %741 = vector.broadcast %740 : vector<8x1xi1> to vector<8x32xi1>
    %742 = arith.select %741, %725, %674 : vector<8x32xi1>, vector<8x32xf32>
    %743 = vector.shape_cast %733 : vector<8x1xi1> to vector<8x1xi1>
    %744 = vector.broadcast %743 : vector<8x1xi1> to vector<8x32xi1>
    %745 = arith.select %744, %723, %677 : vector<8x32xi1>, vector<8x32xf32>
    %c2_i32_158 = arith.constant 2 : i32
    %c8_i32_159 = arith.constant 8 : i32
    %746 = arith.muli %c2_i32_158, %c8_i32_159 : i32
    %747 = tpu.assume_multiple %746, 8 : i32
    %c7_i32_160 = arith.constant 7 : i32
    %748 = arith.subi %c7_i32_160, %c2_i32_158 : i32
    %c8_i32_161 = arith.constant 8 : i32
    %749 = arith.muli %748, %c8_i32_161 : i32
    %750 = tpu.assume_multiple %749, 8 : i32
    %751 = tpu.concatenate %736, %742 in 1 : vector<8x32xf32>, vector<8x32xf32> -> vector<8x64xf32>
    %752 = arith.truncf %751 : vector<8x64xf32> to vector<8x64xbf16>
    %cst_162 = arith.constant dense<0.000000e+00> : vector<8x256xf32>
    %753 = tpu.matmul %752, %608, %cst_162 {dimension_numbers = #tpu.dot_dimension_numbers<[1], [0], [0], [1], [0, 0, 1, 1], [], []>} : vector<8x64xbf16>, vector<64x256xbf16>, vector<8x256xf32> -> vector<8x256xf32>
    %754 = arith.index_cast %747 : i32 to index
    %c0_163 = arith.constant 0 : index
    %755 = vector.load %arg11[%754, %c0_163] : memref<64x256xf32, #tpu.memory_space<vmem>>, vector<8x128xf32>
    %756 = vector.extract_strided_slice %753 {offsets = [0, 0], sizes = [8, 128], strides = [1, 1]} : vector<8x256xf32> to vector<8x128xf32>
    %757 = arith.addf %755, %756 : vector<8x128xf32>
    %758 = arith.index_cast %750 : i32 to index
    %c128_164 = arith.constant 128 : index
    %759 = vector.load %arg11[%758, %c128_164] : memref<64x256xf32, #tpu.memory_space<vmem>>, vector<8x128xf32>
    %760 = vector.extract_strided_slice %753 {offsets = [0, 128], sizes = [8, 128], strides = [1, 1]} : vector<8x256xf32> to vector<8x128xf32>
    %761 = arith.addf %759, %760 : vector<8x128xf32>
    %762 = vector.extract_strided_slice %757 {offsets = [0, 0], sizes = [8, 96], strides = [1, 1]} : vector<8x128xf32> to vector<8x96xf32>
    %763 = arith.negf %762 : vector<8x96xf32>
    %764 = math.exp %763 : vector<8x96xf32>
    %cst_165 = arith.constant 1.000000e+00 : f32
    %765 = vector.broadcast %cst_165 : f32 to vector<8x96xf32>
    %766 = arith.addf %765, %764 : vector<8x96xf32>
    %767 = arith.divf %765, %766 : vector<8x96xf32>
    %768 = vector.extract_strided_slice %767 {offsets = [0, 0], sizes = [8, 32], strides = [1, 1]} : vector<8x96xf32> to vector<8x32xf32>
    %769 = vector.extract_strided_slice %767 {offsets = [0, 32], sizes = [8, 32], strides = [1, 1]} : vector<8x96xf32> to vector<8x32xf32>
    %770 = vector.extract_strided_slice %767 {offsets = [0, 64], sizes = [8, 32], strides = [1, 1]} : vector<8x96xf32> to vector<8x32xf32>
    %771 = vector.extract_strided_slice %757 {offsets = [0, 96], sizes = [8, 32], strides = [1, 1]} : vector<8x128xf32> to vector<8x32xf32>
    %772 = math.tanh %771 : vector<8x32xf32>
    %773 = arith.mulf %769, %739 : vector<8x32xf32>
    %774 = arith.mulf %768, %772 : vector<8x32xf32>
    %775 = arith.addf %773, %774 : vector<8x32xf32>
    %776 = math.tanh %775 : vector<8x32xf32>
    %777 = arith.mulf %770, %776 : vector<8x32xf32>
    %778 = vector.extract_strided_slice %761 {offsets = [0, 0], sizes = [8, 96], strides = [1, 1]} : vector<8x128xf32> to vector<8x96xf32>
    %779 = arith.negf %778 : vector<8x96xf32>
    %780 = math.exp %779 : vector<8x96xf32>
    %cst_166 = arith.constant 1.000000e+00 : f32
    %781 = vector.broadcast %cst_166 : f32 to vector<8x96xf32>
    %782 = arith.addf %781, %780 : vector<8x96xf32>
    %783 = arith.divf %781, %782 : vector<8x96xf32>
    %784 = vector.extract_strided_slice %783 {offsets = [0, 0], sizes = [8, 32], strides = [1, 1]} : vector<8x96xf32> to vector<8x32xf32>
    %785 = vector.extract_strided_slice %783 {offsets = [0, 32], sizes = [8, 32], strides = [1, 1]} : vector<8x96xf32> to vector<8x32xf32>
    %786 = vector.extract_strided_slice %783 {offsets = [0, 64], sizes = [8, 32], strides = [1, 1]} : vector<8x96xf32> to vector<8x32xf32>
    %787 = vector.extract_strided_slice %761 {offsets = [0, 96], sizes = [8, 32], strides = [1, 1]} : vector<8x128xf32> to vector<8x32xf32>
    %788 = math.tanh %787 : vector<8x32xf32>
    %789 = arith.mulf %785, %745 : vector<8x32xf32>
    %790 = arith.mulf %784, %788 : vector<8x32xf32>
    %791 = arith.addf %789, %790 : vector<8x32xf32>
    %792 = math.tanh %791 : vector<8x32xf32>
    %793 = arith.mulf %786, %792 : vector<8x32xf32>
    %794 = arith.index_cast %747 : i32 to index
    %c0_167 = arith.constant 0 : index
    %795 = vector.load %arg1[%794, %c0_167] : memref<64x1xf32, #tpu.memory_space<vmem>>, vector<8x1xf32>
    %cst_168 = arith.constant 0.000000e+00 : f32
    %796 = vector.broadcast %cst_168 : f32 to vector<8x1xf32>
    %797 = arith.cmpf one, %795, %796 : vector<8x1xf32>
    %798 = arith.index_cast %750 : i32 to index
    %c0_169 = arith.constant 0 : index
    %799 = vector.load %arg1[%798, %c0_169] : memref<64x1xf32, #tpu.memory_space<vmem>>, vector<8x1xf32>
    %cst_170 = arith.constant 0.000000e+00 : f32
    %800 = vector.broadcast %cst_170 : f32 to vector<8x1xf32>
    %801 = arith.cmpf one, %799, %800 : vector<8x1xf32>
    %802 = vector.shape_cast %797 : vector<8x1xi1> to vector<8x1xi1>
    %803 = vector.broadcast %802 : vector<8x1xi1> to vector<8x32xi1>
    %804 = arith.select %803, %777, %736 : vector<8x32xi1>, vector<8x32xf32>
    %805 = vector.shape_cast %797 : vector<8x1xi1> to vector<8x1xi1>
    %806 = vector.broadcast %805 : vector<8x1xi1> to vector<8x32xi1>
    %807 = arith.select %806, %775, %739 : vector<8x32xi1>, vector<8x32xf32>
    %808 = vector.shape_cast %801 : vector<8x1xi1> to vector<8x1xi1>
    %809 = vector.broadcast %808 : vector<8x1xi1> to vector<8x32xi1>
    %810 = arith.select %809, %793, %742 : vector<8x32xi1>, vector<8x32xf32>
    %811 = vector.shape_cast %801 : vector<8x1xi1> to vector<8x1xi1>
    %812 = vector.broadcast %811 : vector<8x1xi1> to vector<8x32xi1>
    %813 = arith.select %812, %791, %745 : vector<8x32xi1>, vector<8x32xf32>
    %c3_i32_171 = arith.constant 3 : i32
    %c8_i32_172 = arith.constant 8 : i32
    %814 = arith.muli %c3_i32_171, %c8_i32_172 : i32
    %815 = tpu.assume_multiple %814, 8 : i32
    %c7_i32_173 = arith.constant 7 : i32
    %816 = arith.subi %c7_i32_173, %c3_i32_171 : i32
    %c8_i32_174 = arith.constant 8 : i32
    %817 = arith.muli %816, %c8_i32_174 : i32
    %818 = tpu.assume_multiple %817, 8 : i32
    %819 = tpu.concatenate %804, %810 in 1 : vector<8x32xf32>, vector<8x32xf32> -> vector<8x64xf32>
    %820 = arith.truncf %819 : vector<8x64xf32> to vector<8x64xbf16>
    %cst_175 = arith.constant dense<0.000000e+00> : vector<8x256xf32>
    %821 = tpu.matmul %820, %608, %cst_175 {dimension_numbers = #tpu.dot_dimension_numbers<[1], [0], [0], [1], [0, 0, 1, 1], [], []>} : vector<8x64xbf16>, vector<64x256xbf16>, vector<8x256xf32> -> vector<8x256xf32>
    %822 = arith.index_cast %815 : i32 to index
    %c0_176 = arith.constant 0 : index
    %823 = vector.load %arg11[%822, %c0_176] : memref<64x256xf32, #tpu.memory_space<vmem>>, vector<8x128xf32>
    %824 = vector.extract_strided_slice %821 {offsets = [0, 0], sizes = [8, 128], strides = [1, 1]} : vector<8x256xf32> to vector<8x128xf32>
    %825 = arith.addf %823, %824 : vector<8x128xf32>
    %826 = arith.index_cast %818 : i32 to index
    %c128_177 = arith.constant 128 : index
    %827 = vector.load %arg11[%826, %c128_177] : memref<64x256xf32, #tpu.memory_space<vmem>>, vector<8x128xf32>
    %828 = vector.extract_strided_slice %821 {offsets = [0, 128], sizes = [8, 128], strides = [1, 1]} : vector<8x256xf32> to vector<8x128xf32>
    %829 = arith.addf %827, %828 : vector<8x128xf32>
    %830 = vector.extract_strided_slice %825 {offsets = [0, 0], sizes = [8, 96], strides = [1, 1]} : vector<8x128xf32> to vector<8x96xf32>
    %831 = arith.negf %830 : vector<8x96xf32>
    %832 = math.exp %831 : vector<8x96xf32>
    %cst_178 = arith.constant 1.000000e+00 : f32
    %833 = vector.broadcast %cst_178 : f32 to vector<8x96xf32>
    %834 = arith.addf %833, %832 : vector<8x96xf32>
    %835 = arith.divf %833, %834 : vector<8x96xf32>
    %836 = vector.extract_strided_slice %835 {offsets = [0, 0], sizes = [8, 32], strides = [1, 1]} : vector<8x96xf32> to vector<8x32xf32>
    %837 = vector.extract_strided_slice %835 {offsets = [0, 32], sizes = [8, 32], strides = [1, 1]} : vector<8x96xf32> to vector<8x32xf32>
    %838 = vector.extract_strided_slice %835 {offsets = [0, 64], sizes = [8, 32], strides = [1, 1]} : vector<8x96xf32> to vector<8x32xf32>
    %839 = vector.extract_strided_slice %825 {offsets = [0, 96], sizes = [8, 32], strides = [1, 1]} : vector<8x128xf32> to vector<8x32xf32>
    %840 = math.tanh %839 : vector<8x32xf32>
    %841 = arith.mulf %837, %807 : vector<8x32xf32>
    %842 = arith.mulf %836, %840 : vector<8x32xf32>
    %843 = arith.addf %841, %842 : vector<8x32xf32>
    %844 = math.tanh %843 : vector<8x32xf32>
    %845 = arith.mulf %838, %844 : vector<8x32xf32>
    %846 = vector.extract_strided_slice %829 {offsets = [0, 0], sizes = [8, 96], strides = [1, 1]} : vector<8x128xf32> to vector<8x96xf32>
    %847 = arith.negf %846 : vector<8x96xf32>
    %848 = math.exp %847 : vector<8x96xf32>
    %cst_179 = arith.constant 1.000000e+00 : f32
    %849 = vector.broadcast %cst_179 : f32 to vector<8x96xf32>
    %850 = arith.addf %849, %848 : vector<8x96xf32>
    %851 = arith.divf %849, %850 : vector<8x96xf32>
    %852 = vector.extract_strided_slice %851 {offsets = [0, 0], sizes = [8, 32], strides = [1, 1]} : vector<8x96xf32> to vector<8x32xf32>
    %853 = vector.extract_strided_slice %851 {offsets = [0, 32], sizes = [8, 32], strides = [1, 1]} : vector<8x96xf32> to vector<8x32xf32>
    %854 = vector.extract_strided_slice %851 {offsets = [0, 64], sizes = [8, 32], strides = [1, 1]} : vector<8x96xf32> to vector<8x32xf32>
    %855 = vector.extract_strided_slice %829 {offsets = [0, 96], sizes = [8, 32], strides = [1, 1]} : vector<8x128xf32> to vector<8x32xf32>
    %856 = math.tanh %855 : vector<8x32xf32>
    %857 = arith.mulf %853, %813 : vector<8x32xf32>
    %858 = arith.mulf %852, %856 : vector<8x32xf32>
    %859 = arith.addf %857, %858 : vector<8x32xf32>
    %860 = math.tanh %859 : vector<8x32xf32>
    %861 = arith.mulf %854, %860 : vector<8x32xf32>
    %862 = arith.index_cast %815 : i32 to index
    %c0_180 = arith.constant 0 : index
    %863 = vector.load %arg1[%862, %c0_180] : memref<64x1xf32, #tpu.memory_space<vmem>>, vector<8x1xf32>
    %cst_181 = arith.constant 0.000000e+00 : f32
    %864 = vector.broadcast %cst_181 : f32 to vector<8x1xf32>
    %865 = arith.cmpf one, %863, %864 : vector<8x1xf32>
    %866 = arith.index_cast %818 : i32 to index
    %c0_182 = arith.constant 0 : index
    %867 = vector.load %arg1[%866, %c0_182] : memref<64x1xf32, #tpu.memory_space<vmem>>, vector<8x1xf32>
    %cst_183 = arith.constant 0.000000e+00 : f32
    %868 = vector.broadcast %cst_183 : f32 to vector<8x1xf32>
    %869 = arith.cmpf one, %867, %868 : vector<8x1xf32>
    %870 = vector.shape_cast %865 : vector<8x1xi1> to vector<8x1xi1>
    %871 = vector.broadcast %870 : vector<8x1xi1> to vector<8x32xi1>
    %872 = arith.select %871, %845, %804 : vector<8x32xi1>, vector<8x32xf32>
    %873 = vector.shape_cast %865 : vector<8x1xi1> to vector<8x1xi1>
    %874 = vector.broadcast %873 : vector<8x1xi1> to vector<8x32xi1>
    %875 = arith.select %874, %843, %807 : vector<8x32xi1>, vector<8x32xf32>
    %876 = vector.shape_cast %869 : vector<8x1xi1> to vector<8x1xi1>
    %877 = vector.broadcast %876 : vector<8x1xi1> to vector<8x32xi1>
    %878 = arith.select %877, %861, %810 : vector<8x32xi1>, vector<8x32xf32>
    %879 = vector.shape_cast %869 : vector<8x1xi1> to vector<8x1xi1>
    %880 = vector.broadcast %879 : vector<8x1xi1> to vector<8x32xi1>
    %881 = arith.select %880, %859, %813 : vector<8x32xi1>, vector<8x32xf32>
    %c4_i32_184 = arith.constant 4 : i32
    %c8_i32_185 = arith.constant 8 : i32
    %882 = arith.muli %c4_i32_184, %c8_i32_185 : i32
    %883 = tpu.assume_multiple %882, 8 : i32
    %c7_i32_186 = arith.constant 7 : i32
    %884 = arith.subi %c7_i32_186, %c4_i32_184 : i32
    %c8_i32_187 = arith.constant 8 : i32
    %885 = arith.muli %884, %c8_i32_187 : i32
    %886 = tpu.assume_multiple %885, 8 : i32
    %887 = tpu.concatenate %872, %878 in 1 : vector<8x32xf32>, vector<8x32xf32> -> vector<8x64xf32>
    %888 = arith.truncf %887 : vector<8x64xf32> to vector<8x64xbf16>
    %cst_188 = arith.constant dense<0.000000e+00> : vector<8x256xf32>
    %889 = tpu.matmul %888, %608, %cst_188 {dimension_numbers = #tpu.dot_dimension_numbers<[1], [0], [0], [1], [0, 0, 1, 1], [], []>} : vector<8x64xbf16>, vector<64x256xbf16>, vector<8x256xf32> -> vector<8x256xf32>
    %890 = arith.index_cast %883 : i32 to index
    %c0_189 = arith.constant 0 : index
    %891 = vector.load %arg11[%890, %c0_189] : memref<64x256xf32, #tpu.memory_space<vmem>>, vector<8x128xf32>
    %892 = vector.extract_strided_slice %889 {offsets = [0, 0], sizes = [8, 128], strides = [1, 1]} : vector<8x256xf32> to vector<8x128xf32>
    %893 = arith.addf %891, %892 : vector<8x128xf32>
    %894 = arith.index_cast %886 : i32 to index
    %c128_190 = arith.constant 128 : index
    %895 = vector.load %arg11[%894, %c128_190] : memref<64x256xf32, #tpu.memory_space<vmem>>, vector<8x128xf32>
    %896 = vector.extract_strided_slice %889 {offsets = [0, 128], sizes = [8, 128], strides = [1, 1]} : vector<8x256xf32> to vector<8x128xf32>
    %897 = arith.addf %895, %896 : vector<8x128xf32>
    %898 = vector.extract_strided_slice %893 {offsets = [0, 0], sizes = [8, 96], strides = [1, 1]} : vector<8x128xf32> to vector<8x96xf32>
    %899 = arith.negf %898 : vector<8x96xf32>
    %900 = math.exp %899 : vector<8x96xf32>
    %cst_191 = arith.constant 1.000000e+00 : f32
    %901 = vector.broadcast %cst_191 : f32 to vector<8x96xf32>
    %902 = arith.addf %901, %900 : vector<8x96xf32>
    %903 = arith.divf %901, %902 : vector<8x96xf32>
    %904 = vector.extract_strided_slice %903 {offsets = [0, 0], sizes = [8, 32], strides = [1, 1]} : vector<8x96xf32> to vector<8x32xf32>
    %905 = vector.extract_strided_slice %903 {offsets = [0, 32], sizes = [8, 32], strides = [1, 1]} : vector<8x96xf32> to vector<8x32xf32>
    %906 = vector.extract_strided_slice %903 {offsets = [0, 64], sizes = [8, 32], strides = [1, 1]} : vector<8x96xf32> to vector<8x32xf32>
    %907 = vector.extract_strided_slice %893 {offsets = [0, 96], sizes = [8, 32], strides = [1, 1]} : vector<8x128xf32> to vector<8x32xf32>
    %908 = math.tanh %907 : vector<8x32xf32>
    %909 = arith.mulf %905, %875 : vector<8x32xf32>
    %910 = arith.mulf %904, %908 : vector<8x32xf32>
    %911 = arith.addf %909, %910 : vector<8x32xf32>
    %912 = math.tanh %911 : vector<8x32xf32>
    %913 = arith.mulf %906, %912 : vector<8x32xf32>
    %914 = vector.extract_strided_slice %897 {offsets = [0, 0], sizes = [8, 96], strides = [1, 1]} : vector<8x128xf32> to vector<8x96xf32>
    %915 = arith.negf %914 : vector<8x96xf32>
    %916 = math.exp %915 : vector<8x96xf32>
    %cst_192 = arith.constant 1.000000e+00 : f32
    %917 = vector.broadcast %cst_192 : f32 to vector<8x96xf32>
    %918 = arith.addf %917, %916 : vector<8x96xf32>
    %919 = arith.divf %917, %918 : vector<8x96xf32>
    %920 = vector.extract_strided_slice %919 {offsets = [0, 0], sizes = [8, 32], strides = [1, 1]} : vector<8x96xf32> to vector<8x32xf32>
    %921 = vector.extract_strided_slice %919 {offsets = [0, 32], sizes = [8, 32], strides = [1, 1]} : vector<8x96xf32> to vector<8x32xf32>
    %922 = vector.extract_strided_slice %919 {offsets = [0, 64], sizes = [8, 32], strides = [1, 1]} : vector<8x96xf32> to vector<8x32xf32>
    %923 = vector.extract_strided_slice %897 {offsets = [0, 96], sizes = [8, 32], strides = [1, 1]} : vector<8x128xf32> to vector<8x32xf32>
    %924 = math.tanh %923 : vector<8x32xf32>
    %925 = arith.mulf %921, %881 : vector<8x32xf32>
    %926 = arith.mulf %920, %924 : vector<8x32xf32>
    %927 = arith.addf %925, %926 : vector<8x32xf32>
    %928 = math.tanh %927 : vector<8x32xf32>
    %929 = arith.mulf %922, %928 : vector<8x32xf32>
    %930 = arith.index_cast %883 : i32 to index
    %c0_193 = arith.constant 0 : index
    %931 = vector.load %arg1[%930, %c0_193] : memref<64x1xf32, #tpu.memory_space<vmem>>, vector<8x1xf32>
    %cst_194 = arith.constant 0.000000e+00 : f32
    %932 = vector.broadcast %cst_194 : f32 to vector<8x1xf32>
    %933 = arith.cmpf one, %931, %932 : vector<8x1xf32>
    %934 = arith.index_cast %886 : i32 to index
    %c0_195 = arith.constant 0 : index
    %935 = vector.load %arg1[%934, %c0_195] : memref<64x1xf32, #tpu.memory_space<vmem>>, vector<8x1xf32>
    %cst_196 = arith.constant 0.000000e+00 : f32
    %936 = vector.broadcast %cst_196 : f32 to vector<8x1xf32>
    %937 = arith.cmpf one, %935, %936 : vector<8x1xf32>
    %938 = vector.shape_cast %933 : vector<8x1xi1> to vector<8x1xi1>
    %939 = vector.broadcast %938 : vector<8x1xi1> to vector<8x32xi1>
    %940 = arith.select %939, %913, %872 : vector<8x32xi1>, vector<8x32xf32>
    %941 = vector.shape_cast %933 : vector<8x1xi1> to vector<8x1xi1>
    %942 = vector.broadcast %941 : vector<8x1xi1> to vector<8x32xi1>
    %943 = arith.select %942, %911, %875 : vector<8x32xi1>, vector<8x32xf32>
    %944 = vector.shape_cast %937 : vector<8x1xi1> to vector<8x1xi1>
    %945 = vector.broadcast %944 : vector<8x1xi1> to vector<8x32xi1>
    %946 = arith.select %945, %929, %878 : vector<8x32xi1>, vector<8x32xf32>
    %947 = vector.shape_cast %937 : vector<8x1xi1> to vector<8x1xi1>
    %948 = vector.broadcast %947 : vector<8x1xi1> to vector<8x32xi1>
    %949 = arith.select %948, %927, %881 : vector<8x32xi1>, vector<8x32xf32>
    %c5_i32_197 = arith.constant 5 : i32
    %c8_i32_198 = arith.constant 8 : i32
    %950 = arith.muli %c5_i32_197, %c8_i32_198 : i32
    %951 = tpu.assume_multiple %950, 8 : i32
    %c7_i32_199 = arith.constant 7 : i32
    %952 = arith.subi %c7_i32_199, %c5_i32_197 : i32
    %c8_i32_200 = arith.constant 8 : i32
    %953 = arith.muli %952, %c8_i32_200 : i32
    %954 = tpu.assume_multiple %953, 8 : i32
    %955 = tpu.concatenate %940, %946 in 1 : vector<8x32xf32>, vector<8x32xf32> -> vector<8x64xf32>
    %956 = arith.truncf %955 : vector<8x64xf32> to vector<8x64xbf16>
    %cst_201 = arith.constant dense<0.000000e+00> : vector<8x256xf32>
    %957 = tpu.matmul %956, %608, %cst_201 {dimension_numbers = #tpu.dot_dimension_numbers<[1], [0], [0], [1], [0, 0, 1, 1], [], []>} : vector<8x64xbf16>, vector<64x256xbf16>, vector<8x256xf32> -> vector<8x256xf32>
    %958 = arith.index_cast %951 : i32 to index
    %c0_202 = arith.constant 0 : index
    %959 = vector.load %arg11[%958, %c0_202] : memref<64x256xf32, #tpu.memory_space<vmem>>, vector<8x128xf32>
    %960 = vector.extract_strided_slice %957 {offsets = [0, 0], sizes = [8, 128], strides = [1, 1]} : vector<8x256xf32> to vector<8x128xf32>
    %961 = arith.addf %959, %960 : vector<8x128xf32>
    %962 = arith.index_cast %954 : i32 to index
    %c128_203 = arith.constant 128 : index
    %963 = vector.load %arg11[%962, %c128_203] : memref<64x256xf32, #tpu.memory_space<vmem>>, vector<8x128xf32>
    %964 = vector.extract_strided_slice %957 {offsets = [0, 128], sizes = [8, 128], strides = [1, 1]} : vector<8x256xf32> to vector<8x128xf32>
    %965 = arith.addf %963, %964 : vector<8x128xf32>
    %966 = vector.extract_strided_slice %961 {offsets = [0, 0], sizes = [8, 96], strides = [1, 1]} : vector<8x128xf32> to vector<8x96xf32>
    %967 = arith.negf %966 : vector<8x96xf32>
    %968 = math.exp %967 : vector<8x96xf32>
    %cst_204 = arith.constant 1.000000e+00 : f32
    %969 = vector.broadcast %cst_204 : f32 to vector<8x96xf32>
    %970 = arith.addf %969, %968 : vector<8x96xf32>
    %971 = arith.divf %969, %970 : vector<8x96xf32>
    %972 = vector.extract_strided_slice %971 {offsets = [0, 0], sizes = [8, 32], strides = [1, 1]} : vector<8x96xf32> to vector<8x32xf32>
    %973 = vector.extract_strided_slice %971 {offsets = [0, 32], sizes = [8, 32], strides = [1, 1]} : vector<8x96xf32> to vector<8x32xf32>
    %974 = vector.extract_strided_slice %971 {offsets = [0, 64], sizes = [8, 32], strides = [1, 1]} : vector<8x96xf32> to vector<8x32xf32>
    %975 = vector.extract_strided_slice %961 {offsets = [0, 96], sizes = [8, 32], strides = [1, 1]} : vector<8x128xf32> to vector<8x32xf32>
    %976 = math.tanh %975 : vector<8x32xf32>
    %977 = arith.mulf %973, %943 : vector<8x32xf32>
    %978 = arith.mulf %972, %976 : vector<8x32xf32>
    %979 = arith.addf %977, %978 : vector<8x32xf32>
    %980 = math.tanh %979 : vector<8x32xf32>
    %981 = arith.mulf %974, %980 : vector<8x32xf32>
    %982 = vector.extract_strided_slice %965 {offsets = [0, 0], sizes = [8, 96], strides = [1, 1]} : vector<8x128xf32> to vector<8x96xf32>
    %983 = arith.negf %982 : vector<8x96xf32>
    %984 = math.exp %983 : vector<8x96xf32>
    %cst_205 = arith.constant 1.000000e+00 : f32
    %985 = vector.broadcast %cst_205 : f32 to vector<8x96xf32>
    %986 = arith.addf %985, %984 : vector<8x96xf32>
    %987 = arith.divf %985, %986 : vector<8x96xf32>
    %988 = vector.extract_strided_slice %987 {offsets = [0, 0], sizes = [8, 32], strides = [1, 1]} : vector<8x96xf32> to vector<8x32xf32>
    %989 = vector.extract_strided_slice %987 {offsets = [0, 32], sizes = [8, 32], strides = [1, 1]} : vector<8x96xf32> to vector<8x32xf32>
    %990 = vector.extract_strided_slice %987 {offsets = [0, 64], sizes = [8, 32], strides = [1, 1]} : vector<8x96xf32> to vector<8x32xf32>
    %991 = vector.extract_strided_slice %965 {offsets = [0, 96], sizes = [8, 32], strides = [1, 1]} : vector<8x128xf32> to vector<8x32xf32>
    %992 = math.tanh %991 : vector<8x32xf32>
    %993 = arith.mulf %989, %949 : vector<8x32xf32>
    %994 = arith.mulf %988, %992 : vector<8x32xf32>
    %995 = arith.addf %993, %994 : vector<8x32xf32>
    %996 = math.tanh %995 : vector<8x32xf32>
    %997 = arith.mulf %990, %996 : vector<8x32xf32>
    %998 = arith.index_cast %951 : i32 to index
    %c0_206 = arith.constant 0 : index
    %999 = vector.load %arg1[%998, %c0_206] : memref<64x1xf32, #tpu.memory_space<vmem>>, vector<8x1xf32>
    %cst_207 = arith.constant 0.000000e+00 : f32
    %1000 = vector.broadcast %cst_207 : f32 to vector<8x1xf32>
    %1001 = arith.cmpf one, %999, %1000 : vector<8x1xf32>
    %1002 = arith.index_cast %954 : i32 to index
    %c0_208 = arith.constant 0 : index
    %1003 = vector.load %arg1[%1002, %c0_208] : memref<64x1xf32, #tpu.memory_space<vmem>>, vector<8x1xf32>
    %cst_209 = arith.constant 0.000000e+00 : f32
    %1004 = vector.broadcast %cst_209 : f32 to vector<8x1xf32>
    %1005 = arith.cmpf one, %1003, %1004 : vector<8x1xf32>
    %1006 = vector.shape_cast %1001 : vector<8x1xi1> to vector<8x1xi1>
    %1007 = vector.broadcast %1006 : vector<8x1xi1> to vector<8x32xi1>
    %1008 = arith.select %1007, %981, %940 : vector<8x32xi1>, vector<8x32xf32>
    %1009 = vector.shape_cast %1001 : vector<8x1xi1> to vector<8x1xi1>
    %1010 = vector.broadcast %1009 : vector<8x1xi1> to vector<8x32xi1>
    %1011 = arith.select %1010, %979, %943 : vector<8x32xi1>, vector<8x32xf32>
    %1012 = vector.shape_cast %1005 : vector<8x1xi1> to vector<8x1xi1>
    %1013 = vector.broadcast %1012 : vector<8x1xi1> to vector<8x32xi1>
    %1014 = arith.select %1013, %997, %946 : vector<8x32xi1>, vector<8x32xf32>
    %1015 = vector.shape_cast %1005 : vector<8x1xi1> to vector<8x1xi1>
    %1016 = vector.broadcast %1015 : vector<8x1xi1> to vector<8x32xi1>
    %1017 = arith.select %1016, %995, %949 : vector<8x32xi1>, vector<8x32xf32>
    %c6_i32_210 = arith.constant 6 : i32
    %c8_i32_211 = arith.constant 8 : i32
    %1018 = arith.muli %c6_i32_210, %c8_i32_211 : i32
    %1019 = tpu.assume_multiple %1018, 8 : i32
    %c7_i32_212 = arith.constant 7 : i32
    %1020 = arith.subi %c7_i32_212, %c6_i32_210 : i32
    %c8_i32_213 = arith.constant 8 : i32
    %1021 = arith.muli %1020, %c8_i32_213 : i32
    %1022 = tpu.assume_multiple %1021, 8 : i32
    %1023 = tpu.concatenate %1008, %1014 in 1 : vector<8x32xf32>, vector<8x32xf32> -> vector<8x64xf32>
    %1024 = arith.truncf %1023 : vector<8x64xf32> to vector<8x64xbf16>
    %cst_214 = arith.constant dense<0.000000e+00> : vector<8x256xf32>
    %1025 = tpu.matmul %1024, %608, %cst_214 {dimension_numbers = #tpu.dot_dimension_numbers<[1], [0], [0], [1], [0, 0, 1, 1], [], []>} : vector<8x64xbf16>, vector<64x256xbf16>, vector<8x256xf32> -> vector<8x256xf32>
    %1026 = arith.index_cast %1019 : i32 to index
    %c0_215 = arith.constant 0 : index
    %1027 = vector.load %arg11[%1026, %c0_215] : memref<64x256xf32, #tpu.memory_space<vmem>>, vector<8x128xf32>
    %1028 = vector.extract_strided_slice %1025 {offsets = [0, 0], sizes = [8, 128], strides = [1, 1]} : vector<8x256xf32> to vector<8x128xf32>
    %1029 = arith.addf %1027, %1028 : vector<8x128xf32>
    %1030 = arith.index_cast %1022 : i32 to index
    %c128_216 = arith.constant 128 : index
    %1031 = vector.load %arg11[%1030, %c128_216] : memref<64x256xf32, #tpu.memory_space<vmem>>, vector<8x128xf32>
    %1032 = vector.extract_strided_slice %1025 {offsets = [0, 128], sizes = [8, 128], strides = [1, 1]} : vector<8x256xf32> to vector<8x128xf32>
    %1033 = arith.addf %1031, %1032 : vector<8x128xf32>
    %1034 = vector.extract_strided_slice %1029 {offsets = [0, 0], sizes = [8, 96], strides = [1, 1]} : vector<8x128xf32> to vector<8x96xf32>
    %1035 = arith.negf %1034 : vector<8x96xf32>
    %1036 = math.exp %1035 : vector<8x96xf32>
    %cst_217 = arith.constant 1.000000e+00 : f32
    %1037 = vector.broadcast %cst_217 : f32 to vector<8x96xf32>
    %1038 = arith.addf %1037, %1036 : vector<8x96xf32>
    %1039 = arith.divf %1037, %1038 : vector<8x96xf32>
    %1040 = vector.extract_strided_slice %1039 {offsets = [0, 0], sizes = [8, 32], strides = [1, 1]} : vector<8x96xf32> to vector<8x32xf32>
    %1041 = vector.extract_strided_slice %1039 {offsets = [0, 32], sizes = [8, 32], strides = [1, 1]} : vector<8x96xf32> to vector<8x32xf32>
    %1042 = vector.extract_strided_slice %1039 {offsets = [0, 64], sizes = [8, 32], strides = [1, 1]} : vector<8x96xf32> to vector<8x32xf32>
    %1043 = vector.extract_strided_slice %1029 {offsets = [0, 96], sizes = [8, 32], strides = [1, 1]} : vector<8x128xf32> to vector<8x32xf32>
    %1044 = math.tanh %1043 : vector<8x32xf32>
    %1045 = arith.mulf %1041, %1011 : vector<8x32xf32>
    %1046 = arith.mulf %1040, %1044 : vector<8x32xf32>
    %1047 = arith.addf %1045, %1046 : vector<8x32xf32>
    %1048 = math.tanh %1047 : vector<8x32xf32>
    %1049 = arith.mulf %1042, %1048 : vector<8x32xf32>
    %1050 = vector.extract_strided_slice %1033 {offsets = [0, 0], sizes = [8, 96], strides = [1, 1]} : vector<8x128xf32> to vector<8x96xf32>
    %1051 = arith.negf %1050 : vector<8x96xf32>
    %1052 = math.exp %1051 : vector<8x96xf32>
    %cst_218 = arith.constant 1.000000e+00 : f32
    %1053 = vector.broadcast %cst_218 : f32 to vector<8x96xf32>
    %1054 = arith.addf %1053, %1052 : vector<8x96xf32>
    %1055 = arith.divf %1053, %1054 : vector<8x96xf32>
    %1056 = vector.extract_strided_slice %1055 {offsets = [0, 0], sizes = [8, 32], strides = [1, 1]} : vector<8x96xf32> to vector<8x32xf32>
    %1057 = vector.extract_strided_slice %1055 {offsets = [0, 32], sizes = [8, 32], strides = [1, 1]} : vector<8x96xf32> to vector<8x32xf32>
    %1058 = vector.extract_strided_slice %1055 {offsets = [0, 64], sizes = [8, 32], strides = [1, 1]} : vector<8x96xf32> to vector<8x32xf32>
    %1059 = vector.extract_strided_slice %1033 {offsets = [0, 96], sizes = [8, 32], strides = [1, 1]} : vector<8x128xf32> to vector<8x32xf32>
    %1060 = math.tanh %1059 : vector<8x32xf32>
    %1061 = arith.mulf %1057, %1017 : vector<8x32xf32>
    %1062 = arith.mulf %1056, %1060 : vector<8x32xf32>
    %1063 = arith.addf %1061, %1062 : vector<8x32xf32>
    %1064 = math.tanh %1063 : vector<8x32xf32>
    %1065 = arith.mulf %1058, %1064 : vector<8x32xf32>
    %1066 = arith.index_cast %1019 : i32 to index
    %c0_219 = arith.constant 0 : index
    %1067 = vector.load %arg1[%1066, %c0_219] : memref<64x1xf32, #tpu.memory_space<vmem>>, vector<8x1xf32>
    %cst_220 = arith.constant 0.000000e+00 : f32
    %1068 = vector.broadcast %cst_220 : f32 to vector<8x1xf32>
    %1069 = arith.cmpf one, %1067, %1068 : vector<8x1xf32>
    %1070 = arith.index_cast %1022 : i32 to index
    %c0_221 = arith.constant 0 : index
    %1071 = vector.load %arg1[%1070, %c0_221] : memref<64x1xf32, #tpu.memory_space<vmem>>, vector<8x1xf32>
    %cst_222 = arith.constant 0.000000e+00 : f32
    %1072 = vector.broadcast %cst_222 : f32 to vector<8x1xf32>
    %1073 = arith.cmpf one, %1071, %1072 : vector<8x1xf32>
    %1074 = vector.shape_cast %1069 : vector<8x1xi1> to vector<8x1xi1>
    %1075 = vector.broadcast %1074 : vector<8x1xi1> to vector<8x32xi1>
    %1076 = arith.select %1075, %1049, %1008 : vector<8x32xi1>, vector<8x32xf32>
    %1077 = vector.shape_cast %1069 : vector<8x1xi1> to vector<8x1xi1>
    %1078 = vector.broadcast %1077 : vector<8x1xi1> to vector<8x32xi1>
    %1079 = arith.select %1078, %1047, %1011 : vector<8x32xi1>, vector<8x32xf32>
    %1080 = vector.shape_cast %1073 : vector<8x1xi1> to vector<8x1xi1>
    %1081 = vector.broadcast %1080 : vector<8x1xi1> to vector<8x32xi1>
    %1082 = arith.select %1081, %1065, %1014 : vector<8x32xi1>, vector<8x32xf32>
    %1083 = vector.shape_cast %1073 : vector<8x1xi1> to vector<8x1xi1>
    %1084 = vector.broadcast %1083 : vector<8x1xi1> to vector<8x32xi1>
    %1085 = arith.select %1084, %1063, %1017 : vector<8x32xi1>, vector<8x32xf32>
    %c7_i32_223 = arith.constant 7 : i32
    %c8_i32_224 = arith.constant 8 : i32
    %1086 = arith.muli %c7_i32_223, %c8_i32_224 : i32
    %1087 = tpu.assume_multiple %1086, 8 : i32
    %c7_i32_225 = arith.constant 7 : i32
    %1088 = arith.subi %c7_i32_225, %c7_i32_223 : i32
    %c8_i32_226 = arith.constant 8 : i32
    %1089 = arith.muli %1088, %c8_i32_226 : i32
    %1090 = tpu.assume_multiple %1089, 8 : i32
    %1091 = tpu.concatenate %1076, %1082 in 1 : vector<8x32xf32>, vector<8x32xf32> -> vector<8x64xf32>
    %1092 = arith.truncf %1091 : vector<8x64xf32> to vector<8x64xbf16>
    %cst_227 = arith.constant dense<0.000000e+00> : vector<8x256xf32>
    %1093 = tpu.matmul %1092, %608, %cst_227 {dimension_numbers = #tpu.dot_dimension_numbers<[1], [0], [0], [1], [0, 0, 1, 1], [], []>} : vector<8x64xbf16>, vector<64x256xbf16>, vector<8x256xf32> -> vector<8x256xf32>
    %1094 = arith.index_cast %1087 : i32 to index
    %c0_228 = arith.constant 0 : index
    %1095 = vector.load %arg11[%1094, %c0_228] : memref<64x256xf32, #tpu.memory_space<vmem>>, vector<8x128xf32>
    %1096 = vector.extract_strided_slice %1093 {offsets = [0, 0], sizes = [8, 128], strides = [1, 1]} : vector<8x256xf32> to vector<8x128xf32>
    %1097 = arith.addf %1095, %1096 : vector<8x128xf32>
    %1098 = arith.index_cast %1090 : i32 to index
    %c128_229 = arith.constant 128 : index
    %1099 = vector.load %arg11[%1098, %c128_229] : memref<64x256xf32, #tpu.memory_space<vmem>>, vector<8x128xf32>
    %1100 = vector.extract_strided_slice %1093 {offsets = [0, 128], sizes = [8, 128], strides = [1, 1]} : vector<8x256xf32> to vector<8x128xf32>
    %1101 = arith.addf %1099, %1100 : vector<8x128xf32>
    %1102 = vector.extract_strided_slice %1097 {offsets = [0, 0], sizes = [8, 96], strides = [1, 1]} : vector<8x128xf32> to vector<8x96xf32>
    %1103 = arith.negf %1102 : vector<8x96xf32>
    %1104 = math.exp %1103 : vector<8x96xf32>
    %cst_230 = arith.constant 1.000000e+00 : f32
    %1105 = vector.broadcast %cst_230 : f32 to vector<8x96xf32>
    %1106 = arith.addf %1105, %1104 : vector<8x96xf32>
    %1107 = arith.divf %1105, %1106 : vector<8x96xf32>
    %1108 = vector.extract_strided_slice %1107 {offsets = [0, 0], sizes = [8, 32], strides = [1, 1]} : vector<8x96xf32> to vector<8x32xf32>
    %1109 = vector.extract_strided_slice %1107 {offsets = [0, 32], sizes = [8, 32], strides = [1, 1]} : vector<8x96xf32> to vector<8x32xf32>
    %1110 = vector.extract_strided_slice %1107 {offsets = [0, 64], sizes = [8, 32], strides = [1, 1]} : vector<8x96xf32> to vector<8x32xf32>
    %1111 = vector.extract_strided_slice %1097 {offsets = [0, 96], sizes = [8, 32], strides = [1, 1]} : vector<8x128xf32> to vector<8x32xf32>
    %1112 = math.tanh %1111 : vector<8x32xf32>
    %1113 = arith.mulf %1109, %1079 : vector<8x32xf32>
    %1114 = arith.mulf %1108, %1112 : vector<8x32xf32>
    %1115 = arith.addf %1113, %1114 : vector<8x32xf32>
    %1116 = math.tanh %1115 : vector<8x32xf32>
    %1117 = arith.mulf %1110, %1116 : vector<8x32xf32>
    %1118 = vector.extract_strided_slice %1101 {offsets = [0, 0], sizes = [8, 96], strides = [1, 1]} : vector<8x128xf32> to vector<8x96xf32>
    %1119 = arith.negf %1118 : vector<8x96xf32>
    %1120 = math.exp %1119 : vector<8x96xf32>
    %cst_231 = arith.constant 1.000000e+00 : f32
    %1121 = vector.broadcast %cst_231 : f32 to vector<8x96xf32>
    %1122 = arith.addf %1121, %1120 : vector<8x96xf32>
    %1123 = arith.divf %1121, %1122 : vector<8x96xf32>
    %1124 = vector.extract_strided_slice %1123 {offsets = [0, 0], sizes = [8, 32], strides = [1, 1]} : vector<8x96xf32> to vector<8x32xf32>
    %1125 = vector.extract_strided_slice %1123 {offsets = [0, 32], sizes = [8, 32], strides = [1, 1]} : vector<8x96xf32> to vector<8x32xf32>
    %1126 = vector.extract_strided_slice %1123 {offsets = [0, 64], sizes = [8, 32], strides = [1, 1]} : vector<8x96xf32> to vector<8x32xf32>
    %1127 = vector.extract_strided_slice %1101 {offsets = [0, 96], sizes = [8, 32], strides = [1, 1]} : vector<8x128xf32> to vector<8x32xf32>
    %1128 = math.tanh %1127 : vector<8x32xf32>
    %1129 = arith.mulf %1125, %1085 : vector<8x32xf32>
    %1130 = arith.mulf %1124, %1128 : vector<8x32xf32>
    %1131 = arith.addf %1129, %1130 : vector<8x32xf32>
    %1132 = math.tanh %1131 : vector<8x32xf32>
    %1133 = arith.mulf %1126, %1132 : vector<8x32xf32>
    %1134 = arith.index_cast %1087 : i32 to index
    %c0_232 = arith.constant 0 : index
    %1135 = vector.load %arg1[%1134, %c0_232] : memref<64x1xf32, #tpu.memory_space<vmem>>, vector<8x1xf32>
    %cst_233 = arith.constant 0.000000e+00 : f32
    %1136 = vector.broadcast %cst_233 : f32 to vector<8x1xf32>
    %1137 = arith.cmpf one, %1135, %1136 : vector<8x1xf32>
    %1138 = arith.index_cast %1090 : i32 to index
    %c0_234 = arith.constant 0 : index
    %1139 = vector.load %arg1[%1138, %c0_234] : memref<64x1xf32, #tpu.memory_space<vmem>>, vector<8x1xf32>
    %cst_235 = arith.constant 0.000000e+00 : f32
    %1140 = vector.broadcast %cst_235 : f32 to vector<8x1xf32>
    %1141 = arith.cmpf one, %1139, %1140 : vector<8x1xf32>
    %1142 = vector.shape_cast %1137 : vector<8x1xi1> to vector<8x1xi1>
    %1143 = vector.broadcast %1142 : vector<8x1xi1> to vector<8x32xi1>
    %1144 = arith.select %1143, %1117, %1076 : vector<8x32xi1>, vector<8x32xf32>
    %1145 = vector.shape_cast %1137 : vector<8x1xi1> to vector<8x1xi1>
    %1146 = vector.broadcast %1145 : vector<8x1xi1> to vector<8x32xi1>
    %1147 = arith.select %1146, %1115, %1079 : vector<8x32xi1>, vector<8x32xf32>
    %1148 = vector.shape_cast %1141 : vector<8x1xi1> to vector<8x1xi1>
    %1149 = vector.broadcast %1148 : vector<8x1xi1> to vector<8x32xi1>
    %1150 = arith.select %1149, %1133, %1082 : vector<8x32xi1>, vector<8x32xf32>
    %1151 = vector.shape_cast %1141 : vector<8x1xi1> to vector<8x1xi1>
    %1152 = vector.broadcast %1151 : vector<8x1xi1> to vector<8x32xi1>
    %1153 = arith.select %1152, %1131, %1085 : vector<8x32xi1>, vector<8x32xf32>
    %c8_i32_236 = arith.constant 8 : i32
    %1154 = tpu.concatenate %1144, %1150 in 1 : vector<8x32xf32>, vector<8x32xf32> -> vector<8x64xf32>
    %c0_237 = arith.constant 0 : index
    %c0_238 = arith.constant 0 : index
    %1155 = vector.load %arg8[%c0_237, %c0_238] : memref<64x4xf32, #tpu.memory_space<vmem>>, vector<64x4xf32>
    %cst_239 = arith.constant dense<0.000000e+00> : vector<8x4xf32>
    %1156 = tpu.matmul %1154, %1155, %cst_239 {dimension_numbers = #tpu.dot_dimension_numbers<[1], [0], [0], [1], [0, 0, 1, 1], [], []>} : vector<8x64xf32>, vector<64x4xf32>, vector<8x4xf32> -> vector<8x4xf32>
    %c0_240 = arith.constant 0 : index
    %c0_241 = arith.constant 0 : index
    %1157 = vector.load %arg9[%c0_240, %c0_241] : memref<1x4xf32, #tpu.memory_space<vmem>>, vector<1x4xf32>
    %1158 = vector.broadcast %1157 : vector<1x4xf32> to vector<8x4xf32>
    %1159 = arith.addf %1156, %1158 : vector<8x4xf32>
    %c0_242 = arith.constant 0 : index
    %c0_243 = arith.constant 0 : index
    %1160 = vector.load %arg10[%c0_242, %c0_243] : memref<8x4xf32, #tpu.memory_space<vmem>>, vector<8x4xf32>
    tpu.vector_store %arg10[%c0_242, %c0_243], %1159 {strides = array<i32>} : memref<8x4xf32, #tpu.memory_space<vmem>>, vector<8x4xf32>,
    return
  }
}

</mosaic_0001>

<llo_original>
// kernel: lstm_model_forward.1
$region0: #{lstm_model_forward.1}
  #allocation0 [shape = 'u32[]', space=smem, size = 0x4, offset = 0x4, fixed_abs, tag = 'smem constant byte address 0x4 - core index']
  #allocation1 [shape = 'u32[72,128]{1,0:T(1,128)}', space=vmem, size = 0x9000, scoped, tag = 'internal scratch']
  #allocation2 [shape = 'f32[64,256]{1,0:T(8,128)}', space=vmem, size = 0x10000, scoped, tag = 'scratch operand']
  #allocation3 [shape = 'bf16[64,64]{1,0:T(8,128)(2,1)}', space=vmem, size = 0x4000, scoped, tag = 'scratch operand']
  %s0 = inlined_call_operand.vmem [shape: bf16[64,16], index: 0, kind: input, shape index: {}]
  %s1 = inlined_call_operand.vmem [shape: f32[64,1], index: 1, kind: input, shape index: {}]
  %s2 = inlined_call_operand.vmem [shape: bf16[16,256], index: 2, kind: input, shape index: {}]
  %s3 = inlined_call_operand.vmem [shape: bf16[64,256], index: 3, kind: input, shape index: {}]
  %s4 = inlined_call_operand.vmem [shape: f32[1,256], index: 4, kind: input, shape index: {}]
  %s5 = inlined_call_operand.vmem [shape: bf16[64,256], index: 5, kind: input, shape index: {}]
  %s6 = inlined_call_operand.vmem [shape: bf16[64,256], index: 6, kind: input, shape index: {}]
  %s7 = inlined_call_operand.vmem [shape: f32[1,256], index: 7, kind: input, shape index: {}]
  %s8 = inlined_call_operand.vmem [shape: f32[64,4], index: 8, kind: input, shape index: {}]
  %s9 = inlined_call_operand.vmem [shape: f32[1,4], index: 9, kind: input, shape index: {}]
  %s10 = inlined_call_operand.vmem [shape: f32[8,4], index: 10, kind: output, shape index: {}]
  %s11 = sld [smem:[#allocation0]]
  $region50: #{lstm_model_forward.1} parent=0
    _
  %s13 = ssub.s32 1, %s11
  %s14 = scalar_select 0, %s13, %s11
  // Predicated region
  $region2: #{lstm_model_forward.1} parent=0 // pred_check
    _
  $region3: #{lstm_model_forward.1} parent=0 // pred_check_branch
    %16 = sbr.rel (0) target = $region5
  $region4: #{lstm_model_forward.1} parent=0 // pred_region
    _
  $region5: #{lstm_model_forward.1} parent=0 // pred_fallthru
    _
  // Predicated region
  $region6: #{lstm_model_forward.1} parent=0 // pred_check
    _
  $region7: #{lstm_model_forward.1} parent=0 // pred_check_branch
    %18 = sbr.rel (0) target = $region9
  $region8: #{lstm_model_forward.1} parent=0 // pred_region
    _
  $region9: #{lstm_model_forward.1} parent=0 // pred_fallthru
    _
  // Predicated region
  $region10: #{lstm_model_forward.1} parent=0 // pred_check
    _
  $region11: #{lstm_model_forward.1} parent=0 // pred_check_branch
    %20 = sbr.rel (0) target = $region13
  $region12: #{lstm_model_forward.1} parent=0 // pred_region
    _
  $region13: #{lstm_model_forward.1} parent=0 // pred_fallthru
    _
  // Predicated region
  $region14: #{lstm_model_forward.1} parent=0 // pred_check
    _
  $region15: #{lstm_model_forward.1} parent=0 // pred_check_branch
    %22 = sbr.rel (0) target = $region17
  $region16: #{lstm_model_forward.1} parent=0 // pred_region
    _
  $region17: #{lstm_model_forward.1} parent=0 // pred_fallthru
    _
  // Predicated region
  $region18: #{lstm_model_forward.1} parent=0 // pred_check
    _
  $region19: #{lstm_model_forward.1} parent=0 // pred_check_branch
    %24 = sbr.rel (0) target = $region21
  $region20: #{lstm_model_forward.1} parent=0 // pred_region
    _
  $region21: #{lstm_model_forward.1} parent=0 // pred_fallthru
    _
  // Predicated region
  $region22: #{lstm_model_forward.1} parent=0 // pred_check
    _
  $region23: #{lstm_model_forward.1} parent=0 // pred_check_branch
    %26 = sbr.rel (0) target = $region25
  $region24: #{lstm_model_forward.1} parent=0 // pred_region
    _
  $region25: #{lstm_model_forward.1} parent=0 // pred_fallthru
    _
  // Predicated region
  $region26: #{lstm_model_forward.1} parent=0 // pred_check
    _
  $region27: #{lstm_model_forward.1} parent=0 // pred_check_branch
    %28 = sbr.rel (0) target = $region29
  $region28: #{lstm_model_forward.1} parent=0 // pred_region
    _
  $region29: #{lstm_model_forward.1} parent=0 // pred_fallthru
    _
  // Predicated region
  $region30: #{lstm_model_forward.1} parent=0 // pred_check
    _
  $region31: #{lstm_model_forward.1} parent=0 // pred_check_branch
    %30 = sbr.rel (0) target = $region33
  $region32: #{lstm_model_forward.1} parent=0 // pred_region
    _
  $region33: #{lstm_model_forward.1} parent=0 // pred_fallthru
    _
  // Predicated region
  $region34: #{lstm_model_forward.1} parent=0 // pred_check
    _
  $region35: #{lstm_model_forward.1} parent=0 // pred_check_branch
    %32 = sbr.rel (0) target = $region37
  $region36: #{lstm_model_forward.1} parent=0 // pred_region
    _
  $region37: #{lstm_model_forward.1} parent=0 // pred_fallthru
    _
  // Predicated region
  $region38: #{lstm_model_forward.1} parent=0 // pred_check
    _
  $region39: #{lstm_model_forward.1} parent=0 // pred_check_branch
    %34 = sbr.rel (0) target = $region41
  $region40: #{lstm_model_forward.1} parent=0 // pred_region
    _
  $region41: #{lstm_model_forward.1} parent=0 // pred_fallthru
    _
  %v36 = vld [vmem:[%s0] sm:$0xf]
  %v37 = vld [vmem:[%s0 + $0x4] sm:$0xf]
  %v38 = vld [vmem:[%s0 + $0x8] sm:$0xf]
  %v39 = vld [vmem:[%s0 + $0xc] sm:$0xf]
  %v40 = vld [vmem:[%s0 + $0x10] sm:$0xf]
  %v41 = vld [vmem:[%s0 + $0x14] sm:$0xf]
  %v42 = vld [vmem:[%s0 + $0x18] sm:$0xf]
  %v43 = vld [vmem:[%s0 + $0x1c] sm:$0xf]
  %v44 = vld [vmem:[%s2] sm:$0xff]
  %v45 = vld [vmem:[%s2 + $0x8] sm:$0xff]
  %v46 = vld [vmem:[%s4] sm:$0x3]
  %v48 = vperm.slane %v46, 0
  %v49 = vperm.slane %v46, 1
  %v60 = vunpack.c.l.b16 %v36
  %v61 = vunpack.c.l.b16 %v37
  %v62 = vunpack.c.l.b16 %v38
  %v63 = vunpack.c.l.b16 %v39
  %v64 = vunpack.c.l.b16 %v40
  %v65 = vunpack.c.l.b16 %v41
  %v66 = vunpack.c.l.b16 %v42
  %v67 = vunpack.c.l.b16 %v43
  %v68 = vpack.c.b16 %v61, %v60
  %v69 = vpack.c.b16 %v63, %v62
  %v70 = vpack.c.b16 %v65, %v64
  %v71 = vpack.c.b16 %v67, %v66
  %v74 = vunpack.c.l.b16 %v44
  %v75 = vunpack.c.h.b16 %v44
  %v76 = vunpack.c.l.b16 %v45
  %v77 = vunpack.c.h.b16 %v45
  %v78 = vpack.c.b16 %v76, %v74
  %v79 = vpack.c.b16 %v77, %v75
  %vm82 = vcmask 130048
  %v84 = vsel %vm82, %v68, 0
  %v87 = vsel %vm82, %v69, 0
  %v90 = vsel %vm82, %v70, 0
  %v93 = vsel %vm82, %v71, 0
  %95 = vmatpush.bf16.msra.mxu0 0
  %96 = vmatpush.bf16.msra.mxu0 0
  %97 = vmatpush.bf16.msra.mxu0 0
  %98 = vmatpush.bf16.msra.mxu0 0
  %99 = vmatpush.bf16.msra.mxu0 0
  %100 = vmatpush.bf16.msra.mxu0 0
  %101 = vmatpush.bf16.msra.mxu0 0
  %102 = vmatpush.bf16.msra.mxu0 %v78
  %103 = vmatmul.bf16.gmra.mxu0 %v84
  %v104 = vpop.f32.mrf.mxu0
  %v105 = vadd.f32 %v48, %v104
  %v106 = vpop.f32.mrf.mxu0
  %v107 = vadd.f32 %v48, %v106
  %108 = vmatmul.bf16.gmra.mxu0 %v87
  %v109 = vpop.f32.mrf.mxu0
  %v110 = vadd.f32 %v48, %v109
  %v111 = vpop.f32.mrf.mxu0
  %v112 = vadd.f32 %v48, %v111
  %113 = vmatmul.bf16.gmra.mxu0 %v90
  %v114 = vpop.f32.mrf.mxu0
  %v115 = vadd.f32 %v48, %v114
  %v116 = vpop.f32.mrf.mxu0
  %v117 = vadd.f32 %v48, %v116
  %118 = vmatmul.bf16.gmra.mxu0 %v93
  %v119 = vpop.f32.mrf.mxu0
  %v120 = vadd.f32 %v48, %v119
  %v121 = vpop.f32.mrf.mxu0
  %v122 = vadd.f32 %v48, %v121
  %123 = vdwg.mxu0
  %124 = vmatpush.bf16.msra.mxu0 0
  %125 = vmatpush.bf16.msra.mxu0 0
  %126 = vmatpush.bf16.msra.mxu0 0
  %127 = vmatpush.bf16.msra.mxu0 0
  %128 = vmatpush.bf16.msra.mxu0 0
  %129 = vmatpush.bf16.msra.mxu0 0
  %130 = vmatpush.bf16.msra.mxu0 0
  %131 = vmatpush.bf16.msra.mxu0 %v79
  %132 = vmatmul.bf16.gmra.mxu0 %v84
  %v133 = vpop.f32.mrf.mxu0
  %v134 = vadd.f32 %v49, %v133
  %v135 = vpop.f32.mrf.mxu0
  %v136 = vadd.f32 %v49, %v135
  %137 = vmatmul.bf16.gmra.mxu0 %v87
  %v138 = vpop.f32.mrf.mxu0
  %v139 = vadd.f32 %v49, %v138
  %v140 = vpop.f32.mrf.mxu0
  %v141 = vadd.f32 %v49, %v140
  %142 = vmatmul.bf16.gmra.mxu0 %v90
  %v143 = vpop.f32.mrf.mxu0
  %v144 = vadd.f32 %v49, %v143
  %v145 = vpop.f32.mrf.mxu0
  %v146 = vadd.f32 %v49, %v145
  %147 = vmatmul.bf16.gmra.mxu0 %v93
  %v148 = vpop.f32.mrf.mxu0
  %v149 = vadd.f32 %v49, %v148
  %v150 = vpop.f32.mrf.mxu0
  %v151 = vadd.f32 %v49, %v150
  %152 = vdwg.mxu0
  %153 = vst [vmem:[#allocation2] sm:$0xff] %v105
  %154 = vst [vmem:[#allocation2 + $0x8] sm:$0xff] %v134
  %155 = vst [vmem:[#allocation2 + $0x10] sm:$0xff] %v107
  %156 = vst [vmem:[#allocation2 + $0x18] sm:$0xff] %v136
  %157 = vst [vmem:[#allocation2 + $0x20] sm:$0xff] %v110
  %158 = vst [vmem:[#allocation2 + $0x28] sm:$0xff] %v139
  %159 = vst [vmem:[#allocation2 + $0x30] sm:$0xff] %v112
  %160 = vst [vmem:[#allocation2 + $0x38] sm:$0xff] %v141
  %161 = vst [vmem:[#allocation2 + $0x40] sm:$0xff] %v115
  %162 = vst [vmem:[#allocation2 + $0x48] sm:$0xff] %v144
  %163 = vst [vmem:[#allocation2 + $0x50] sm:$0xff] %v117
  %164 = vst [vmem:[#allocation2 + $0x58] sm:$0xff] %v146
  %165 = vst [vmem:[#allocation2 + $0x60] sm:$0xff] %v120
  %166 = vst [vmem:[#allocation2 + $0x68] sm:$0xff] %v149
  %167 = vst [vmem:[#allocation2 + $0x70] sm:$0xff] %v122
  %168 = vst [vmem:[#allocation2 + $0x78] sm:$0xff] %v151
  %v169 = vld [vmem:[%s3] sm:$0xff]
  %v170 = vld [vmem:[%s3 + $0x8] sm:$0xff]
  %v171 = vld [vmem:[%s3 + $0x10] sm:$0xff]
  %v172 = vld [vmem:[%s3 + $0x18] sm:$0xff]
  %v173 = vld [vmem:[%s3 + $0x20] sm:$0xff]
  %v174 = vld [vmem:[%s3 + $0x28] sm:$0xff]
  %v175 = vld [vmem:[%s3 + $0x30] sm:$0xff]
  %v176 = vld [vmem:[%s3 + $0x38] sm:$0xff]
  %v177 = vpack.c.bf16 0.0, 0.0
  %v186 = vunpack.c.l.b16 %v169
  %v187 = vunpack.c.h.b16 %v169
  %v188 = vunpack.c.l.b16 %v170
  %v189 = vunpack.c.h.b16 %v170
  %v190 = vunpack.c.l.b16 %v171
  %v191 = vunpack.c.h.b16 %v171
  %v192 = vunpack.c.l.b16 %v172
  %v193 = vunpack.c.h.b16 %v172
  %v194 = vunpack.c.l.b16 %v173
  %v195 = vunpack.c.h.b16 %v173
  %v196 = vunpack.c.l.b16 %v174
  %v197 = vunpack.c.h.b16 %v174
  %v198 = vunpack.c.l.b16 %v175
  %v199 = vunpack.c.h.b16 %v175
  %v200 = vunpack.c.l.b16 %v176
  %v201 = vunpack.c.h.b16 %v176
  %v202 = vpack.c.b16 %v188, %v186
  %v203 = vpack.c.b16 %v189, %v187
  %v204 = vpack.c.b16 %v192, %v190
  %v205 = vpack.c.b16 %v193, %v191
  %v206 = vpack.c.b16 %v196, %v194
  %v207 = vpack.c.b16 %v197, %v195
  %v208 = vpack.c.b16 %v200, %v198
  %v209 = vpack.c.b16 %v201, %v199
  %vm218 = vcmask 523264
  %v220 = vsel %vm218, %v177, 0
  %222 = vmatpush.bf16.msra.mxu0 0
  %223 = vmatpush.bf16.msra.mxu0 0
  %224 = vmatpush.bf16.msra.mxu0 0
  %225 = vmatpush.bf16.msra.mxu0 0
  %226 = vmatpush.bf16.msra.mxu0 %v208
  %227 = vmatpush.bf16.msra.mxu0 %v206
  %228 = vmatpush.bf16.msra.mxu0 %v204
  %229 = vmatpush.bf16.msra.mxu0 %v202
  %230 = vmatmul.bf16.gmra.mxu0 %v220
  %v231 = vpop.f32.mrf.mxu0
  %v232 = vadd.f32 0.0, %v231
  %v233 = vpop.f32.mrf.mxu0
  %234 = vdwg.mxu0
  %235 = vmatpush.bf16.msra.mxu0 0
  %236 = vmatpush.bf16.msra.mxu0 0
  %237 = vmatpush.bf16.msra.mxu0 0
  %238 = vmatpush.bf16.msra.mxu0 0
  %239 = vmatpush.bf16.msra.mxu0 %v209
  %240 = vmatpush.bf16.msra.mxu0 %v207
  %241 = vmatpush.bf16.msra.mxu0 %v205
  %242 = vmatpush.bf16.msra.mxu0 %v203
  %243 = vmatmul.bf16.gmra.mxu0 %v220
  %v244 = vpop.f32.mrf.mxu0
  %v245 = vadd.f32 0.0, %v244
  %v246 = vpop.f32.mrf.mxu0
  %247 = vdwg.mxu0
  %s248 = smul.u32 0, 2
  %s249 = smul.addr %s248, 8
  %s250 = scalar_lea.vmem [#allocation2], %s249
  %v251 = vld [vmem:[%s250] sm:$0xff]
  %v252 = vadd.f32 %v251, %v232
  %s253 = smul.u32 7, 2
  %s254 = smul.addr %s253, 8
  %s255 = scalar_lea.vmem [#allocation2], %s254
  %v256 = vld [vmem:[%s255 + $0x8] sm:$0xff]
  %v257 = vadd.f32 %v256, %v245
  %v258 = vxor.u32 %v252, 2147483648
  %v259 = vmul.f32 %v258, 1.442695
  %v260 = vpow.pop %v259
  %v261 = vadd.f32 %v260, 1.0
  %v262 = vrcp.pop %v261
  %v263 = vmul.f32 %v261, %v262
  %v264 = vsub.f32 1.0, %v263
  %v265 = vmul.f32 %v262, %v264
  %v266 = vadd.f32 %v262, %v265
  %vm267 = vweird.f32 %v261
  %vm268 = vweird.f32 %v262
  %vm269 = vmor %vm267, %vm268
  %v270 = vsel %vm269, %v262, %v266
  %v271 = vand.u32 2147483647, %v261
  %vm272 = vcmp.eq.f32.partialorder %v271, 8.507059e+37
  %v273 = vand.u32 %v261, 2147483648
  %v274 = vor.u32 1.1754944e-38, %v273
  %v275 = vsel %vm272, %v274, %v270
  %v276 = vmul.f32 1.0, %v275
  %v277 = vtanh.pop %v252
  %v278 = vmul.f32 %v276, 0.0
  %280 = vrot.lane.b32.xlu0 %v277, 32
  %v281 = vpop.permute.xlu0 %280
  %v283 = vmul.f32 %v276, %v281
  %285 = vrot.lane.b32.xlu0 %v283, 32
  %v286 = vpop.permute.xlu0 %285
  %v288 = vadd.f32 %v278, %v286
  %v289 = vtanh.pop %v288
  %291 = vrot.lane.b32.xlu0 %v289, 32
  %v292 = vpop.permute.xlu0 %291
  %v294 = vmul.f32 %v276, %v292
  %v295 = vxor.u32 %v257, 2147483648
  %v296 = vmul.f32 %v295, 1.442695
  %v297 = vpow.pop %v296
  %v298 = vadd.f32 %v297, 1.0
  %v299 = vrcp.pop %v298
  %v300 = vmul.f32 %v298, %v299
  %v301 = vsub.f32 1.0, %v300
  %v302 = vmul.f32 %v299, %v301
  %v303 = vadd.f32 %v299, %v302
  %vm304 = vweird.f32 %v298
  %vm305 = vweird.f32 %v299
  %vm306 = vmor %vm304, %vm305
  %v307 = vsel %vm306, %v299, %v303
  %v308 = vand.u32 2147483647, %v298
  %vm309 = vcmp.eq.f32.partialorder %v308, 8.507059e+37
  %v310 = vand.u32 %v298, 2147483648
  %v311 = vor.u32 1.1754944e-38, %v310
  %v312 = vsel %vm309, %v311, %v307
  %v313 = vmul.f32 1.0, %v312
  %v314 = vtanh.pop %v257
  %v315 = vmul.f32 %v313, 0.0
  %317 = vrot.lane.b32.xlu0 %v314, 32
  %v318 = vpop.permute.xlu0 %317
  %v320 = vmul.f32 %v313, %v318
  %322 = vrot.lane.b32.xlu0 %v320, 32
  %v323 = vpop.permute.xlu0 %322
  %v325 = vadd.f32 %v315, %v323
  %v326 = vtanh.pop %v325
  %328 = vrot.lane.b32.xlu0 %v326, 32
  %v329 = vpop.permute.xlu0 %328
  %v331 = vmul.f32 %v313, %v329
  %v332 = vld [vmem:[%s1] sm:$0xff]
  %vm333 = vcmp.ne.f32.partialorder %v332, 0.0
  %s334 = scalar_lea.vmem %s1, 56
  %v335 = vld [vmem:[%s334] sm:$0xff]
  %vm336 = vcmp.ne.f32.partialorder %v335, 0.0
  %v337 = vsel %vm333, 1, 0
  %338 = vset.pattern.permute.xlu0 0
  %339 = vperm.xlu0 %338, %v337
  %v340 = vpop.permute.xlu0 %339
  %vm341 = vcmp.eq.s32.totalorder %v340, 1
  %v342 = vsel %vm341, %v294, 0.0
  %v343 = vsel %vm341, %v288, 0.0
  %v344 = vsel %vm336, 1, 0
  %345 = vset.pattern.permute.xlu0 0
  %346 = vperm.xlu0 %345, %v344
  %v347 = vpop.permute.xlu0 %346
  %vm348 = vcmp.eq.s32.totalorder %v347, 1
  %v349 = vsel %vm348, %v331, 0.0
  %v350 = vsel %vm348, %v325, 0.0
  %v351 = vpack.c.bf16 %v342, %v342
  %353 = vrot.lane.b32.xlu0 %v351, 64
  %v354 = vpop.permute.xlu0 %353
  %vm356 = vcmask 257024
  %357 = vst.msk [vmem:[#allocation3] sm:$0xf] %vm356, %v354
  %v358 = vpack.c.bf16 %v349, %v349
  %360 = vrot.lane.b32.xlu0 %v358, 96
  %v361 = vpop.permute.xlu0 %360
  %s363 = scalar_lea.vmem [#allocation3], 28
  %vm364 = vcmask 519424
  %365 = vst.msk [vmem:[%s363] sm:$0xf] %vm364, %v361
  %367 = vrot.lane.b32.xlu0 %v342, 64
  %v368 = vpop.permute.xlu0 %367
  %371 = vrot.lane.b32.xlu0 %v349, 96
  %v372 = vpop.permute.xlu0 %371
  %vm374 = vcmask 261120
  %v375 = vsel %vm374, %v368, %v372
  %v376 = vpack.c.bf16 %v375, %v375
  %v378 = vsel %vm218, %v376, 0
  %380 = vmatpush.bf16.msra.mxu0 0
  %381 = vmatpush.bf16.msra.mxu0 0
  %382 = vmatpush.bf16.msra.mxu0 0
  %383 = vmatpush.bf16.msra.mxu0 0
  %384 = vmatpush.bf16.msra.mxu0 %v208
  %385 = vmatpush.bf16.msra.mxu0 %v206
  %386 = vmatpush.bf16.msra.mxu0 %v204
  %387 = vmatpush.bf16.msra.mxu0 %v202
  %388 = vmatmul.bf16.gmra.mxu0 %v378
  %v389 = vpop.f32.mrf.mxu0
  %v390 = vadd.f32 0.0, %v389
  %v391 = vpop.f32.mrf.mxu0
  %392 = vdwg.mxu0
  %393 = vmatpush.bf16.msra.mxu0 0
  %394 = vmatpush.bf16.msra.mxu0 0
  %395 = vmatpush.bf16.msra.mxu0 0
  %396 = vmatpush.bf16.msra.mxu0 0
  %397 = vmatpush.bf16.msra.mxu0 %v209
  %398 = vmatpush.bf16.msra.mxu0 %v207
  %399 = vmatpush.bf16.msra.mxu0 %v205
  %400 = vmatpush.bf16.msra.mxu0 %v203
  %401 = vmatmul.bf16.gmra.mxu0 %v378
  %v402 = vpop.f32.mrf.mxu0
  %v403 = vadd.f32 0.0, %v402
  %v404 = vpop.f32.mrf.mxu0
  %405 = vdwg.mxu0
  %s406 = smul.u32 1, 2
  %s407 = smul.addr %s406, 8
  %s408 = scalar_lea.vmem [#allocation2], %s407
  %v409 = vld [vmem:[%s408] sm:$0xff]
  %v410 = vadd.f32 %v409, %v390
  %s411 = smul.u32 6, 2
  %s412 = smul.addr %s411, 8
  %s413 = scalar_lea.vmem [#allocation2], %s412
  %v414 = vld [vmem:[%s413 + $0x8] sm:$0xff]
  %v415 = vadd.f32 %v414, %v403
  %v416 = vxor.u32 %v410, 2147483648
  %v417 = vmul.f32 %v416, 1.442695
  %v418 = vpow.pop %v417
  %v419 = vadd.f32 %v418, 1.0
  %v420 = vrcp.pop %v419
  %v421 = vmul.f32 %v419, %v420
  %v422 = vsub.f32 1.0, %v421
  %v423 = vmul.f32 %v420, %v422
  %v424 = vadd.f32 %v420, %v423
  %vm425 = vweird.f32 %v419
  %vm426 = vweird.f32 %v420
  %vm427 = vmor %vm425, %vm426
  %v428 = vsel %vm427, %v420, %v424
  %v429 = vand.u32 2147483647, %v419
  %vm430 = vcmp.eq.f32.partialorder %v429, 8.507059e+37
  %v431 = vand.u32 %v419, 2147483648
  %v432 = vor.u32 1.1754944e-38, %v431
  %v433 = vsel %vm430, %v432, %v428
  %v434 = vmul.f32 1.0, %v433
  %v435 = vtanh.pop %v410
  %v436 = vmul.f32 %v434, %v343
  %438 = vrot.lane.b32.xlu0 %v435, 32
  %v439 = vpop.permute.xlu0 %438
  %v441 = vmul.f32 %v434, %v439
  %443 = vrot.lane.b32.xlu0 %v441, 32
  %v444 = vpop.permute.xlu0 %443
  %v446 = vadd.f32 %v436, %v444
  %v447 = vtanh.pop %v446
  %449 = vrot.lane.b32.xlu0 %v447, 32
  %v450 = vpop.permute.xlu0 %449
  %v452 = vmul.f32 %v434, %v450
  %v453 = vxor.u32 %v415, 2147483648
  %v454 = vmul.f32 %v453, 1.442695
  %v455 = vpow.pop %v454
  %v456 = vadd.f32 %v455, 1.0
  %v457 = vrcp.pop %v456
  %v458 = vmul.f32 %v456, %v457
  %v459 = vsub.f32 1.0, %v458
  %v460 = vmul.f32 %v457, %v459
  %v461 = vadd.f32 %v457, %v460
  %vm462 = vweird.f32 %v456
  %vm463 = vweird.f32 %v457
  %vm464 = vmor %vm462, %vm463
  %v465 = vsel %vm464, %v457, %v461
  %v466 = vand.u32 2147483647, %v456
  %vm467 = vcmp.eq.f32.partialorder %v466, 8.507059e+37
  %v468 = vand.u32 %v456, 2147483648
  %v469 = vor.u32 1.1754944e-38, %v468
  %v470 = vsel %vm467, %v469, %v465
  %v471 = vmul.f32 1.0, %v470
  %v472 = vtanh.pop %v415
  %v473 = vmul.f32 %v471, %v350
  %475 = vrot.lane.b32.xlu0 %v472, 32
  %v476 = vpop.permute.xlu0 %475
  %v478 = vmul.f32 %v471, %v476
  %480 = vrot.lane.b32.xlu0 %v478, 32
  %v481 = vpop.permute.xlu0 %480
  %v483 = vadd.f32 %v473, %v481
  %v484 = vtanh.pop %v483
  %486 = vrot.lane.b32.xlu0 %v484, 32
  %v487 = vpop.permute.xlu0 %486
  %v489 = vmul.f32 %v471, %v487
  %s490 = scalar_lea.vmem %s1, 8
  %v491 = vld [vmem:[%s490] sm:$0xff]
  %vm492 = vcmp.ne.f32.partialorder %v491, 0.0
  %s493 = scalar_lea.vmem %s1, 48
  %v494 = vld [vmem:[%s493] sm:$0xff]
  %vm495 = vcmp.ne.f32.partialorder %v494, 0.0
  %v496 = vsel %vm492, 1, 0
  %497 = vset.pattern.permute.xlu0 0
  %498 = vperm.xlu0 %497, %v496
  %v499 = vpop.permute.xlu0 %498
  %vm500 = vcmp.eq.s32.totalorder %v499, 1
  %v501 = vsel %vm500, %v452, %v342
  %v502 = vsel %vm500, %v446, %v343
  %v503 = vsel %vm495, 1, 0
  %504 = vset.pattern.permute.xlu0 0
  %505 = vperm.xlu0 %504, %v503
  %v506 = vpop.permute.xlu0 %505
  %vm507 = vcmp.eq.s32.totalorder %v506, 1
  %v508 = vsel %vm507, %v489, %v349
  %v509 = vsel %vm507, %v483, %v350
  %v510 = vpack.c.bf16 %v501, %v501
  %512 = vrot.lane.b32.xlu0 %v510, 64
  %v513 = vpop.permute.xlu0 %512
  %s515 = scalar_lea.vmem [#allocation3], 4
  %516 = vst.msk [vmem:[%s515] sm:$0xf] %vm356, %v513
  %v517 = vpack.c.bf16 %v508, %v508
  %519 = vrot.lane.b32.xlu0 %v517, 96
  %v520 = vpop.permute.xlu0 %519
  %s522 = scalar_lea.vmem [#allocation3], 24
  %523 = vst.msk [vmem:[%s522] sm:$0xf] %vm364, %v520
  %525 = vrot.lane.b32.xlu0 %v501, 64
  %v526 = vpop.permute.xlu0 %525
  %529 = vrot.lane.b32.xlu0 %v508, 96
  %v530 = vpop.permute.xlu0 %529
  %v532 = vsel %vm374, %v526, %v530
  %v533 = vpack.c.bf16 %v532, %v532
  %v535 = vsel %vm218, %v533, 0
  %537 = vmatpush.bf16.msra.mxu0 0
  %538 = vmatpush.bf16.msra.mxu0 0
  %539 = vmatpush.bf16.msra.mxu0 0
  %540 = vmatpush.bf16.msra.mxu0 0
  %541 = vmatpush.bf16.msra.mxu0 %v208
  %542 = vmatpush.bf16.msra.mxu0 %v206
  %543 = vmatpush.bf16.msra.mxu0 %v204
  %544 = vmatpush.bf16.msra.mxu0 %v202
  %545 = vmatmul.bf16.gmra.mxu0 %v535
  %v546 = vpop.f32.mrf.mxu0
  %v547 = vadd.f32 0.0, %v546
  %v548 = vpop.f32.mrf.mxu0
  %549 = vdwg.mxu0
  %550 = vmatpush.bf16.msra.mxu0 0
  %551 = vmatpush.bf16.msra.mxu0 0
  %552 = vmatpush.bf16.msra.mxu0 0
  %553 = vmatpush.bf16.msra.mxu0 0
  %554 = vmatpush.bf16.msra.mxu0 %v209
  %555 = vmatpush.bf16.msra.mxu0 %v207
  %556 = vmatpush.bf16.msra.mxu0 %v205
  %557 = vmatpush.bf16.msra.mxu0 %v203
  %558 = vmatmul.bf16.gmra.mxu0 %v535
  %v559 = vpop.f32.mrf.mxu0
  %v560 = vadd.f32 0.0, %v559
  %v561 = vpop.f32.mrf.mxu0
  %562 = vdwg.mxu0
  %s563 = smul.u32 2, 2
  %s564 = smul.addr %s563, 8
  %s565 = scalar_lea.vmem [#allocation2], %s564
  %v566 = vld [vmem:[%s565] sm:$0xff]
  %v567 = vadd.f32 %v566, %v547
  %s568 = smul.u32 5, 2
  %s569 = smul.addr %s568, 8
  %s570 = scalar_lea.vmem [#allocation2], %s569
  %v571 = vld [vmem:[%s570 + $0x8] sm:$0xff]
  %v572 = vadd.f32 %v571, %v560
  %v573 = vxor.u32 %v567, 2147483648
  %v574 = vmul.f32 %v573, 1.442695
  %v575 = vpow.pop %v574
  %v576 = vadd.f32 %v575, 1.0
  %v577 = vrcp.pop %v576
  %v578 = vmul.f32 %v576, %v577
  %v579 = vsub.f32 1.0, %v578
  %v580 = vmul.f32 %v577, %v579
  %v581 = vadd.f32 %v577, %v580
  %vm582 = vweird.f32 %v576
  %vm583 = vweird.f32 %v577
  %vm584 = vmor %vm582, %vm583
  %v585 = vsel %vm584, %v577, %v581
  %v586 = vand.u32 2147483647, %v576
  %vm587 = vcmp.eq.f32.partialorder %v586, 8.507059e+37
  %v588 = vand.u32 %v576, 2147483648
  %v589 = vor.u32 1.1754944e-38, %v588
  %v590 = vsel %vm587, %v589, %v585
  %v591 = vmul.f32 1.0, %v590
  %v592 = vtanh.pop %v567
  %v593 = vmul.f32 %v591, %v502
  %595 = vrot.lane.b32.xlu0 %v592, 32
  %v596 = vpop.permute.xlu0 %595
  %v598 = vmul.f32 %v591, %v596
  %600 = vrot.lane.b32.xlu0 %v598, 32
  %v601 = vpop.permute.xlu0 %600
  %v603 = vadd.f32 %v593, %v601
  %v604 = vtanh.pop %v603
  %606 = vrot.lane.b32.xlu0 %v604, 32
  %v607 = vpop.permute.xlu0 %606
  %v609 = vmul.f32 %v591, %v607
  %v610 = vxor.u32 %v572, 2147483648
  %v611 = vmul.f32 %v610, 1.442695
  %v612 = vpow.pop %v611
  %v613 = vadd.f32 %v612, 1.0
  %v614 = vrcp.pop %v613
  %v615 = vmul.f32 %v613, %v614
  %v616 = vsub.f32 1.0, %v615
  %v617 = vmul.f32 %v614, %v616
  %v618 = vadd.f32 %v614, %v617
  %vm619 = vweird.f32 %v613
  %vm620 = vweird.f32 %v614
  %vm621 = vmor %vm619, %vm620
  %v622 = vsel %vm621, %v614, %v618
  %v623 = vand.u32 2147483647, %v613
  %vm624 = vcmp.eq.f32.partialorder %v623, 8.507059e+37
  %v625 = vand.u32 %v613, 2147483648
  %v626 = vor.u32 1.1754944e-38, %v625
  %v627 = vsel %vm624, %v626, %v622
  %v628 = vmul.f32 1.0, %v627
  %v629 = vtanh.pop %v572
  %v630 = vmul.f32 %v628, %v509
  %632 = vrot.lane.b32.xlu0 %v629, 32
  %v633 = vpop.permute.xlu0 %632
  %v635 = vmul.f32 %v628, %v633
  %637 = vrot.lane.b32.xlu0 %v635, 32
  %v638 = vpop.permute.xlu0 %637
  %v640 = vadd.f32 %v630, %v638
  %v641 = vtanh.pop %v640
  %643 = vrot.lane.b32.xlu0 %v641, 32
  %v644 = vpop.permute.xlu0 %643
  %v646 = vmul.f32 %v628, %v644
  %s647 = scalar_lea.vmem %s1, 16
  %v648 = vld [vmem:[%s647] sm:$0xff]
  %vm649 = vcmp.ne.f32.partialorder %v648, 0.0
  %s650 = scalar_lea.vmem %s1, 40
  %v651 = vld [vmem:[%s650] sm:$0xff]
  %vm652 = vcmp.ne.f32.partialorder %v651, 0.0
  %v653 = vsel %vm649, 1, 0
  %654 = vset.pattern.permute.xlu0 0
  %655 = vperm.xlu0 %654, %v653
  %v656 = vpop.permute.xlu0 %655
  %vm657 = vcmp.eq.s32.totalorder %v656, 1
  %v658 = vsel %vm657, %v609, %v501
  %v659 = vsel %vm657, %v603, %v502
  %v660 = vsel %vm652, 1, 0
  %661 = vset.pattern.permute.xlu0 0
  %662 = vperm.xlu0 %661, %v660
  %v663 = vpop.permute.xlu0 %662
  %vm664 = vcmp.eq.s32.totalorder %v663, 1
  %v665 = vsel %vm664, %v646, %v508
  %v666 = vsel %vm664, %v640, %v509
  %v667 = vpack.c.bf16 %v658, %v658
  %669 = vrot.lane.b32.xlu0 %v667, 64
  %v670 = vpop.permute.xlu0 %669
  %s672 = scalar_lea.vmem [#allocation3], 8
  %673 = vst.msk [vmem:[%s672] sm:$0xf] %vm356, %v670
  %v674 = vpack.c.bf16 %v665, %v665
  %676 = vrot.lane.b32.xlu0 %v674, 96
  %v677 = vpop.permute.xlu0 %676
  %s679 = scalar_lea.vmem [#allocation3], 20
  %680 = vst.msk [vmem:[%s679] sm:$0xf] %vm364, %v677
  %682 = vrot.lane.b32.xlu0 %v658, 64
  %v683 = vpop.permute.xlu0 %682
  %686 = vrot.lane.b32.xlu0 %v665, 96
  %v687 = vpop.permute.xlu0 %686
  %v689 = vsel %vm374, %v683, %v687
  %v690 = vpack.c.bf16 %v689, %v689
  %v692 = vsel %vm218, %v690, 0
  %694 = vmatpush.bf16.msra.mxu0 0
  %695 = vmatpush.bf16.msra.mxu0 0
  %696 = vmatpush.bf16.msra.mxu0 0
  %697 = vmatpush.bf16.msra.mxu0 0
  %698 = vmatpush.bf16.msra.mxu0 %v208
  %699 = vmatpush.bf16.msra.mxu0 %v206
  %700 = vmatpush.bf16.msra.mxu0 %v204
  %701 = vmatpush.bf16.msra.mxu0 %v202
  %702 = vmatmul.bf16.gmra.mxu0 %v692
  %v703 = vpop.f32.mrf.mxu0
  %v704 = vadd.f32 0.0, %v703
  %v705 = vpop.f32.mrf.mxu0
  %706 = vdwg.mxu0
  %707 = vmatpush.bf16.msra.mxu0 0
  %708 = vmatpush.bf16.msra.mxu0 0
  %709 = vmatpush.bf16.msra.mxu0 0
  %710 = vmatpush.bf16.msra.mxu0 0
  %711 = vmatpush.bf16.msra.mxu0 %v209
  %712 = vmatpush.bf16.msra.mxu0 %v207
  %713 = vmatpush.bf16.msra.mxu0 %v205
  %714 = vmatpush.bf16.msra.mxu0 %v203
  %715 = vmatmul.bf16.gmra.mxu0 %v692
  %v716 = vpop.f32.mrf.mxu0
  %v717 = vadd.f32 0.0, %v716
  %v718 = vpop.f32.mrf.mxu0
  %719 = vdwg.mxu0
  %s720 = smul.u32 3, 2
  %s721 = smul.addr %s720, 8
  %s722 = scalar_lea.vmem [#allocation2], %s721
  %v723 = vld [vmem:[%s722] sm:$0xff]
  %v724 = vadd.f32 %v723, %v704
  %s725 = smul.u32 4, 2
  %s726 = smul.addr %s725, 8
  %s727 = scalar_lea.vmem [#allocation2], %s726
  %v728 = vld [vmem:[%s727 + $0x8] sm:$0xff]
  %v729 = vadd.f32 %v728, %v717
  %v730 = vxor.u32 %v724, 2147483648
  %v731 = vmul.f32 %v730, 1.442695
  %v732 = vpow.pop %v731
  %v733 = vadd.f32 %v732, 1.0
  %v734 = vrcp.pop %v733
  %v735 = vmul.f32 %v733, %v734
  %v736 = vsub.f32 1.0, %v735
  %v737 = vmul.f32 %v734, %v736
  %v738 = vadd.f32 %v734, %v737
  %vm739 = vweird.f32 %v733
  %vm740 = vweird.f32 %v734
  %vm741 = vmor %vm739, %vm740
  %v742 = vsel %vm741, %v734, %v738
  %v743 = vand.u32 2147483647, %v733
  %vm744 = vcmp.eq.f32.partialorder %v743, 8.507059e+37
  %v745 = vand.u32 %v733, 2147483648
  %v746 = vor.u32 1.1754944e-38, %v745
  %v747 = vsel %vm744, %v746, %v742
  %v748 = vmul.f32 1.0, %v747
  %v749 = vtanh.pop %v724
  %v750 = vmul.f32 %v748, %v659
  %752 = vrot.lane.b32.xlu0 %v749, 32
  %v753 = vpop.permute.xlu0 %752
  %v755 = vmul.f32 %v748, %v753
  %757 = vrot.lane.b32.xlu0 %v755, 32
  %v758 = vpop.permute.xlu0 %757
  %v760 = vadd.f32 %v750, %v758
  %v761 = vtanh.pop %v760
  %763 = vrot.lane.b32.xlu0 %v761, 32
  %v764 = vpop.permute.xlu0 %763
  %v766 = vmul.f32 %v748, %v764
  %v767 = vxor.u32 %v729, 2147483648
  %v768 = vmul.f32 %v767, 1.442695
  %v769 = vpow.pop %v768
  %v770 = vadd.f32 %v769, 1.0
  %v771 = vrcp.pop %v770
  %v772 = vmul.f32 %v770, %v771
  %v773 = vsub.f32 1.0, %v772
  %v774 = vmul.f32 %v771, %v773
  %v775 = vadd.f32 %v771, %v774
  %vm776 = vweird.f32 %v770
  %vm777 = vweird.f32 %v771
  %vm778 = vmor %vm776, %vm777
  %v779 = vsel %vm778, %v771, %v775
  %v780 = vand.u32 2147483647, %v770
  %vm781 = vcmp.eq.f32.partialorder %v780, 8.507059e+37
  %v782 = vand.u32 %v770, 2147483648
  %v783 = vor.u32 1.1754944e-38, %v782
  %v784 = vsel %vm781, %v783, %v779
  %v785 = vmul.f32 1.0, %v784
  %v786 = vtanh.pop %v729
  %v787 = vmul.f32 %v785, %v666
  %789 = vrot.lane.b32.xlu0 %v786, 32
  %v790 = vpop.permute.xlu0 %789
  %v792 = vmul.f32 %v785, %v790
  %794 = vrot.lane.b32.xlu0 %v792, 32
  %v795 = vpop.permute.xlu0 %794
  %v797 = vadd.f32 %v787, %v795
  %v798 = vtanh.pop %v797
  %800 = vrot.lane.b32.xlu0 %v798, 32
  %v801 = vpop.permute.xlu0 %800
  %v803 = vmul.f32 %v785, %v801
  %s804 = scalar_lea.vmem %s1, 24
  %v805 = vld [vmem:[%s804] sm:$0xff]
  %vm806 = vcmp.ne.f32.partialorder %v805, 0.0
  %s807 = scalar_lea.vmem %s1, 32
  %v808 = vld [vmem:[%s807] sm:$0xff]
  %vm809 = vcmp.ne.f32.partialorder %v808, 0.0
  %v810 = vsel %vm806, 1, 0
  %811 = vset.pattern.permute.xlu0 0
  %812 = vperm.xlu0 %811, %v810
  %v813 = vpop.permute.xlu0 %812
  %vm814 = vcmp.eq.s32.totalorder %v813, 1
  %v815 = vsel %vm814, %v766, %v658
  %v816 = vsel %vm814, %v760, %v659
  %v817 = vsel %vm809, 1, 0
  %818 = vset.pattern.permute.xlu0 0
  %819 = vperm.xlu0 %818, %v817
  %v820 = vpop.permute.xlu0 %819
  %vm821 = vcmp.eq.s32.totalorder %v820, 1
  %v822 = vsel %vm821, %v803, %v665
  %v823 = vsel %vm821, %v797, %v666
  %v824 = vpack.c.bf16 %v815, %v815
  %826 = vrot.lane.b32.xlu0 %v824, 64
  %v827 = vpop.permute.xlu0 %826
  %s829 = scalar_lea.vmem [#allocation3], 12
  %830 = vst.msk [vmem:[%s829] sm:$0xf] %vm356, %v827
  %v831 = vpack.c.bf16 %v822, %v822
  %833 = vrot.lane.b32.xlu0 %v831, 96
  %v834 = vpop.permute.xlu0 %833
  %s836 = scalar_lea.vmem [#allocation3], 16
  %837 = vst.msk [vmem:[%s836] sm:$0xf] %vm364, %v834
  %839 = vrot.lane.b32.xlu0 %v815, 64
  %v840 = vpop.permute.xlu0 %839
  %843 = vrot.lane.b32.xlu0 %v822, 96
  %v844 = vpop.permute.xlu0 %843
  %v846 = vsel %vm374, %v840, %v844
  %v847 = vpack.c.bf16 %v846, %v846
  %v849 = vsel %vm218, %v847, 0
  %851 = vmatpush.bf16.msra.mxu0 0
  %852 = vmatpush.bf16.msra.mxu0 0
  %853 = vmatpush.bf16.msra.mxu0 0
  %854 = vmatpush.bf16.msra.mxu0 0
  %855 = vmatpush.bf16.msra.mxu0 %v208
  %856 = vmatpush.bf16.msra.mxu0 %v206
  %857 = vmatpush.bf16.msra.mxu0 %v204
  %858 = vmatpush.bf16.msra.mxu0 %v202
  %859 = vmatmul.bf16.gmra.mxu0 %v849
  %v860 = vpop.f32.mrf.mxu0
  %v861 = vadd.f32 0.0, %v860
  %v862 = vpop.f32.mrf.mxu0
  %863 = vdwg.mxu0
  %864 = vmatpush.bf16.msra.mxu0 0
  %865 = vmatpush.bf16.msra.mxu0 0
  %866 = vmatpush.bf16.msra.mxu0 0
  %867 = vmatpush.bf16.msra.mxu0 0
  %868 = vmatpush.bf16.msra.mxu0 %v209
  %869 = vmatpush.bf16.msra.mxu0 %v207
  %870 = vmatpush.bf16.msra.mxu0 %v205
  %871 = vmatpush.bf16.msra.mxu0 %v203
  %872 = vmatmul.bf16.gmra.mxu0 %v849
  %v873 = vpop.f32.mrf.mxu0
  %v874 = vadd.f32 0.0, %v873
  %v875 = vpop.f32.mrf.mxu0
  %876 = vdwg.mxu0
  %v877 = vld [vmem:[%s727] sm:$0xff]
  %v878 = vadd.f32 %v877, %v861
  %v879 = vld [vmem:[%s722 + $0x8] sm:$0xff]
  %v880 = vadd.f32 %v879, %v874
  %v881 = vxor.u32 %v878, 2147483648
  %v882 = vmul.f32 %v881, 1.442695
  %v883 = vpow.pop %v882
  %v884 = vadd.f32 %v883, 1.0
  %v885 = vrcp.pop %v884
  %v886 = vmul.f32 %v884, %v885
  %v887 = vsub.f32 1.0, %v886
  %v888 = vmul.f32 %v885, %v887
  %v889 = vadd.f32 %v885, %v888
  %vm890 = vweird.f32 %v884
  %vm891 = vweird.f32 %v885
  %vm892 = vmor %vm890, %vm891
  %v893 = vsel %vm892, %v885, %v889
  %v894 = vand.u32 2147483647, %v884
  %vm895 = vcmp.eq.f32.partialorder %v894, 8.507059e+37
  %v896 = vand.u32 %v884, 2147483648
  %v897 = vor.u32 1.1754944e-38, %v896
  %v898 = vsel %vm895, %v897, %v893
  %v899 = vmul.f32 1.0, %v898
  %v900 = vtanh.pop %v878
  %v901 = vmul.f32 %v899, %v816
  %903 = vrot.lane.b32.xlu0 %v900, 32
  %v904 = vpop.permute.xlu0 %903
  %v906 = vmul.f32 %v899, %v904
  %908 = vrot.lane.b32.xlu0 %v906, 32
  %v909 = vpop.permute.xlu0 %908
  %v911 = vadd.f32 %v901, %v909
  %v912 = vtanh.pop %v911
  %914 = vrot.lane.b32.xlu0 %v912, 32
  %v915 = vpop.permute.xlu0 %914
  %v917 = vmul.f32 %v899, %v915
  %v918 = vxor.u32 %v880, 2147483648
  %v919 = vmul.f32 %v918, 1.442695
  %v920 = vpow.pop %v919
  %v921 = vadd.f32 %v920, 1.0
  %v922 = vrcp.pop %v921
  %v923 = vmul.f32 %v921, %v922
  %v924 = vsub.f32 1.0, %v923
  %v925 = vmul.f32 %v922, %v924
  %v926 = vadd.f32 %v922, %v925
  %vm927 = vweird.f32 %v921
  %vm928 = vweird.f32 %v922
  %vm929 = vmor %vm927, %vm928
  %v930 = vsel %vm929, %v922, %v926
  %v931 = vand.u32 2147483647, %v921
  %vm932 = vcmp.eq.f32.partialorder %v931, 8.507059e+37
  %v933 = vand.u32 %v921, 2147483648
  %v934 = vor.u32 1.1754944e-38, %v933
  %v935 = vsel %vm932, %v934, %v930
  %v936 = vmul.f32 1.0, %v935
  %v937 = vtanh.pop %v880
  %v938 = vmul.f32 %v936, %v823
  %940 = vrot.lane.b32.xlu0 %v937, 32
  %v941 = vpop.permute.xlu0 %940
  %v943 = vmul.f32 %v936, %v941
  %945 = vrot.lane.b32.xlu0 %v943, 32
  %v946 = vpop.permute.xlu0 %945
  %v948 = vadd.f32 %v938, %v946
  %v949 = vtanh.pop %v948
  %951 = vrot.lane.b32.xlu0 %v949, 32
  %v952 = vpop.permute.xlu0 %951
  %v954 = vmul.f32 %v936, %v952
  %v955 = vld [vmem:[%s807] sm:$0xff]
  %vm956 = vcmp.ne.f32.partialorder %v955, 0.0
  %v957 = vld [vmem:[%s804] sm:$0xff]
  %vm958 = vcmp.ne.f32.partialorder %v957, 0.0
  %v959 = vsel %vm956, 1, 0
  %960 = vset.pattern.permute.xlu0 0
  %961 = vperm.xlu0 %960, %v959
  %v962 = vpop.permute.xlu0 %961
  %vm963 = vcmp.eq.s32.totalorder %v962, 1
  %v964 = vsel %vm963, %v917, %v815
  %v965 = vsel %vm963, %v911, %v816
  %v966 = vsel %vm958, 1, 0
  %967 = vset.pattern.permute.xlu0 0
  %968 = vperm.xlu0 %967, %v966
  %v969 = vpop.permute.xlu0 %968
  %vm970 = vcmp.eq.s32.totalorder %v969, 1
  %v971 = vsel %vm970, %v954, %v822
  %v972 = vsel %vm970, %v948, %v823
  %v973 = vpack.c.bf16 %v964, %v964
  %975 = vrot.lane.b32.xlu0 %v973, 64
  %v976 = vpop.permute.xlu0 %975
  %978 = vst.msk [vmem:[%s836] sm:$0xf] %vm356, %v976
  %v979 = vpack.c.bf16 %v971, %v971
  %981 = vrot.lane.b32.xlu0 %v979, 96
  %v982 = vpop.permute.xlu0 %981
  %984 = vst.msk [vmem:[%s829] sm:$0xf] %vm364, %v982
  %986 = vrot.lane.b32.xlu0 %v964, 64
  %v987 = vpop.permute.xlu0 %986
  %990 = vrot.lane.b32.xlu0 %v971, 96
  %v991 = vpop.permute.xlu0 %990
  %v993 = vsel %vm374, %v987, %v991
  %v994 = vpack.c.bf16 %v993, %v993
  %v996 = vsel %vm218, %v994, 0
  %998 = vmatpush.bf16.msra.mxu0 0
  %999 = vmatpush.bf16.msra.mxu0 0
  %1000 = vmatpush.bf16.msra.mxu0 0
  %1001 = vmatpush.bf16.msra.mxu0 0
  %1002 = vmatpush.bf16.msra.mxu0 %v208
  %1003 = vmatpush.bf16.msra.mxu0 %v206
  %1004 = vmatpush.bf16.msra.mxu0 %v204
  %1005 = vmatpush.bf16.msra.mxu0 %v202
  %1006 = vmatmul.bf16.gmra.mxu0 %v996
  %v1007 = vpop.f32.mrf.mxu0
  %v1008 = vadd.f32 0.0, %v1007
  %v1009 = vpop.f32.mrf.mxu0
  %1010 = vdwg.mxu0
  %1011 = vmatpush.bf16.msra.mxu0 0
  %1012 = vmatpush.bf16.msra.mxu0 0
  %1013 = vmatpush.bf16.msra.mxu0 0
  %1014 = vmatpush.bf16.msra.mxu0 0
  %1015 = vmatpush.bf16.msra.mxu0 %v209
  %1016 = vmatpush.bf16.msra.mxu0 %v207
  %1017 = vmatpush.bf16.msra.mxu0 %v205
  %1018 = vmatpush.bf16.msra.mxu0 %v203
  %1019 = vmatmul.bf16.gmra.mxu0 %v996
  %v1020 = vpop.f32.mrf.mxu0
  %v1021 = vadd.f32 0.0, %v1020
  %v1022 = vpop.f32.mrf.mxu0
  %1023 = vdwg.mxu0
  %v1024 = vld [vmem:[%s570] sm:$0xff]
  %v1025 = vadd.f32 %v1024, %v1008
  %v1026 = vld [vmem:[%s565 + $0x8] sm:$0xff]
  %v1027 = vadd.f32 %v1026, %v1021
  %v1028 = vxor.u32 %v1025, 2147483648
  %v1029 = vmul.f32 %v1028, 1.442695
  %v1030 = vpow.pop %v1029
  %v1031 = vadd.f32 %v1030, 1.0
  %v1032 = vrcp.pop %v1031
  %v1033 = vmul.f32 %v1031, %v1032
  %v1034 = vsub.f32 1.0, %v1033
  %v1035 = vmul.f32 %v1032, %v1034
  %v1036 = vadd.f32 %v1032, %v1035
  %vm1037 = vweird.f32 %v1031
  %vm1038 = vweird.f32 %v1032
  %vm1039 = vmor %vm1037, %vm1038
  %v1040 = vsel %vm1039, %v1032, %v1036
  %v1041 = vand.u32 2147483647, %v1031
  %vm1042 = vcmp.eq.f32.partialorder %v1041, 8.507059e+37
  %v1043 = vand.u32 %v1031, 2147483648
  %v1044 = vor.u32 1.1754944e-38, %v1043
  %v1045 = vsel %vm1042, %v1044, %v1040
  %v1046 = vmul.f32 1.0, %v1045
  %v1047 = vtanh.pop %v1025
  %v1048 = vmul.f32 %v1046, %v965
  %1050 = vrot.lane.b32.xlu0 %v1047, 32
  %v1051 = vpop.permute.xlu0 %1050
  %v1053 = vmul.f32 %v1046, %v1051
  %1055 = vrot.lane.b32.xlu0 %v1053, 32
  %v1056 = vpop.permute.xlu0 %1055
  %v1058 = vadd.f32 %v1048, %v1056
  %v1059 = vtanh.pop %v1058
  %1061 = vrot.lane.b32.xlu0 %v1059, 32
  %v1062 = vpop.permute.xlu0 %1061
  %v1064 = vmul.f32 %v1046, %v1062
  %v1065 = vxor.u32 %v1027, 2147483648
  %v1066 = vmul.f32 %v1065, 1.442695
  %v1067 = vpow.pop %v1066
  %v1068 = vadd.f32 %v1067, 1.0
  %v1069 = vrcp.pop %v1068
  %v1070 = vmul.f32 %v1068, %v1069
  %v1071 = vsub.f32 1.0, %v1070
  %v1072 = vmul.f32 %v1069, %v1071
  %v1073 = vadd.f32 %v1069, %v1072
  %vm1074 = vweird.f32 %v1068
  %vm1075 = vweird.f32 %v1069
  %vm1076 = vmor %vm1074, %vm1075
  %v1077 = vsel %vm1076, %v1069, %v1073
  %v1078 = vand.u32 2147483647, %v1068
  %vm1079 = vcmp.eq.f32.partialorder %v1078, 8.507059e+37
  %v1080 = vand.u32 %v1068, 2147483648
  %v1081 = vor.u32 1.1754944e-38, %v1080
  %v1082 = vsel %vm1079, %v1081, %v1077
  %v1083 = vmul.f32 1.0, %v1082
  %v1084 = vtanh.pop %v1027
  %v1085 = vmul.f32 %v1083, %v972
  %1087 = vrot.lane.b32.xlu0 %v1084, 32
  %v1088 = vpop.permute.xlu0 %1087
  %v1090 = vmul.f32 %v1083, %v1088
  %1092 = vrot.lane.b32.xlu0 %v1090, 32
  %v1093 = vpop.permute.xlu0 %1092
  %v1095 = vadd.f32 %v1085, %v1093
  %v1096 = vtanh.pop %v1095
  %1098 = vrot.lane.b32.xlu0 %v1096, 32
  %v1099 = vpop.permute.xlu0 %1098
  %v1101 = vmul.f32 %v1083, %v1099
  %v1102 = vld [vmem:[%s650] sm:$0xff]
  %vm1103 = vcmp.ne.f32.partialorder %v1102, 0.0
  %v1104 = vld [vmem:[%s647] sm:$0xff]
  %vm1105 = vcmp.ne.f32.partialorder %v1104, 0.0
  %v1106 = vsel %vm1103, 1, 0
  %1107 = vset.pattern.permute.xlu0 0
  %1108 = vperm.xlu0 %1107, %v1106
  %v1109 = vpop.permute.xlu0 %1108
  %vm1110 = vcmp.eq.s32.totalorder %v1109, 1
  %v1111 = vsel %vm1110, %v1064, %v964
  %v1112 = vsel %vm1110, %v1058, %v965
  %v1113 = vsel %vm1105, 1, 0
  %1114 = vset.pattern.permute.xlu0 0
  %1115 = vperm.xlu0 %1114, %v1113
  %v1116 = vpop.permute.xlu0 %1115
  %vm1117 = vcmp.eq.s32.totalorder %v1116, 1
  %v1118 = vsel %vm1117, %v1101, %v971
  %v1119 = vsel %vm1117, %v1095, %v972
  %v1120 = vpack.c.bf16 %v1111, %v1111
  %1122 = vrot.lane.b32.xlu0 %v1120, 64
  %v1123 = vpop.permute.xlu0 %1122
  %1125 = vst.msk [vmem:[%s679] sm:$0xf] %vm356, %v1123
  %v1126 = vpack.c.bf16 %v1118, %v1118
  %1128 = vrot.lane.b32.xlu0 %v1126, 96
  %v1129 = vpop.permute.xlu0 %1128
  %1131 = vst.msk [vmem:[%s672] sm:$0xf] %vm364, %v1129
  %1133 = vrot.lane.b32.xlu0 %v1111, 64
  %v1134 = vpop.permute.xlu0 %1133
  %1137 = vrot.lane.b32.xlu0 %v1118, 96
  %v1138 = vpop.permute.xlu0 %1137
  %v1140 = vsel %vm374, %v1134, %v1138
  %v1141 = vpack.c.bf16 %v1140, %v1140
  %v1143 = vsel %vm218, %v1141, 0
  %1145 = vmatpush.bf16.msra.mxu0 0
  %1146 = vmatpush.bf16.msra.mxu0 0
  %1147 = vmatpush.bf16.msra.mxu0 0
  %1148 = vmatpush.bf16.msra.mxu0 0
  %1149 = vmatpush.bf16.msra.mxu0 %v208
  %1150 = vmatpush.bf16.msra.mxu0 %v206
  %1151 = vmatpush.bf16.msra.mxu0 %v204
  %1152 = vmatpush.bf16.msra.mxu0 %v202
  %1153 = vmatmul.bf16.gmra.mxu0 %v1143
  %v1154 = vpop.f32.mrf.mxu0
  %v1155 = vadd.f32 0.0, %v1154
  %v1156 = vpop.f32.mrf.mxu0
  %1157 = vdwg.mxu0
  %1158 = vmatpush.bf16.msra.mxu0 0
  %1159 = vmatpush.bf16.msra.mxu0 0
  %1160 = vmatpush.bf16.msra.mxu0 0
  %1161 = vmatpush.bf16.msra.mxu0 0
  %1162 = vmatpush.bf16.msra.mxu0 %v209
  %1163 = vmatpush.bf16.msra.mxu0 %v207
  %1164 = vmatpush.bf16.msra.mxu0 %v205
  %1165 = vmatpush.bf16.msra.mxu0 %v203
  %1166 = vmatmul.bf16.gmra.mxu0 %v1143
  %v1167 = vpop.f32.mrf.mxu0
  %v1168 = vadd.f32 0.0, %v1167
  %v1169 = vpop.f32.mrf.mxu0
  %1170 = vdwg.mxu0
  %v1171 = vld [vmem:[%s413] sm:$0xff]
  %v1172 = vadd.f32 %v1171, %v1155
  %v1173 = vld [vmem:[%s408 + $0x8] sm:$0xff]
  %v1174 = vadd.f32 %v1173, %v1168
  %v1175 = vxor.u32 %v1172, 2147483648
  %v1176 = vmul.f32 %v1175, 1.442695
  %v1177 = vpow.pop %v1176
  %v1178 = vadd.f32 %v1177, 1.0
  %v1179 = vrcp.pop %v1178
  %v1180 = vmul.f32 %v1178, %v1179
  %v1181 = vsub.f32 1.0, %v1180
  %v1182 = vmul.f32 %v1179, %v1181
  %v1183 = vadd.f32 %v1179, %v1182
  %vm1184 = vweird.f32 %v1178
  %vm1185 = vweird.f32 %v1179
  %vm1186 = vmor %vm1184, %vm1185
  %v1187 = vsel %vm1186, %v1179, %v1183
  %v1188 = vand.u32 2147483647, %v1178
  %vm1189 = vcmp.eq.f32.partialorder %v1188, 8.507059e+37
  %v1190 = vand.u32 %v1178, 2147483648
  %v1191 = vor.u32 1.1754944e-38, %v1190
  %v1192 = vsel %vm1189, %v1191, %v1187
  %v1193 = vmul.f32 1.0, %v1192
  %v1194 = vtanh.pop %v1172
  %v1195 = vmul.f32 %v1193, %v1112
  %1197 = vrot.lane.b32.xlu0 %v1194, 32
  %v1198 = vpop.permute.xlu0 %1197
  %v1200 = vmul.f32 %v1193, %v1198
  %1202 = vrot.lane.b32.xlu0 %v1200, 32
  %v1203 = vpop.permute.xlu0 %1202
  %v1205 = vadd.f32 %v1195, %v1203
  %v1206 = vtanh.pop %v1205
  %1208 = vrot.lane.b32.xlu0 %v1206, 32
  %v1209 = vpop.permute.xlu0 %1208
  %v1211 = vmul.f32 %v1193, %v1209
  %v1212 = vxor.u32 %v1174, 2147483648
  %v1213 = vmul.f32 %v1212, 1.442695
  %v1214 = vpow.pop %v1213
  %v1215 = vadd.f32 %v1214, 1.0
  %v1216 = vrcp.pop %v1215
  %v1217 = vmul.f32 %v1215, %v1216
  %v1218 = vsub.f32 1.0, %v1217
  %v1219 = vmul.f32 %v1216, %v1218
  %v1220 = vadd.f32 %v1216, %v1219
  %vm1221 = vweird.f32 %v1215
  %vm1222 = vweird.f32 %v1216
  %vm1223 = vmor %vm1221, %vm1222
  %v1224 = vsel %vm1223, %v1216, %v1220
  %v1225 = vand.u32 2147483647, %v1215
  %vm1226 = vcmp.eq.f32.partialorder %v1225, 8.507059e+37
  %v1227 = vand.u32 %v1215, 2147483648
  %v1228 = vor.u32 1.1754944e-38, %v1227
  %v1229 = vsel %vm1226, %v1228, %v1224
  %v1230 = vmul.f32 1.0, %v1229
  %v1231 = vtanh.pop %v1174
  %v1232 = vmul.f32 %v1230, %v1119
  %1234 = vrot.lane.b32.xlu0 %v1231, 32
  %v1235 = vpop.permute.xlu0 %1234
  %v1237 = vmul.f32 %v1230, %v1235
  %1239 = vrot.lane.b32.xlu0 %v1237, 32
  %v1240 = vpop.permute.xlu0 %1239
  %v1242 = vadd.f32 %v1232, %v1240
  %v1243 = vtanh.pop %v1242
  %1245 = vrot.lane.b32.xlu0 %v1243, 32
  %v1246 = vpop.permute.xlu0 %1245
  %v1248 = vmul.f32 %v1230, %v1246
  %v1249 = vld [vmem:[%s493] sm:$0xff]
  %vm1250 = vcmp.ne.f32.partialorder %v1249, 0.0
  %v1251 = vld [vmem:[%s490] sm:$0xff]
  %vm1252 = vcmp.ne.f32.partialorder %v1251, 0.0
  %v1253 = vsel %vm1250, 1, 0
  %1254 = vset.pattern.permute.xlu0 0
  %1255 = vperm.xlu0 %1254, %v1253
  %v1256 = vpop.permute.xlu0 %1255
  %vm1257 = vcmp.eq.s32.totalorder %v1256, 1
  %v1258 = vsel %vm1257, %v1211, %v1111
  %v1259 = vsel %vm1257, %v1205, %v1112
  %v1260 = vsel %vm1252, 1, 0
  %1261 = vset.pattern.permute.xlu0 0
  %1262 = vperm.xlu0 %1261, %v1260
  %v1263 = vpop.permute.xlu0 %1262
  %vm1264 = vcmp.eq.s32.totalorder %v1263, 1
  %v1265 = vsel %vm1264, %v1248, %v1118
  %v1266 = vsel %vm1264, %v1242, %v1119
  %v1267 = vpack.c.bf16 %v1258, %v1258
  %1269 = vrot.lane.b32.xlu0 %v1267, 64
  %v1270 = vpop.permute.xlu0 %1269
  %1272 = vst.msk [vmem:[%s522] sm:$0xf] %vm356, %v1270
  %v1273 = vpack.c.bf16 %v1265, %v1265
  %1275 = vrot.lane.b32.xlu0 %v1273, 96
  %v1276 = vpop.permute.xlu0 %1275
  %1278 = vst.msk [vmem:[%s515] sm:$0xf] %vm364, %v1276
  %1280 = vrot.lane.b32.xlu0 %v1258, 64
  %v1281 = vpop.permute.xlu0 %1280
  %1284 = vrot.lane.b32.xlu0 %v1265, 96
  %v1285 = vpop.permute.xlu0 %1284
  %v1287 = vsel %vm374, %v1281, %v1285
  %v1288 = vpack.c.bf16 %v1287, %v1287
  %v1290 = vsel %vm218, %v1288, 0
  %1292 = vmatpush.bf16.msra.mxu0 0
  %1293 = vmatpush.bf16.msra.mxu0 0
  %1294 = vmatpush.bf16.msra.mxu0 0
  %1295 = vmatpush.bf16.msra.mxu0 0
  %1296 = vmatpush.bf16.msra.mxu0 %v208
  %1297 = vmatpush.bf16.msra.mxu0 %v206
  %1298 = vmatpush.bf16.msra.mxu0 %v204
  %1299 = vmatpush.bf16.msra.mxu0 %v202
  %1300 = vmatmul.bf16.gmra.mxu0 %v1290
  %v1301 = vpop.f32.mrf.mxu0
  %v1302 = vadd.f32 0.0, %v1301
  %v1303 = vpop.f32.mrf.mxu0
  %1304 = vdwg.mxu0
  %1305 = vmatpush.bf16.msra.mxu0 0
  %1306 = vmatpush.bf16.msra.mxu0 0
  %1307 = vmatpush.bf16.msra.mxu0 0
  %1308 = vmatpush.bf16.msra.mxu0 0
  %1309 = vmatpush.bf16.msra.mxu0 %v209
  %1310 = vmatpush.bf16.msra.mxu0 %v207
  %1311 = vmatpush.bf16.msra.mxu0 %v205
  %1312 = vmatpush.bf16.msra.mxu0 %v203
  %1313 = vmatmul.bf16.gmra.mxu0 %v1290
  %v1314 = vpop.f32.mrf.mxu0
  %v1315 = vadd.f32 0.0, %v1314
  %v1316 = vpop.f32.mrf.mxu0
  %1317 = vdwg.mxu0
  %v1318 = vld [vmem:[%s255] sm:$0xff]
  %v1319 = vadd.f32 %v1318, %v1302
  %v1320 = vld [vmem:[%s250 + $0x8] sm:$0xff]
  %v1321 = vadd.f32 %v1320, %v1315
  %v1322 = vxor.u32 %v1319, 2147483648
  %v1323 = vmul.f32 %v1322, 1.442695
  %v1324 = vpow.pop %v1323
  %v1325 = vadd.f32 %v1324, 1.0
  %v1326 = vrcp.pop %v1325
  %v1327 = vmul.f32 %v1325, %v1326
  %v1328 = vsub.f32 1.0, %v1327
  %v1329 = vmul.f32 %v1326, %v1328
  %v1330 = vadd.f32 %v1326, %v1329
  %vm1331 = vweird.f32 %v1325
  %vm1332 = vweird.f32 %v1326
  %vm1333 = vmor %vm1331, %vm1332
  %v1334 = vsel %vm1333, %v1326, %v1330
  %v1335 = vand.u32 2147483647, %v1325
  %vm1336 = vcmp.eq.f32.partialorder %v1335, 8.507059e+37
  %v1337 = vand.u32 %v1325, 2147483648
  %v1338 = vor.u32 1.1754944e-38, %v1337
  %v1339 = vsel %vm1336, %v1338, %v1334
  %v1340 = vmul.f32 1.0, %v1339
  %v1341 = vtanh.pop %v1319
  %v1342 = vmul.f32 %v1340, %v1259
  %1344 = vrot.lane.b32.xlu0 %v1341, 32
  %v1345 = vpop.permute.xlu0 %1344
  %v1347 = vmul.f32 %v1340, %v1345
  %1349 = vrot.lane.b32.xlu0 %v1347, 32
  %v1350 = vpop.permute.xlu0 %1349
  %v1352 = vadd.f32 %v1342, %v1350
  %v1353 = vtanh.pop %v1352
  %1355 = vrot.lane.b32.xlu0 %v1353, 32
  %v1356 = vpop.permute.xlu0 %1355
  %v1358 = vmul.f32 %v1340, %v1356
  %v1359 = vxor.u32 %v1321, 2147483648
  %v1360 = vmul.f32 %v1359, 1.442695
  %v1361 = vpow.pop %v1360
  %v1362 = vadd.f32 %v1361, 1.0
  %v1363 = vrcp.pop %v1362
  %v1364 = vmul.f32 %v1362, %v1363
  %v1365 = vsub.f32 1.0, %v1364
  %v1366 = vmul.f32 %v1363, %v1365
  %v1367 = vadd.f32 %v1363, %v1366
  %vm1368 = vweird.f32 %v1362
  %vm1369 = vweird.f32 %v1363
  %vm1370 = vmor %vm1368, %vm1369
  %v1371 = vsel %vm1370, %v1363, %v1367
  %v1372 = vand.u32 2147483647, %v1362
  %vm1373 = vcmp.eq.f32.partialorder %v1372, 8.507059e+37
  %v1374 = vand.u32 %v1362, 2147483648
  %v1375 = vor.u32 1.1754944e-38, %v1374
  %v1376 = vsel %vm1373, %v1375, %v1371
  %v1377 = vmul.f32 1.0, %v1376
  %v1378 = vtanh.pop %v1321
  %v1379 = vmul.f32 %v1377, %v1266
  %1381 = vrot.lane.b32.xlu0 %v1378, 32
  %v1382 = vpop.permute.xlu0 %1381
  %v1384 = vmul.f32 %v1377, %v1382
  %1386 = vrot.lane.b32.xlu0 %v1384, 32
  %v1387 = vpop.permute.xlu0 %1386
  %v1389 = vadd.f32 %v1379, %v1387
  %v1390 = vtanh.pop %v1389
  %1392 = vrot.lane.b32.xlu0 %v1390, 32
  %v1393 = vpop.permute.xlu0 %1392
  %v1395 = vmul.f32 %v1377, %v1393
  %v1396 = vld [vmem:[%s334] sm:$0xff]
  %vm1397 = vcmp.ne.f32.partialorder %v1396, 0.0
  %v1398 = vld [vmem:[%s1] sm:$0xff]
  %vm1399 = vcmp.ne.f32.partialorder %v1398, 0.0
  %v1400 = vsel %vm1397, 1, 0
  %1401 = vset.pattern.permute.xlu0 0
  %1402 = vperm.xlu0 %1401, %v1400
  %v1403 = vpop.permute.xlu0 %1402
  %vm1404 = vcmp.eq.s32.totalorder %v1403, 1
  %v1405 = vsel %vm1404, %v1358, %v1258
  %v1406 = vsel %vm1399, 1, 0
  %1407 = vset.pattern.permute.xlu0 0
  %1408 = vperm.xlu0 %1407, %v1406
  %v1409 = vpop.permute.xlu0 %1408
  %vm1410 = vcmp.eq.s32.totalorder %v1409, 1
  %v1411 = vsel %vm1410, %v1395, %v1265
  %v1412 = vpack.c.bf16 %v1405, %v1405
  %1414 = vrot.lane.b32.xlu0 %v1412, 64
  %v1415 = vpop.permute.xlu0 %1414
  %1417 = vst.msk [vmem:[%s363] sm:$0xf] %vm356, %v1415
  %v1418 = vpack.c.bf16 %v1411, %v1411
  %1420 = vrot.lane.b32.xlu0 %v1418, 96
  %v1421 = vpop.permute.xlu0 %1420
  %1423 = vst.msk [vmem:[#allocation3] sm:$0xf] %vm364, %v1421
  %v1424 = vld [vmem:[#allocation3] sm:$0xf]
  %v1425 = vld [vmem:[#allocation3 + $0x4] sm:$0xf]
  %v1426 = vld [vmem:[#allocation3 + $0x8] sm:$0xf]
  %v1427 = vld [vmem:[#allocation3 + $0xc] sm:$0xf]
  %v1428 = vld [vmem:[#allocation3 + $0x10] sm:$0xf]
  %v1429 = vld [vmem:[#allocation3 + $0x14] sm:$0xf]
  %v1430 = vld [vmem:[#allocation3 + $0x18] sm:$0xf]
  %v1431 = vld [vmem:[#allocation3 + $0x1c] sm:$0xf]
  %v1432 = vld [vmem:[%s5] sm:$0xff]
  %v1433 = vld [vmem:[%s5 + $0x8] sm:$0xff]
  %v1434 = vld [vmem:[%s5 + $0x10] sm:$0xff]
  %v1435 = vld [vmem:[%s5 + $0x18] sm:$0xff]
  %v1436 = vld [vmem:[%s5 + $0x20] sm:$0xff]
  %v1437 = vld [vmem:[%s5 + $0x28] sm:$0xff]
  %v1438 = vld [vmem:[%s5 + $0x30] sm:$0xff]
  %v1439 = vld [vmem:[%s5 + $0x38] sm:$0xff]
  %v1440 = vld [vmem:[%s7] sm:$0x3]
  %v1442 = vperm.slane %v1440, 0
  %v1443 = vperm.slane %v1440, 1
  %v1454 = vunpack.c.l.b16 %v1424
  %v1455 = vunpack.c.l.b16 %v1425
  %v1456 = vunpack.c.l.b16 %v1426
  %v1457 = vunpack.c.l.b16 %v1427
  %v1458 = vunpack.c.l.b16 %v1428
  %v1459 = vunpack.c.l.b16 %v1429
  %v1460 = vunpack.c.l.b16 %v1430
  %v1461 = vunpack.c.l.b16 %v1431
  %v1462 = vpack.c.b16 %v1455, %v1454
  %v1463 = vpack.c.b16 %v1457, %v1456
  %v1464 = vpack.c.b16 %v1459, %v1458
  %v1465 = vpack.c.b16 %v1461, %v1460
  %v1474 = vunpack.c.l.b16 %v1432
  %v1475 = vunpack.c.h.b16 %v1432
  %v1476 = vunpack.c.l.b16 %v1433
  %v1477 = vunpack.c.h.b16 %v1433
  %v1478 = vunpack.c.l.b16 %v1434
  %v1479 = vunpack.c.h.b16 %v1434
  %v1480 = vunpack.c.l.b16 %v1435
  %v1481 = vunpack.c.h.b16 %v1435
  %v1482 = vunpack.c.l.b16 %v1436
  %v1483 = vunpack.c.h.b16 %v1436
  %v1484 = vunpack.c.l.b16 %v1437
  %v1485 = vunpack.c.h.b16 %v1437
  %v1486 = vunpack.c.l.b16 %v1438
  %v1487 = vunpack.c.h.b16 %v1438
  %v1488 = vunpack.c.l.b16 %v1439
  %v1489 = vunpack.c.h.b16 %v1439
  %v1490 = vpack.c.b16 %v1476, %v1474
  %v1491 = vpack.c.b16 %v1477, %v1475
  %v1492 = vpack.c.b16 %v1480, %v1478
  %v1493 = vpack.c.b16 %v1481, %v1479
  %v1494 = vpack.c.b16 %v1484, %v1482
  %v1495 = vpack.c.b16 %v1485, %v1483
  %v1496 = vpack.c.b16 %v1488, %v1486
  %v1497 = vpack.c.b16 %v1489, %v1487
  %v1507 = vsel %vm218, %v1462, 0
  %v1510 = vsel %vm218, %v1463, 0
  %v1513 = vsel %vm218, %v1464, 0
  %v1516 = vsel %vm218, %v1465, 0
  %1518 = vmatpush.bf16.msra.mxu0 0
  %1519 = vmatpush.bf16.msra.mxu0 0
  %1520 = vmatpush.bf16.msra.mxu0 0
  %1521 = vmatpush.bf16.msra.mxu0 0
  %1522 = vmatpush.bf16.msra.mxu0 %v1496
  %1523 = vmatpush.bf16.msra.mxu0 %v1494
  %1524 = vmatpush.bf16.msra.mxu0 %v1492
  %1525 = vmatpush.bf16.msra.mxu0 %v1490
  %1526 = vmatmul.bf16.gmra.mxu0 %v1507
  %v1527 = vpop.f32.mrf.mxu0
  %v1528 = vadd.f32 %v1442, %v1527
  %v1529 = vpop.f32.mrf.mxu0
  %v1530 = vadd.f32 %v1442, %v1529
  %1531 = vmatmul.bf16.gmra.mxu0 %v1510
  %v1532 = vpop.f32.mrf.mxu0
  %v1533 = vadd.f32 %v1442, %v1532
  %v1534 = vpop.f32.mrf.mxu0
  %v1535 = vadd.f32 %v1442, %v1534
  %1536 = vmatmul.bf16.gmra.mxu0 %v1513
  %v1537 = vpop.f32.mrf.mxu0
  %v1538 = vadd.f32 %v1442, %v1537
  %v1539 = vpop.f32.mrf.mxu0
  %v1540 = vadd.f32 %v1442, %v1539
  %1541 = vmatmul.bf16.gmra.mxu0 %v1516
  %v1542 = vpop.f32.mrf.mxu0
  %v1543 = vadd.f32 %v1442, %v1542
  %v1544 = vpop.f32.mrf.mxu0
  %v1545 = vadd.f32 %v1442, %v1544
  %1546 = vdwg.mxu0
  %1547 = vmatpush.bf16.msra.mxu0 0
  %1548 = vmatpush.bf16.msra.mxu0 0
  %1549 = vmatpush.bf16.msra.mxu0 0
  %1550 = vmatpush.bf16.msra.mxu0 0
  %1551 = vmatpush.bf16.msra.mxu0 %v1497
  %1552 = vmatpush.bf16.msra.mxu0 %v1495
  %1553 = vmatpush.bf16.msra.mxu0 %v1493
  %1554 = vmatpush.bf16.msra.mxu0 %v1491
  %1555 = vmatmul.bf16.gmra.mxu0 %v1507
  %v1556 = vpop.f32.mrf.mxu0
  %v1557 = vadd.f32 %v1443, %v1556
  %v1558 = vpop.f32.mrf.mxu0
  %v1559 = vadd.f32 %v1443, %v1558
  %1560 = vmatmul.bf16.gmra.mxu0 %v1510
  %v1561 = vpop.f32.mrf.mxu0
  %v1562 = vadd.f32 %v1443, %v1561
  %v1563 = vpop.f32.mrf.mxu0
  %v1564 = vadd.f32 %v1443, %v1563
  %1565 = vmatmul.bf16.gmra.mxu0 %v1513
  %v1566 = vpop.f32.mrf.mxu0
  %v1567 = vadd.f32 %v1443, %v1566
  %v1568 = vpop.f32.mrf.mxu0
  %v1569 = vadd.f32 %v1443, %v1568
  %1570 = vmatmul.bf16.gmra.mxu0 %v1516
  %v1571 = vpop.f32.mrf.mxu0
  %v1572 = vadd.f32 %v1443, %v1571
  %v1573 = vpop.f32.mrf.mxu0
  %v1574 = vadd.f32 %v1443, %v1573
  %1575 = vdwg.mxu0
  %1576 = vst [vmem:[#allocation2] sm:$0xff] %v1528
  %1577 = vst [vmem:[#allocation2 + $0x8] sm:$0xff] %v1557
  %1578 = vst [vmem:[#allocation2 + $0x10] sm:$0xff] %v1530
  %1579 = vst [vmem:[#allocation2 + $0x18] sm:$0xff] %v1559
  %1580 = vst [vmem:[#allocation2 + $0x20] sm:$0xff] %v1533
  %1581 = vst [vmem:[#allocation2 + $0x28] sm:$0xff] %v1562
  %1582 = vst [vmem:[#allocation2 + $0x30] sm:$0xff] %v1535
  %1583 = vst [vmem:[#allocation2 + $0x38] sm:$0xff] %v1564
  %1584 = vst [vmem:[#allocation2 + $0x40] sm:$0xff] %v1538
  %1585 = vst [vmem:[#allocation2 + $0x48] sm:$0xff] %v1567
  %1586 = vst [vmem:[#allocation2 + $0x50] sm:$0xff] %v1540
  %1587 = vst [vmem:[#allocation2 + $0x58] sm:$0xff] %v1569
  %1588 = vst [vmem:[#allocation2 + $0x60] sm:$0xff] %v1543
  %1589 = vst [vmem:[#allocation2 + $0x68] sm:$0xff] %v1572
  %1590 = vst [vmem:[#allocation2 + $0x70] sm:$0xff] %v1545
  %1591 = vst [vmem:[#allocation2 + $0x78] sm:$0xff] %v1574
  %v1592 = vld [vmem:[%s6] sm:$0xff]
  %v1593 = vld [vmem:[%s6 + $0x8] sm:$0xff]
  %v1594 = vld [vmem:[%s6 + $0x10] sm:$0xff]
  %v1595 = vld [vmem:[%s6 + $0x18] sm:$0xff]
  %v1596 = vld [vmem:[%s6 + $0x20] sm:$0xff]
  %v1597 = vld [vmem:[%s6 + $0x28] sm:$0xff]
  %v1598 = vld [vmem:[%s6 + $0x30] sm:$0xff]
  %v1599 = vld [vmem:[%s6 + $0x38] sm:$0xff]
  %v1608 = vunpack.c.l.b16 %v1592
  %v1609 = vunpack.c.h.b16 %v1592
  %v1610 = vunpack.c.l.b16 %v1593
  %v1611 = vunpack.c.h.b16 %v1593
  %v1612 = vunpack.c.l.b16 %v1594
  %v1613 = vunpack.c.h.b16 %v1594
  %v1614 = vunpack.c.l.b16 %v1595
  %v1615 = vunpack.c.h.b16 %v1595
  %v1616 = vunpack.c.l.b16 %v1596
  %v1617 = vunpack.c.h.b16 %v1596
  %v1618 = vunpack.c.l.b16 %v1597
  %v1619 = vunpack.c.h.b16 %v1597
  %v1620 = vunpack.c.l.b16 %v1598
  %v1621 = vunpack.c.h.b16 %v1598
  %v1622 = vunpack.c.l.b16 %v1599
  %v1623 = vunpack.c.h.b16 %v1599
  %v1624 = vpack.c.b16 %v1610, %v1608
  %v1625 = vpack.c.b16 %v1611, %v1609
  %v1626 = vpack.c.b16 %v1614, %v1612
  %v1627 = vpack.c.b16 %v1615, %v1613
  %v1628 = vpack.c.b16 %v1618, %v1616
  %v1629 = vpack.c.b16 %v1619, %v1617
  %v1630 = vpack.c.b16 %v1622, %v1620
  %v1631 = vpack.c.b16 %v1623, %v1621
  %1640 = vmatpush.bf16.msra.mxu0 0
  %1641 = vmatpush.bf16.msra.mxu0 0
  %1642 = vmatpush.bf16.msra.mxu0 0
  %1643 = vmatpush.bf16.msra.mxu0 0
  %1644 = vmatpush.bf16.msra.mxu0 %v1630
  %1645 = vmatpush.bf16.msra.mxu0 %v1628
  %1646 = vmatpush.bf16.msra.mxu0 %v1626
  %1647 = vmatpush.bf16.msra.mxu0 %v1624
  %1648 = vmatmul.bf16.gmra.mxu0 %v220
  %v1649 = vpop.f32.mrf.mxu0
  %v1650 = vadd.f32 0.0, %v1649
  %v1651 = vpop.f32.mrf.mxu0
  %1652 = vdwg.mxu0
  %1653 = vmatpush.bf16.msra.mxu0 0
  %1654 = vmatpush.bf16.msra.mxu0 0
  %1655 = vmatpush.bf16.msra.mxu0 0
  %1656 = vmatpush.bf16.msra.mxu0 0
  %1657 = vmatpush.bf16.msra.mxu0 %v1631
  %1658 = vmatpush.bf16.msra.mxu0 %v1629
  %1659 = vmatpush.bf16.msra.mxu0 %v1627
  %1660 = vmatpush.bf16.msra.mxu0 %v1625
  %1661 = vmatmul.bf16.gmra.mxu0 %v220
  %v1662 = vpop.f32.mrf.mxu0
  %v1663 = vadd.f32 0.0, %v1662
  %v1664 = vpop.f32.mrf.mxu0
  %1665 = vdwg.mxu0
  %v1666 = vld [vmem:[%s250] sm:$0xff]
  %v1667 = vadd.f32 %v1666, %v1650
  %v1668 = vld [vmem:[%s255 + $0x8] sm:$0xff]
  %v1669 = vadd.f32 %v1668, %v1663
  %v1670 = vxor.u32 %v1667, 2147483648
  %v1671 = vmul.f32 %v1670, 1.442695
  %v1672 = vpow.pop %v1671
  %v1673 = vadd.f32 %v1672, 1.0
  %v1674 = vrcp.pop %v1673
  %v1675 = vmul.f32 %v1673, %v1674
  %v1676 = vsub.f32 1.0, %v1675
  %v1677 = vmul.f32 %v1674, %v1676
  %v1678 = vadd.f32 %v1674, %v1677
  %vm1679 = vweird.f32 %v1673
  %vm1680 = vweird.f32 %v1674
  %vm1681 = vmor %vm1679, %vm1680
  %v1682 = vsel %vm1681, %v1674, %v1678
  %v1683 = vand.u32 2147483647, %v1673
  %vm1684 = vcmp.eq.f32.partialorder %v1683, 8.507059e+37
  %v1685 = vand.u32 %v1673, 2147483648
  %v1686 = vor.u32 1.1754944e-38, %v1685
  %v1687 = vsel %vm1684, %v1686, %v1682
  %v1688 = vmul.f32 1.0, %v1687
  %v1689 = vtanh.pop %v1667
  %v1690 = vmul.f32 %v1688, 0.0
  %1692 = vrot.lane.b32.xlu0 %v1689, 32
  %v1693 = vpop.permute.xlu0 %1692
  %v1695 = vmul.f32 %v1688, %v1693
  %1697 = vrot.lane.b32.xlu0 %v1695, 32
  %v1698 = vpop.permute.xlu0 %1697
  %v1700 = vadd.f32 %v1690, %v1698
  %v1701 = vtanh.pop %v1700
  %1703 = vrot.lane.b32.xlu0 %v1701, 32
  %v1704 = vpop.permute.xlu0 %1703
  %v1706 = vmul.f32 %v1688, %v1704
  %v1707 = vxor.u32 %v1669, 2147483648
  %v1708 = vmul.f32 %v1707, 1.442695
  %v1709 = vpow.pop %v1708
  %v1710 = vadd.f32 %v1709, 1.0
  %v1711 = vrcp.pop %v1710
  %v1712 = vmul.f32 %v1710, %v1711
  %v1713 = vsub.f32 1.0, %v1712
  %v1714 = vmul.f32 %v1711, %v1713
  %v1715 = vadd.f32 %v1711, %v1714
  %vm1716 = vweird.f32 %v1710
  %vm1717 = vweird.f32 %v1711
  %vm1718 = vmor %vm1716, %vm1717
  %v1719 = vsel %vm1718, %v1711, %v1715
  %v1720 = vand.u32 2147483647, %v1710
  %vm1721 = vcmp.eq.f32.partialorder %v1720, 8.507059e+37
  %v1722 = vand.u32 %v1710, 2147483648
  %v1723 = vor.u32 1.1754944e-38, %v1722
  %v1724 = vsel %vm1721, %v1723, %v1719
  %v1725 = vmul.f32 1.0, %v1724
  %v1726 = vtanh.pop %v1669
  %v1727 = vmul.f32 %v1725, 0.0
  %1729 = vrot.lane.b32.xlu0 %v1726, 32
  %v1730 = vpop.permute.xlu0 %1729
  %v1732 = vmul.f32 %v1725, %v1730
  %1734 = vrot.lane.b32.xlu0 %v1732, 32
  %v1735 = vpop.permute.xlu0 %1734
  %v1737 = vadd.f32 %v1727, %v1735
  %v1738 = vtanh.pop %v1737
  %1740 = vrot.lane.b32.xlu0 %v1738, 32
  %v1741 = vpop.permute.xlu0 %1740
  %v1743 = vmul.f32 %v1725, %v1741
  %v1744 = vld [vmem:[%s1] sm:$0xff]
  %vm1745 = vcmp.ne.f32.partialorder %v1744, 0.0
  %v1746 = vld [vmem:[%s334] sm:$0xff]
  %vm1747 = vcmp.ne.f32.partialorder %v1746, 0.0
  %v1748 = vsel %vm1745, 1, 0
  %1749 = vset.pattern.permute.xlu0 0
  %1750 = vperm.xlu0 %1749, %v1748
  %v1751 = vpop.permute.xlu0 %1750
  %vm1752 = vcmp.eq.s32.totalorder %v1751, 1
  %v1753 = vsel %vm1752, %v1706, 0.0
  %v1754 = vsel %vm1752, %v1700, 0.0
  %v1755 = vsel %vm1747, 1, 0
  %1756 = vset.pattern.permute.xlu0 0
  %1757 = vperm.xlu0 %1756, %v1755
  %v1758 = vpop.permute.xlu0 %1757
  %vm1759 = vcmp.eq.s32.totalorder %v1758, 1
  %v1760 = vsel %vm1759, %v1743, 0.0
  %v1761 = vsel %vm1759, %v1737, 0.0
  %1763 = vrot.lane.b32.xlu0 %v1753, 64
  %v1764 = vpop.permute.xlu0 %1763
  %1767 = vrot.lane.b32.xlu0 %v1760, 96
  %v1768 = vpop.permute.xlu0 %1767
  %v1770 = vsel %vm374, %v1764, %v1768
  %v1771 = vpack.c.bf16 %v1770, %v1770
  %v1773 = vsel %vm218, %v1771, 0
  %1775 = vmatpush.bf16.msra.mxu0 0
  %1776 = vmatpush.bf16.msra.mxu0 0
  %1777 = vmatpush.bf16.msra.mxu0 0
  %1778 = vmatpush.bf16.msra.mxu0 0
  %1779 = vmatpush.bf16.msra.mxu0 %v1630
  %1780 = vmatpush.bf16.msra.mxu0 %v1628
  %1781 = vmatpush.bf16.msra.mxu0 %v1626
  %1782 = vmatpush.bf16.msra.mxu0 %v1624
  %1783 = vmatmul.bf16.gmra.mxu0 %v1773
  %v1784 = vpop.f32.mrf.mxu0
  %v1785 = vadd.f32 0.0, %v1784
  %v1786 = vpop.f32.mrf.mxu0
  %1787 = vdwg.mxu0
  %1788 = vmatpush.bf16.msra.mxu0 0
  %1789 = vmatpush.bf16.msra.mxu0 0
  %1790 = vmatpush.bf16.msra.mxu0 0
  %1791 = vmatpush.bf16.msra.mxu0 0
  %1792 = vmatpush.bf16.msra.mxu0 %v1631
  %1793 = vmatpush.bf16.msra.mxu0 %v1629
  %1794 = vmatpush.bf16.msra.mxu0 %v1627
  %1795 = vmatpush.bf16.msra.mxu0 %v1625
  %1796 = vmatmul.bf16.gmra.mxu0 %v1773
  %v1797 = vpop.f32.mrf.mxu0
  %v1798 = vadd.f32 0.0, %v1797
  %v1799 = vpop.f32.mrf.mxu0
  %1800 = vdwg.mxu0
  %v1801 = vld [vmem:[%s408] sm:$0xff]
  %v1802 = vadd.f32 %v1801, %v1785
  %v1803 = vld [vmem:[%s413 + $0x8] sm:$0xff]
  %v1804 = vadd.f32 %v1803, %v1798
  %v1805 = vxor.u32 %v1802, 2147483648
  %v1806 = vmul.f32 %v1805, 1.442695
  %v1807 = vpow.pop %v1806
  %v1808 = vadd.f32 %v1807, 1.0
  %v1809 = vrcp.pop %v1808
  %v1810 = vmul.f32 %v1808, %v1809
  %v1811 = vsub.f32 1.0, %v1810
  %v1812 = vmul.f32 %v1809, %v1811
  %v1813 = vadd.f32 %v1809, %v1812
  %vm1814 = vweird.f32 %v1808
  %vm1815 = vweird.f32 %v1809
  %vm1816 = vmor %vm1814, %vm1815
  %v1817 = vsel %vm1816, %v1809, %v1813
  %v1818 = vand.u32 2147483647, %v1808
  %vm1819 = vcmp.eq.f32.partialorder %v1818, 8.507059e+37
  %v1820 = vand.u32 %v1808, 2147483648
  %v1821 = vor.u32 1.1754944e-38, %v1820
  %v1822 = vsel %vm1819, %v1821, %v1817
  %v1823 = vmul.f32 1.0, %v1822
  %v1824 = vtanh.pop %v1802
  %v1825 = vmul.f32 %v1823, %v1754
  %1827 = vrot.lane.b32.xlu0 %v1824, 32
  %v1828 = vpop.permute.xlu0 %1827
  %v1830 = vmul.f32 %v1823, %v1828
  %1832 = vrot.lane.b32.xlu0 %v1830, 32
  %v1833 = vpop.permute.xlu0 %1832
  %v1835 = vadd.f32 %v1825, %v1833
  %v1836 = vtanh.pop %v1835
  %1838 = vrot.lane.b32.xlu0 %v1836, 32
  %v1839 = vpop.permute.xlu0 %1838
  %v1841 = vmul.f32 %v1823, %v1839
  %v1842 = vxor.u32 %v1804, 2147483648
  %v1843 = vmul.f32 %v1842, 1.442695
  %v1844 = vpow.pop %v1843
  %v1845 = vadd.f32 %v1844, 1.0
  %v1846 = vrcp.pop %v1845
  %v1847 = vmul.f32 %v1845, %v1846
  %v1848 = vsub.f32 1.0, %v1847
  %v1849 = vmul.f32 %v1846, %v1848
  %v1850 = vadd.f32 %v1846, %v1849
  %vm1851 = vweird.f32 %v1845
  %vm1852 = vweird.f32 %v1846
  %vm1853 = vmor %vm1851, %vm1852
  %v1854 = vsel %vm1853, %v1846, %v1850
  %v1855 = vand.u32 2147483647, %v1845
  %vm1856 = vcmp.eq.f32.partialorder %v1855, 8.507059e+37
  %v1857 = vand.u32 %v1845, 2147483648
  %v1858 = vor.u32 1.1754944e-38, %v1857
  %v1859 = vsel %vm1856, %v1858, %v1854
  %v1860 = vmul.f32 1.0, %v1859
  %v1861 = vtanh.pop %v1804
  %v1862 = vmul.f32 %v1860, %v1761
  %1864 = vrot.lane.b32.xlu0 %v1861, 32
  %v1865 = vpop.permute.xlu0 %1864
  %v1867 = vmul.f32 %v1860, %v1865
  %1869 = vrot.lane.b32.xlu0 %v1867, 32
  %v1870 = vpop.permute.xlu0 %1869
  %v1872 = vadd.f32 %v1862, %v1870
  %v1873 = vtanh.pop %v1872
  %1875 = vrot.lane.b32.xlu0 %v1873, 32
  %v1876 = vpop.permute.xlu0 %1875
  %v1878 = vmul.f32 %v1860, %v1876
  %v1879 = vld [vmem:[%s490] sm:$0xff]
  %vm1880 = vcmp.ne.f32.partialorder %v1879, 0.0
  %v1881 = vld [vmem:[%s493] sm:$0xff]
  %vm1882 = vcmp.ne.f32.partialorder %v1881, 0.0
  %v1883 = vsel %vm1880, 1, 0
  %1884 = vset.pattern.permute.xlu0 0
  %1885 = vperm.xlu0 %1884, %v1883
  %v1886 = vpop.permute.xlu0 %1885
  %vm1887 = vcmp.eq.s32.totalorder %v1886, 1
  %v1888 = vsel %vm1887, %v1841, %v1753
  %v1889 = vsel %vm1887, %v1835, %v1754
  %v1890 = vsel %vm1882, 1, 0
  %1891 = vset.pattern.permute.xlu0 0
  %1892 = vperm.xlu0 %1891, %v1890
  %v1893 = vpop.permute.xlu0 %1892
  %vm1894 = vcmp.eq.s32.totalorder %v1893, 1
  %v1895 = vsel %vm1894, %v1878, %v1760
  %v1896 = vsel %vm1894, %v1872, %v1761
  %1898 = vrot.lane.b32.xlu0 %v1888, 64
  %v1899 = vpop.permute.xlu0 %1898
  %1902 = vrot.lane.b32.xlu0 %v1895, 96
  %v1903 = vpop.permute.xlu0 %1902
  %v1905 = vsel %vm374, %v1899, %v1903
  %v1906 = vpack.c.bf16 %v1905, %v1905
  %v1908 = vsel %vm218, %v1906, 0
  %1910 = vmatpush.bf16.msra.mxu0 0
  %1911 = vmatpush.bf16.msra.mxu0 0
  %1912 = vmatpush.bf16.msra.mxu0 0
  %1913 = vmatpush.bf16.msra.mxu0 0
  %1914 = vmatpush.bf16.msra.mxu0 %v1630
  %1915 = vmatpush.bf16.msra.mxu0 %v1628
  %1916 = vmatpush.bf16.msra.mxu0 %v1626
  %1917 = vmatpush.bf16.msra.mxu0 %v1624
  %1918 = vmatmul.bf16.gmra.mxu0 %v1908
  %v1919 = vpop.f32.mrf.mxu0
  %v1920 = vadd.f32 0.0, %v1919
  %v1921 = vpop.f32.mrf.mxu0
  %1922 = vdwg.mxu0
  %1923 = vmatpush.bf16.msra.mxu0 0
  %1924 = vmatpush.bf16.msra.mxu0 0
  %1925 = vmatpush.bf16.msra.mxu0 0
  %1926 = vmatpush.bf16.msra.mxu0 0
  %1927 = vmatpush.bf16.msra.mxu0 %v1631
  %1928 = vmatpush.bf16.msra.mxu0 %v1629
  %1929 = vmatpush.bf16.msra.mxu0 %v1627
  %1930 = vmatpush.bf16.msra.mxu0 %v1625
  %1931 = vmatmul.bf16.gmra.mxu0 %v1908
  %v1932 = vpop.f32.mrf.mxu0
  %v1933 = vadd.f32 0.0, %v1932
  %v1934 = vpop.f32.mrf.mxu0
  %1935 = vdwg.mxu0
  %v1936 = vld [vmem:[%s565] sm:$0xff]
  %v1937 = vadd.f32 %v1936, %v1920
  %v1938 = vld [vmem:[%s570 + $0x8] sm:$0xff]
  %v1939 = vadd.f32 %v1938, %v1933
  %v1940 = vxor.u32 %v1937, 2147483648
  %v1941 = vmul.f32 %v1940, 1.442695
  %v1942 = vpow.pop %v1941
  %v1943 = vadd.f32 %v1942, 1.0
  %v1944 = vrcp.pop %v1943
  %v1945 = vmul.f32 %v1943, %v1944
  %v1946 = vsub.f32 1.0, %v1945
  %v1947 = vmul.f32 %v1944, %v1946
  %v1948 = vadd.f32 %v1944, %v1947
  %vm1949 = vweird.f32 %v1943
  %vm1950 = vweird.f32 %v1944
  %vm1951 = vmor %vm1949, %vm1950
  %v1952 = vsel %vm1951, %v1944, %v1948
  %v1953 = vand.u32 2147483647, %v1943
  %vm1954 = vcmp.eq.f32.partialorder %v1953, 8.507059e+37
  %v1955 = vand.u32 %v1943, 2147483648
  %v1956 = vor.u32 1.1754944e-38, %v1955
  %v1957 = vsel %vm1954, %v1956, %v1952
  %v1958 = vmul.f32 1.0, %v1957
  %v1959 = vtanh.pop %v1937
  %v1960 = vmul.f32 %v1958, %v1889
  %1962 = vrot.lane.b32.xlu0 %v1959, 32
  %v1963 = vpop.permute.xlu0 %1962
  %v1965 = vmul.f32 %v1958, %v1963
  %1967 = vrot.lane.b32.xlu0 %v1965, 32
  %v1968 = vpop.permute.xlu0 %1967
  %v1970 = vadd.f32 %v1960, %v1968
  %v1971 = vtanh.pop %v1970
  %1973 = vrot.lane.b32.xlu0 %v1971, 32
  %v1974 = vpop.permute.xlu0 %1973
  %v1976 = vmul.f32 %v1958, %v1974
  %v1977 = vxor.u32 %v1939, 2147483648
  %v1978 = vmul.f32 %v1977, 1.442695
  %v1979 = vpow.pop %v1978
  %v1980 = vadd.f32 %v1979, 1.0
  %v1981 = vrcp.pop %v1980
  %v1982 = vmul.f32 %v1980, %v1981
  %v1983 = vsub.f32 1.0, %v1982
  %v1984 = vmul.f32 %v1981, %v1983
  %v1985 = vadd.f32 %v1981, %v1984
  %vm1986 = vweird.f32 %v1980
  %vm1987 = vweird.f32 %v1981
  %vm1988 = vmor %vm1986, %vm1987
  %v1989 = vsel %vm1988, %v1981, %v1985
  %v1990 = vand.u32 2147483647, %v1980
  %vm1991 = vcmp.eq.f32.partialorder %v1990, 8.507059e+37
  %v1992 = vand.u32 %v1980, 2147483648
  %v1993 = vor.u32 1.1754944e-38, %v1992
  %v1994 = vsel %vm1991, %v1993, %v1989
  %v1995 = vmul.f32 1.0, %v1994
  %v1996 = vtanh.pop %v1939
  %v1997 = vmul.f32 %v1995, %v1896
  %1999 = vrot.lane.b32.xlu0 %v1996, 32
  %v2000 = vpop.permute.xlu0 %1999
  %v2002 = vmul.f32 %v1995, %v2000
  %2004 = vrot.lane.b32.xlu0 %v2002, 32
  %v2005 = vpop.permute.xlu0 %2004
  %v2007 = vadd.f32 %v1997, %v2005
  %v2008 = vtanh.pop %v2007
  %2010 = vrot.lane.b32.xlu0 %v2008, 32
  %v2011 = vpop.permute.xlu0 %2010
  %v2013 = vmul.f32 %v1995, %v2011
  %v2014 = vld [vmem:[%s647] sm:$0xff]
  %vm2015 = vcmp.ne.f32.partialorder %v2014, 0.0
  %v2016 = vld [vmem:[%s650] sm:$0xff]
  %vm2017 = vcmp.ne.f32.partialorder %v2016, 0.0
  %v2018 = vsel %vm2015, 1, 0
  %2019 = vset.pattern.permute.xlu0 0
  %2020 = vperm.xlu0 %2019, %v2018
  %v2021 = vpop.permute.xlu0 %2020
  %vm2022 = vcmp.eq.s32.totalorder %v2021, 1
  %v2023 = vsel %vm2022, %v1976, %v1888
  %v2024 = vsel %vm2022, %v1970, %v1889
  %v2025 = vsel %vm2017, 1, 0
  %2026 = vset.pattern.permute.xlu0 0
  %2027 = vperm.xlu0 %2026, %v2025
  %v2028 = vpop.permute.xlu0 %2027
  %vm2029 = vcmp.eq.s32.totalorder %v2028, 1
  %v2030 = vsel %vm2029, %v2013, %v1895
  %v2031 = vsel %vm2029, %v2007, %v1896
  %2033 = vrot.lane.b32.xlu0 %v2023, 64
  %v2034 = vpop.permute.xlu0 %2033
  %2037 = vrot.lane.b32.xlu0 %v2030, 96
  %v2038 = vpop.permute.xlu0 %2037
  %v2040 = vsel %vm374, %v2034, %v2038
  %v2041 = vpack.c.bf16 %v2040, %v2040
  %v2043 = vsel %vm218, %v2041, 0
  %2045 = vmatpush.bf16.msra.mxu0 0
  %2046 = vmatpush.bf16.msra.mxu0 0
  %2047 = vmatpush.bf16.msra.mxu0 0
  %2048 = vmatpush.bf16.msra.mxu0 0
  %2049 = vmatpush.bf16.msra.mxu0 %v1630
  %2050 = vmatpush.bf16.msra.mxu0 %v1628
  %2051 = vmatpush.bf16.msra.mxu0 %v1626
  %2052 = vmatpush.bf16.msra.mxu0 %v1624
  %2053 = vmatmul.bf16.gmra.mxu0 %v2043
  %v2054 = vpop.f32.mrf.mxu0
  %v2055 = vadd.f32 0.0, %v2054
  %v2056 = vpop.f32.mrf.mxu0
  %2057 = vdwg.mxu0
  %2058 = vmatpush.bf16.msra.mxu0 0
  %2059 = vmatpush.bf16.msra.mxu0 0
  %2060 = vmatpush.bf16.msra.mxu0 0
  %2061 = vmatpush.bf16.msra.mxu0 0
  %2062 = vmatpush.bf16.msra.mxu0 %v1631
  %2063 = vmatpush.bf16.msra.mxu0 %v1629
  %2064 = vmatpush.bf16.msra.mxu0 %v1627
  %2065 = vmatpush.bf16.msra.mxu0 %v1625
  %2066 = vmatmul.bf16.gmra.mxu0 %v2043
  %v2067 = vpop.f32.mrf.mxu0
  %v2068 = vadd.f32 0.0, %v2067
  %v2069 = vpop.f32.mrf.mxu0
  %2070 = vdwg.mxu0
  %v2071 = vld [vmem:[%s722] sm:$0xff]
  %v2072 = vadd.f32 %v2071, %v2055
  %v2073 = vld [vmem:[%s727 + $0x8] sm:$0xff]
  %v2074 = vadd.f32 %v2073, %v2068
  %v2075 = vxor.u32 %v2072, 2147483648
  %v2076 = vmul.f32 %v2075, 1.442695
  %v2077 = vpow.pop %v2076
  %v2078 = vadd.f32 %v2077, 1.0
  %v2079 = vrcp.pop %v2078
  %v2080 = vmul.f32 %v2078, %v2079
  %v2081 = vsub.f32 1.0, %v2080
  %v2082 = vmul.f32 %v2079, %v2081
  %v2083 = vadd.f32 %v2079, %v2082
  %vm2084 = vweird.f32 %v2078
  %vm2085 = vweird.f32 %v2079
  %vm2086 = vmor %vm2084, %vm2085
  %v2087 = vsel %vm2086, %v2079, %v2083
  %v2088 = vand.u32 2147483647, %v2078
  %vm2089 = vcmp.eq.f32.partialorder %v2088, 8.507059e+37
  %v2090 = vand.u32 %v2078, 2147483648
  %v2091 = vor.u32 1.1754944e-38, %v2090
  %v2092 = vsel %vm2089, %v2091, %v2087
  %v2093 = vmul.f32 1.0, %v2092
  %v2094 = vtanh.pop %v2072
  %v2095 = vmul.f32 %v2093, %v2024
  %2097 = vrot.lane.b32.xlu0 %v2094, 32
  %v2098 = vpop.permute.xlu0 %2097
  %v2100 = vmul.f32 %v2093, %v2098
  %2102 = vrot.lane.b32.xlu0 %v2100, 32
  %v2103 = vpop.permute.xlu0 %2102
  %v2105 = vadd.f32 %v2095, %v2103
  %v2106 = vtanh.pop %v2105
  %2108 = vrot.lane.b32.xlu0 %v2106, 32
  %v2109 = vpop.permute.xlu0 %2108
  %v2111 = vmul.f32 %v2093, %v2109
  %v2112 = vxor.u32 %v2074, 2147483648
  %v2113 = vmul.f32 %v2112, 1.442695
  %v2114 = vpow.pop %v2113
  %v2115 = vadd.f32 %v2114, 1.0
  %v2116 = vrcp.pop %v2115
  %v2117 = vmul.f32 %v2115, %v2116
  %v2118 = vsub.f32 1.0, %v2117
  %v2119 = vmul.f32 %v2116, %v2118
  %v2120 = vadd.f32 %v2116, %v2119
  %vm2121 = vweird.f32 %v2115
  %vm2122 = vweird.f32 %v2116
  %vm2123 = vmor %vm2121, %vm2122
  %v2124 = vsel %vm2123, %v2116, %v2120
  %v2125 = vand.u32 2147483647, %v2115
  %vm2126 = vcmp.eq.f32.partialorder %v2125, 8.507059e+37
  %v2127 = vand.u32 %v2115, 2147483648
  %v2128 = vor.u32 1.1754944e-38, %v2127
  %v2129 = vsel %vm2126, %v2128, %v2124
  %v2130 = vmul.f32 1.0, %v2129
  %v2131 = vtanh.pop %v2074
  %v2132 = vmul.f32 %v2130, %v2031
  %2134 = vrot.lane.b32.xlu0 %v2131, 32
  %v2135 = vpop.permute.xlu0 %2134
  %v2137 = vmul.f32 %v2130, %v2135
  %2139 = vrot.lane.b32.xlu0 %v2137, 32
  %v2140 = vpop.permute.xlu0 %2139
  %v2142 = vadd.f32 %v2132, %v2140
  %v2143 = vtanh.pop %v2142
  %2145 = vrot.lane.b32.xlu0 %v2143, 32
  %v2146 = vpop.permute.xlu0 %2145
  %v2148 = vmul.f32 %v2130, %v2146
  %v2149 = vld [vmem:[%s804] sm:$0xff]
  %vm2150 = vcmp.ne.f32.partialorder %v2149, 0.0
  %v2151 = vld [vmem:[%s807] sm:$0xff]
  %vm2152 = vcmp.ne.f32.partialorder %v2151, 0.0
  %v2153 = vsel %vm2150, 1, 0
  %2154 = vset.pattern.permute.xlu0 0
  %2155 = vperm.xlu0 %2154, %v2153
  %v2156 = vpop.permute.xlu0 %2155
  %vm2157 = vcmp.eq.s32.totalorder %v2156, 1
  %v2158 = vsel %vm2157, %v2111, %v2023
  %v2159 = vsel %vm2157, %v2105, %v2024
  %v2160 = vsel %vm2152, 1, 0
  %2161 = vset.pattern.permute.xlu0 0
  %2162 = vperm.xlu0 %2161, %v2160
  %v2163 = vpop.permute.xlu0 %2162
  %vm2164 = vcmp.eq.s32.totalorder %v2163, 1
  %v2165 = vsel %vm2164, %v2148, %v2030
  %v2166 = vsel %vm2164, %v2142, %v2031
  %2168 = vrot.lane.b32.xlu0 %v2158, 64
  %v2169 = vpop.permute.xlu0 %2168
  %2172 = vrot.lane.b32.xlu0 %v2165, 96
  %v2173 = vpop.permute.xlu0 %2172
  %v2175 = vsel %vm374, %v2169, %v2173
  %v2176 = vpack.c.bf16 %v2175, %v2175
  %v2178 = vsel %vm218, %v2176, 0
  %2180 = vmatpush.bf16.msra.mxu0 0
  %2181 = vmatpush.bf16.msra.mxu0 0
  %2182 = vmatpush.bf16.msra.mxu0 0
  %2183 = vmatpush.bf16.msra.mxu0 0
  %2184 = vmatpush.bf16.msra.mxu0 %v1630
  %2185 = vmatpush.bf16.msra.mxu0 %v1628
  %2186 = vmatpush.bf16.msra.mxu0 %v1626
  %2187 = vmatpush.bf16.msra.mxu0 %v1624
  %2188 = vmatmul.bf16.gmra.mxu0 %v2178
  %v2189 = vpop.f32.mrf.mxu0
  %v2190 = vadd.f32 0.0, %v2189
  %v2191 = vpop.f32.mrf.mxu0
  %2192 = vdwg.mxu0
  %2193 = vmatpush.bf16.msra.mxu0 0
  %2194 = vmatpush.bf16.msra.mxu0 0
  %2195 = vmatpush.bf16.msra.mxu0 0
  %2196 = vmatpush.bf16.msra.mxu0 0
  %2197 = vmatpush.bf16.msra.mxu0 %v1631
  %2198 = vmatpush.bf16.msra.mxu0 %v1629
  %2199 = vmatpush.bf16.msra.mxu0 %v1627
  %2200 = vmatpush.bf16.msra.mxu0 %v1625
  %2201 = vmatmul.bf16.gmra.mxu0 %v2178
  %v2202 = vpop.f32.mrf.mxu0
  %v2203 = vadd.f32 0.0, %v2202
  %v2204 = vpop.f32.mrf.mxu0
  %2205 = vdwg.mxu0
  %v2206 = vld [vmem:[%s727] sm:$0xff]
  %v2207 = vadd.f32 %v2206, %v2190
  %v2208 = vld [vmem:[%s722 + $0x8] sm:$0xff]
  %v2209 = vadd.f32 %v2208, %v2203
  %v2210 = vxor.u32 %v2207, 2147483648
  %v2211 = vmul.f32 %v2210, 1.442695
  %v2212 = vpow.pop %v2211
  %v2213 = vadd.f32 %v2212, 1.0
  %v2214 = vrcp.pop %v2213
  %v2215 = vmul.f32 %v2213, %v2214
  %v2216 = vsub.f32 1.0, %v2215
  %v2217 = vmul.f32 %v2214, %v2216
  %v2218 = vadd.f32 %v2214, %v2217
  %vm2219 = vweird.f32 %v2213
  %vm2220 = vweird.f32 %v2214
  %vm2221 = vmor %vm2219, %vm2220
  %v2222 = vsel %vm2221, %v2214, %v2218
  %v2223 = vand.u32 2147483647, %v2213
  %vm2224 = vcmp.eq.f32.partialorder %v2223, 8.507059e+37
  %v2225 = vand.u32 %v2213, 2147483648
  %v2226 = vor.u32 1.1754944e-38, %v2225
  %v2227 = vsel %vm2224, %v2226, %v2222
  %v2228 = vmul.f32 1.0, %v2227
  %v2229 = vtanh.pop %v2207
  %v2230 = vmul.f32 %v2228, %v2159
  %2232 = vrot.lane.b32.xlu0 %v2229, 32
  %v2233 = vpop.permute.xlu0 %2232
  %v2235 = vmul.f32 %v2228, %v2233
  %2237 = vrot.lane.b32.xlu0 %v2235, 32
  %v2238 = vpop.permute.xlu0 %2237
  %v2240 = vadd.f32 %v2230, %v2238
  %v2241 = vtanh.pop %v2240
  %2243 = vrot.lane.b32.xlu0 %v2241, 32
  %v2244 = vpop.permute.xlu0 %2243
  %v2246 = vmul.f32 %v2228, %v2244
  %v2247 = vxor.u32 %v2209, 2147483648
  %v2248 = vmul.f32 %v2247, 1.442695
  %v2249 = vpow.pop %v2248
  %v2250 = vadd.f32 %v2249, 1.0
  %v2251 = vrcp.pop %v2250
  %v2252 = vmul.f32 %v2250, %v2251
  %v2253 = vsub.f32 1.0, %v2252
  %v2254 = vmul.f32 %v2251, %v2253
  %v2255 = vadd.f32 %v2251, %v2254
  %vm2256 = vweird.f32 %v2250
  %vm2257 = vweird.f32 %v2251
  %vm2258 = vmor %vm2256, %vm2257
  %v2259 = vsel %vm2258, %v2251, %v2255
  %v2260 = vand.u32 2147483647, %v2250
  %vm2261 = vcmp.eq.f32.partialorder %v2260, 8.507059e+37
  %v2262 = vand.u32 %v2250, 2147483648
  %v2263 = vor.u32 1.1754944e-38, %v2262
  %v2264 = vsel %vm2261, %v2263, %v2259
  %v2265 = vmul.f32 1.0, %v2264
  %v2266 = vtanh.pop %v2209
  %v2267 = vmul.f32 %v2265, %v2166
  %2269 = vrot.lane.b32.xlu0 %v2266, 32
  %v2270 = vpop.permute.xlu0 %2269
  %v2272 = vmul.f32 %v2265, %v2270
  %2274 = vrot.lane.b32.xlu0 %v2272, 32
  %v2275 = vpop.permute.xlu0 %2274
  %v2277 = vadd.f32 %v2267, %v2275
  %v2278 = vtanh.pop %v2277
  %2280 = vrot.lane.b32.xlu0 %v2278, 32
  %v2281 = vpop.permute.xlu0 %2280
  %v2283 = vmul.f32 %v2265, %v2281
  %v2284 = vsel %vm2164, %v2246, %v2158
  %v2285 = vsel %vm2164, %v2240, %v2159
  %v2286 = vsel %vm2157, %v2283, %v2165
  %v2287 = vsel %vm2157, %v2277, %v2166
  %2289 = vrot.lane.b32.xlu0 %v2284, 64
  %v2290 = vpop.permute.xlu0 %2289
  %2293 = vrot.lane.b32.xlu0 %v2286, 96
  %v2294 = vpop.permute.xlu0 %2293
  %v2296 = vsel %vm374, %v2290, %v2294
  %v2297 = vpack.c.bf16 %v2296, %v2296
  %v2299 = vsel %vm218, %v2297, 0
  %2301 = vmatpush.bf16.msra.mxu0 0
  %2302 = vmatpush.bf16.msra.mxu0 0
  %2303 = vmatpush.bf16.msra.mxu0 0
  %2304 = vmatpush.bf16.msra.mxu0 0
  %2305 = vmatpush.bf16.msra.mxu0 %v1630
  %2306 = vmatpush.bf16.msra.mxu0 %v1628
  %2307 = vmatpush.bf16.msra.mxu0 %v1626
  %2308 = vmatpush.bf16.msra.mxu0 %v1624
  %2309 = vmatmul.bf16.gmra.mxu0 %v2299
  %v2310 = vpop.f32.mrf.mxu0
  %v2311 = vadd.f32 0.0, %v2310
  %v2312 = vpop.f32.mrf.mxu0
  %2313 = vdwg.mxu0
  %2314 = vmatpush.bf16.msra.mxu0 0
  %2315 = vmatpush.bf16.msra.mxu0 0
  %2316 = vmatpush.bf16.msra.mxu0 0
  %2317 = vmatpush.bf16.msra.mxu0 0
  %2318 = vmatpush.bf16.msra.mxu0 %v1631
  %2319 = vmatpush.bf16.msra.mxu0 %v1629
  %2320 = vmatpush.bf16.msra.mxu0 %v1627
  %2321 = vmatpush.bf16.msra.mxu0 %v1625
  %2322 = vmatmul.bf16.gmra.mxu0 %v2299
  %v2323 = vpop.f32.mrf.mxu0
  %v2324 = vadd.f32 0.0, %v2323
  %v2325 = vpop.f32.mrf.mxu0
  %2326 = vdwg.mxu0
  %v2327 = vld [vmem:[%s570] sm:$0xff]
  %v2328 = vadd.f32 %v2327, %v2311
  %v2329 = vld [vmem:[%s565 + $0x8] sm:$0xff]
  %v2330 = vadd.f32 %v2329, %v2324
  %v2331 = vxor.u32 %v2328, 2147483648
  %v2332 = vmul.f32 %v2331, 1.442695
  %v2333 = vpow.pop %v2332
  %v2334 = vadd.f32 %v2333, 1.0
  %v2335 = vrcp.pop %v2334
  %v2336 = vmul.f32 %v2334, %v2335
  %v2337 = vsub.f32 1.0, %v2336
  %v2338 = vmul.f32 %v2335, %v2337
  %v2339 = vadd.f32 %v2335, %v2338
  %vm2340 = vweird.f32 %v2334
  %vm2341 = vweird.f32 %v2335
  %vm2342 = vmor %vm2340, %vm2341
  %v2343 = vsel %vm2342, %v2335, %v2339
  %v2344 = vand.u32 2147483647, %v2334
  %vm2345 = vcmp.eq.f32.partialorder %v2344, 8.507059e+37
  %v2346 = vand.u32 %v2334, 2147483648
  %v2347 = vor.u32 1.1754944e-38, %v2346
  %v2348 = vsel %vm2345, %v2347, %v2343
  %v2349 = vmul.f32 1.0, %v2348
  %v2350 = vtanh.pop %v2328
  %v2351 = vmul.f32 %v2349, %v2285
  %2353 = vrot.lane.b32.xlu0 %v2350, 32
  %v2354 = vpop.permute.xlu0 %2353
  %v2356 = vmul.f32 %v2349, %v2354
  %2358 = vrot.lane.b32.xlu0 %v2356, 32
  %v2359 = vpop.permute.xlu0 %2358
  %v2361 = vadd.f32 %v2351, %v2359
  %v2362 = vtanh.pop %v2361
  %2364 = vrot.lane.b32.xlu0 %v2362, 32
  %v2365 = vpop.permute.xlu0 %2364
  %v2367 = vmul.f32 %v2349, %v2365
  %v2368 = vxor.u32 %v2330, 2147483648
  %v2369 = vmul.f32 %v2368, 1.442695
  %v2370 = vpow.pop %v2369
  %v2371 = vadd.f32 %v2370, 1.0
  %v2372 = vrcp.pop %v2371
  %v2373 = vmul.f32 %v2371, %v2372
  %v2374 = vsub.f32 1.0, %v2373
  %v2375 = vmul.f32 %v2372, %v2374
  %v2376 = vadd.f32 %v2372, %v2375
  %vm2377 = vweird.f32 %v2371
  %vm2378 = vweird.f32 %v2372
  %vm2379 = vmor %vm2377, %vm2378
  %v2380 = vsel %vm2379, %v2372, %v2376
  %v2381 = vand.u32 2147483647, %v2371
  %vm2382 = vcmp.eq.f32.partialorder %v2381, 8.507059e+37
  %v2383 = vand.u32 %v2371, 2147483648
  %v2384 = vor.u32 1.1754944e-38, %v2383
  %v2385 = vsel %vm2382, %v2384, %v2380
  %v2386 = vmul.f32 1.0, %v2385
  %v2387 = vtanh.pop %v2330
  %v2388 = vmul.f32 %v2386, %v2287
  %2390 = vrot.lane.b32.xlu0 %v2387, 32
  %v2391 = vpop.permute.xlu0 %2390
  %v2393 = vmul.f32 %v2386, %v2391
  %2395 = vrot.lane.b32.xlu0 %v2393, 32
  %v2396 = vpop.permute.xlu0 %2395
  %v2398 = vadd.f32 %v2388, %v2396
  %v2399 = vtanh.pop %v2398
  %2401 = vrot.lane.b32.xlu0 %v2399, 32
  %v2402 = vpop.permute.xlu0 %2401
  %v2404 = vmul.f32 %v2386, %v2402
  %v2405 = vsel %vm2029, %v2367, %v2284
  %v2406 = vsel %vm2029, %v2361, %v2285
  %v2407 = vsel %vm2022, %v2404, %v2286
  %v2408 = vsel %vm2022, %v2398, %v2287
  %2410 = vrot.lane.b32.xlu0 %v2405, 64
  %v2411 = vpop.permute.xlu0 %2410
  %2414 = vrot.lane.b32.xlu0 %v2407, 96
  %v2415 = vpop.permute.xlu0 %2414
  %v2417 = vsel %vm374, %v2411, %v2415
  %v2418 = vpack.c.bf16 %v2417, %v2417
  %v2420 = vsel %vm218, %v2418, 0
  %2422 = vmatpush.bf16.msra.mxu0 0
  %2423 = vmatpush.bf16.msra.mxu0 0
  %2424 = vmatpush.bf16.msra.mxu0 0
  %2425 = vmatpush.bf16.msra.mxu0 0
  %2426 = vmatpush.bf16.msra.mxu0 %v1630
  %2427 = vmatpush.bf16.msra.mxu0 %v1628
  %2428 = vmatpush.bf16.msra.mxu0 %v1626
  %2429 = vmatpush.bf16.msra.mxu0 %v1624
  %2430 = vmatmul.bf16.gmra.mxu0 %v2420
  %v2431 = vpop.f32.mrf.mxu0
  %v2432 = vadd.f32 0.0, %v2431
  %v2433 = vpop.f32.mrf.mxu0
  %2434 = vdwg.mxu0
  %2435 = vmatpush.bf16.msra.mxu0 0
  %2436 = vmatpush.bf16.msra.mxu0 0
  %2437 = vmatpush.bf16.msra.mxu0 0
  %2438 = vmatpush.bf16.msra.mxu0 0
  %2439 = vmatpush.bf16.msra.mxu0 %v1631
  %2440 = vmatpush.bf16.msra.mxu0 %v1629
  %2441 = vmatpush.bf16.msra.mxu0 %v1627
  %2442 = vmatpush.bf16.msra.mxu0 %v1625
  %2443 = vmatmul.bf16.gmra.mxu0 %v2420
  %v2444 = vpop.f32.mrf.mxu0
  %v2445 = vadd.f32 0.0, %v2444
  %v2446 = vpop.f32.mrf.mxu0
  %2447 = vdwg.mxu0
  %v2448 = vld [vmem:[%s413] sm:$0xff]
  %v2449 = vadd.f32 %v2448, %v2432
  %v2450 = vld [vmem:[%s408 + $0x8] sm:$0xff]
  %v2451 = vadd.f32 %v2450, %v2445
  %v2452 = vxor.u32 %v2449, 2147483648
  %v2453 = vmul.f32 %v2452, 1.442695
  %v2454 = vpow.pop %v2453
  %v2455 = vadd.f32 %v2454, 1.0
  %v2456 = vrcp.pop %v2455
  %v2457 = vmul.f32 %v2455, %v2456
  %v2458 = vsub.f32 1.0, %v2457
  %v2459 = vmul.f32 %v2456, %v2458
  %v2460 = vadd.f32 %v2456, %v2459
  %vm2461 = vweird.f32 %v2455
  %vm2462 = vweird.f32 %v2456
  %vm2463 = vmor %vm2461, %vm2462
  %v2464 = vsel %vm2463, %v2456, %v2460
  %v2465 = vand.u32 2147483647, %v2455
  %vm2466 = vcmp.eq.f32.partialorder %v2465, 8.507059e+37
  %v2467 = vand.u32 %v2455, 2147483648
  %v2468 = vor.u32 1.1754944e-38, %v2467
  %v2469 = vsel %vm2466, %v2468, %v2464
  %v2470 = vmul.f32 1.0, %v2469
  %v2471 = vtanh.pop %v2449
  %v2472 = vmul.f32 %v2470, %v2406
  %2474 = vrot.lane.b32.xlu0 %v2471, 32
  %v2475 = vpop.permute.xlu0 %2474
  %v2477 = vmul.f32 %v2470, %v2475
  %2479 = vrot.lane.b32.xlu0 %v2477, 32
  %v2480 = vpop.permute.xlu0 %2479
  %v2482 = vadd.f32 %v2472, %v2480
  %v2483 = vtanh.pop %v2482
  %2485 = vrot.lane.b32.xlu0 %v2483, 32
  %v2486 = vpop.permute.xlu0 %2485
  %v2488 = vmul.f32 %v2470, %v2486
  %v2489 = vxor.u32 %v2451, 2147483648
  %v2490 = vmul.f32 %v2489, 1.442695
  %v2491 = vpow.pop %v2490
  %v2492 = vadd.f32 %v2491, 1.0
  %v2493 = vrcp.pop %v2492
  %v2494 = vmul.f32 %v2492, %v2493
  %v2495 = vsub.f32 1.0, %v2494
  %v2496 = vmul.f32 %v2493, %v2495
  %v2497 = vadd.f32 %v2493, %v2496
  %vm2498 = vweird.f32 %v2492
  %vm2499 = vweird.f32 %v2493
  %vm2500 = vmor %vm2498, %vm2499
  %v2501 = vsel %vm2500, %v2493, %v2497
  %v2502 = vand.u32 2147483647, %v2492
  %vm2503 = vcmp.eq.f32.partialorder %v2502, 8.507059e+37
  %v2504 = vand.u32 %v2492, 2147483648
  %v2505 = vor.u32 1.1754944e-38, %v2504
  %v2506 = vsel %vm2503, %v2505, %v2501
  %v2507 = vmul.f32 1.0, %v2506
  %v2508 = vtanh.pop %v2451
  %v2509 = vmul.f32 %v2507, %v2408
  %2511 = vrot.lane.b32.xlu0 %v2508, 32
  %v2512 = vpop.permute.xlu0 %2511
  %v2514 = vmul.f32 %v2507, %v2512
  %2516 = vrot.lane.b32.xlu0 %v2514, 32
  %v2517 = vpop.permute.xlu0 %2516
  %v2519 = vadd.f32 %v2509, %v2517
  %v2520 = vtanh.pop %v2519
  %2522 = vrot.lane.b32.xlu0 %v2520, 32
  %v2523 = vpop.permute.xlu0 %2522
  %v2525 = vmul.f32 %v2507, %v2523
  %v2526 = vsel %vm1894, %v2488, %v2405
  %v2527 = vsel %vm1894, %v2482, %v2406
  %v2528 = vsel %vm1887, %v2525, %v2407
  %v2529 = vsel %vm1887, %v2519, %v2408
  %2531 = vrot.lane.b32.xlu0 %v2526, 64
  %v2532 = vpop.permute.xlu0 %2531
  %2535 = vrot.lane.b32.xlu0 %v2528, 96
  %v2536 = vpop.permute.xlu0 %2535
  %v2538 = vsel %vm374, %v2532, %v2536
  %v2539 = vpack.c.bf16 %v2538, %v2538
  %v2541 = vsel %vm218, %v2539, 0
  %2543 = vmatpush.bf16.msra.mxu0 0
  %2544 = vmatpush.bf16.msra.mxu0 0
  %2545 = vmatpush.bf16.msra.mxu0 0
  %2546 = vmatpush.bf16.msra.mxu0 0
  %2547 = vmatpush.bf16.msra.mxu0 %v1630
  %2548 = vmatpush.bf16.msra.mxu0 %v1628
  %2549 = vmatpush.bf16.msra.mxu0 %v1626
  %2550 = vmatpush.bf16.msra.mxu0 %v1624
  %2551 = vmatmul.bf16.gmra.mxu0 %v2541
  %v2552 = vpop.f32.mrf.mxu0
  %v2553 = vadd.f32 0.0, %v2552
  %v2554 = vpop.f32.mrf.mxu0
  %2555 = vdwg.mxu0
  %2556 = vmatpush.bf16.msra.mxu0 0
  %2557 = vmatpush.bf16.msra.mxu0 0
  %2558 = vmatpush.bf16.msra.mxu0 0
  %2559 = vmatpush.bf16.msra.mxu0 0
  %2560 = vmatpush.bf16.msra.mxu0 %v1631
  %2561 = vmatpush.bf16.msra.mxu0 %v1629
  %2562 = vmatpush.bf16.msra.mxu0 %v1627
  %2563 = vmatpush.bf16.msra.mxu0 %v1625
  %2564 = vmatmul.bf16.gmra.mxu0 %v2541
  %v2565 = vpop.f32.mrf.mxu0
  %v2566 = vadd.f32 0.0, %v2565
  %v2567 = vpop.f32.mrf.mxu0
  %2568 = vdwg.mxu0
  %v2569 = vld [vmem:[%s255] sm:$0xff]
  %v2570 = vadd.f32 %v2569, %v2553
  %v2571 = vld [vmem:[%s250 + $0x8] sm:$0xff]
  %v2572 = vadd.f32 %v2571, %v2566
  %v2573 = vxor.u32 %v2570, 2147483648
  %v2574 = vmul.f32 %v2573, 1.442695
  %v2575 = vpow.pop %v2574
  %v2576 = vadd.f32 %v2575, 1.0
  %v2577 = vrcp.pop %v2576
  %v2578 = vmul.f32 %v2576, %v2577
  %v2579 = vsub.f32 1.0, %v2578
  %v2580 = vmul.f32 %v2577, %v2579
  %v2581 = vadd.f32 %v2577, %v2580
  %vm2582 = vweird.f32 %v2576
  %vm2583 = vweird.f32 %v2577
  %vm2584 = vmor %vm2582, %vm2583
  %v2585 = vsel %vm2584, %v2577, %v2581
  %v2586 = vand.u32 2147483647, %v2576
  %vm2587 = vcmp.eq.f32.partialorder %v2586, 8.507059e+37
  %v2588 = vand.u32 %v2576, 2147483648
  %v2589 = vor.u32 1.1754944e-38, %v2588
  %v2590 = vsel %vm2587, %v2589, %v2585
  %v2591 = vmul.f32 1.0, %v2590
  %v2592 = vtanh.pop %v2570
  %v2593 = vmul.f32 %v2591, %v2527
  %2595 = vrot.lane.b32.xlu0 %v2592, 32
  %v2596 = vpop.permute.xlu0 %2595
  %v2598 = vmul.f32 %v2591, %v2596
  %2600 = vrot.lane.b32.xlu0 %v2598, 32
  %v2601 = vpop.permute.xlu0 %2600
  %v2603 = vadd.f32 %v2593, %v2601
  %v2604 = vtanh.pop %v2603
  %2606 = vrot.lane.b32.xlu0 %v2604, 32
  %v2607 = vpop.permute.xlu0 %2606
  %v2609 = vmul.f32 %v2591, %v2607
  %v2610 = vxor.u32 %v2572, 2147483648
  %v2611 = vmul.f32 %v2610, 1.442695
  %v2612 = vpow.pop %v2611
  %v2613 = vadd.f32 %v2612, 1.0
  %v2614 = vrcp.pop %v2613
  %v2615 = vmul.f32 %v2613, %v2614
  %v2616 = vsub.f32 1.0, %v2615
  %v2617 = vmul.f32 %v2614, %v2616
  %v2618 = vadd.f32 %v2614, %v2617
  %vm2619 = vweird.f32 %v2613
  %vm2620 = vweird.f32 %v2614
  %vm2621 = vmor %vm2619, %vm2620
  %v2622 = vsel %vm2621, %v2614, %v2618
  %v2623 = vand.u32 2147483647, %v2613
  %vm2624 = vcmp.eq.f32.partialorder %v2623, 8.507059e+37
  %v2625 = vand.u32 %v2613, 2147483648
  %v2626 = vor.u32 1.1754944e-38, %v2625
  %v2627 = vsel %vm2624, %v2626, %v2622
  %v2628 = vmul.f32 1.0, %v2627
  %v2629 = vtanh.pop %v2572
  %v2630 = vmul.f32 %v2628, %v2529
  %2632 = vrot.lane.b32.xlu0 %v2629, 32
  %v2633 = vpop.permute.xlu0 %2632
  %v2635 = vmul.f32 %v2628, %v2633
  %2637 = vrot.lane.b32.xlu0 %v2635, 32
  %v2638 = vpop.permute.xlu0 %2637
  %v2640 = vadd.f32 %v2630, %v2638
  %v2641 = vtanh.pop %v2640
  %2643 = vrot.lane.b32.xlu0 %v2641, 32
  %v2644 = vpop.permute.xlu0 %2643
  %v2646 = vmul.f32 %v2628, %v2644
  %v2647 = vsel %vm1759, %v2609, %v2526
  %v2648 = vsel %vm1752, %v2646, %v2528
  %2650 = vrot.lane.b32.xlu0 %v2647, 64
  %v2651 = vpop.permute.xlu0 %2650
  %2654 = vrot.lane.b32.xlu0 %v2648, 96
  %v2655 = vpop.permute.xlu0 %2654
  %v2657 = vsel %vm374, %v2651, %v2655
  %v2658 = vld [vmem:[%s8] sm:$0xff]
  %v2659 = vld [vmem:[%s8 + $0x8] sm:$0xff]
  %v2660 = vld [vmem:[%s8 + $0x10] sm:$0xff]
  %v2661 = vld [vmem:[%s8 + $0x18] sm:$0xff]
  %v2662 = vld [vmem:[%s8 + $0x20] sm:$0xff]
  %v2663 = vld [vmem:[%s8 + $0x28] sm:$0xff]
  %v2664 = vld [vmem:[%s8 + $0x30] sm:$0xff]
  %v2665 = vld [vmem:[%s8 + $0x38] sm:$0xff]
  %v2666 = vld [vmem:[%s9] sm:$0x1]
  %v2668 = vperm.slane %v2666, 0
  %v2671 = vsel %vm218, %v2657, 0
  %2673 = vmatpush.msra.mxu0 0.0
  %2674 = vmatpush.msra.mxu0 0.0
  %2675 = vmatpush.msra.mxu0 0.0
  %2676 = vmatpush.msra.mxu0 0.0
  %2677 = vmatpush.msra.mxu0 0.0
  %2678 = vmatpush.msra.mxu0 0.0
  %2679 = vmatpush.msra.mxu0 0.0
  %2680 = vmatpush.msra.mxu0 0.0
  %2681 = vmatpush.msra.mxu0 %v2665
  %2682 = vmatpush.msra.mxu0 %v2664
  %2683 = vmatpush.msra.mxu0 %v2663
  %2684 = vmatpush.msra.mxu0 %v2662
  %2685 = vmatpush.msra.mxu0 %v2661
  %2686 = vmatpush.msra.mxu0 %v2660
  %2687 = vmatpush.msra.mxu0 %v2659
  %2688 = vmatpush.msra.mxu0 %v2658
  %2689 = vmatmul.f32.gmra.mxu0 %v2671
  %v2690 = vpop.f32.mrf.mxu0
  %v2691 = vadd.f32 %v2668, %v2690
  %2692 = vdwg.mxu0
  %vm2693 = vcmask 31744
  %2694 = vst.msk [vmem:[%s10] sm:$0xff] %vm2693, %v2691
  // Predicated region
  $region42: #{lstm_model_forward.1} parent=0 // pred_check
    _
  $region43: #{lstm_model_forward.1} parent=0 // pred_check_branch
    %2696 = sbr.rel (0) target = $region45
  $region44: #{lstm_model_forward.1} parent=0 // pred_region
    _
  $region45: #{lstm_model_forward.1} parent=0 // pred_fallthru
    _
  // Predicated region
  $region46: #{lstm_model_forward.1} parent=0 // pred_check
    _
  $region47: #{lstm_model_forward.1} parent=0 // pred_check_branch
    %2698 = sbr.rel (0) target = $region49
  $region48: #{lstm_model_forward.1} parent=0 // pred_region
    _
  $region49: #{lstm_model_forward.1} parent=0 // pred_fallthru
    _

</llo_original>
